<compile_context>
chip_gen: v7x
topology: tpu7x:2x2x1
jax: 0.10.0
libtpu: 0.0.40
codegen_flags: <defaults>
</compile_context>

<pallas_src>
import functools

import jax
import jax.numpy as jnp
from jax.experimental import pallas as pl
from jax.experimental.pallas import tpu as pltpu


def _combined_kernel(*refs, has_image: bool):
    if has_image:
        (x_ref, feat_ref, w_ih_ref, b_lstm_ref,
         whh_i_ref, whh_f_ref, whh_g_ref, whh_o_ref,
         w_att_ref, w1f_ref, w1h_ref, b1_ref,
         w2_ref, b2_ref, w3_ref, b3_ref, out_ref) = refs
    else:
        (x_ref, w_ih_ref, b_lstm_ref,
         whh_i_ref, whh_f_ref, whh_g_ref, whh_o_ref,
         w_att_ref, w1h_ref, b1_ref,
         w2_ref, b2_ref, w3_ref, b3_ref, out_ref) = refs
        feat_ref = None
        w1f_ref = None

    T, B, I = x_ref.shape
    H = whh_i_ref.shape[0]

    # ---- Hoisted LSTM input projection: one matmul for all timesteps ----
    x2d = x_ref[...].reshape(T * B, I)
    gates_x = (jnp.dot(x2d, w_ih_ref[...], preferred_element_type=jnp.float32)
               + b_lstm_ref[...])                                  # (T*B, 4H)
    # Split once (outside the serial recurrence) into per-gate slabs.
    gx_i = gates_x[:, 0 * H:1 * H]
    gx_f = gates_x[:, 1 * H:2 * H]
    gx_g = gates_x[:, 2 * H:3 * H]
    gx_o = gates_x[:, 3 * H:4 * H]

    whh_i = whh_i_ref[...]
    whh_f = whh_f_ref[...]
    whh_g = whh_g_ref[...]
    whh_o = whh_o_ref[...]
    w_att = w_att_ref[...]                                         # (1, H)

    h = jnp.zeros((B, H), jnp.float32)
    c = jnp.zeros((B, H), jnp.float32)

    # ---- Fully unrolled LSTM recurrence (PyTorch gate order i, f, g, o) ----
    hs = []
    logits = []
    for t in range(T):                      # T is static -> full unroll
        lo, hi = t * B, (t + 1) * B
        i_g = jax.nn.sigmoid(gx_i[lo:hi]
                             + jnp.dot(h, whh_i, preferred_element_type=jnp.float32))
        f_g = jax.nn.sigmoid(gx_f[lo:hi]
                             + jnp.dot(h, whh_f, preferred_element_type=jnp.float32))
        g_g = jnp.tanh(gx_g[lo:hi]
                       + jnp.dot(h, whh_g, preferred_element_type=jnp.float32))
        o_g = jax.nn.sigmoid(gx_o[lo:hi]
                             + jnp.dot(h, whh_o, preferred_element_type=jnp.float32))
        c = f_g * c + i_g * g_g
        h = o_g * jnp.tanh(c)
        hs.append(h)
        # Attention logit via a VPU lane-reduce instead of an N=1 MXU matmul.
        # The Linear(H,1) bias is omitted: a constant shift cancels exactly in
        # the softmax over time.
        logits.append(jnp.sum(h * w_att, axis=-1, keepdims=True))  # (B, 1)

    # ---- Attention: softmax over time, fused (no (T,B,H) scratch pass) ----
    m = logits[0]
    for t in range(1, T):
        m = jnp.maximum(m, logits[t])
    denom = jnp.zeros_like(m)
    ctx = jnp.zeros((B, H), jnp.float32)
    for t in range(T):
        w_t = jnp.exp(logits[t] - m)
        denom = denom + w_t
        ctx = ctx + w_t * hs[t]
    context = ctx / denom                                          # (B, H)

    # ---- fc1(concat(features, context)) -> ReLU -> fc2 -> ReLU -> fc3 ----
    h1 = jnp.dot(context, w1h_ref[...], preferred_element_type=jnp.float32) + b1_ref[...]
    if has_image:
        # concat(features, context) @ W1 as a split matmul.
        h1 = h1 + jnp.dot(feat_ref[...], w1f_ref[...],
                          preferred_element_type=jnp.float32)
    # (image_after is None: features are exactly zero, so their fc1 term is
    #  dropped entirely -> no 2048-wide weight DMA, no wasted matmul.)
    h1 = jnp.maximum(h1, 0.0)                                      # ReLU
    # dropout: eval mode -> identity
    h2 = jnp.maximum(jnp.dot(h1, w2_ref[...],
                             preferred_element_type=jnp.float32) + b2_ref[...], 0.0)
    out_ref[...] = (jnp.dot(h2, w3_ref[...], preferred_element_type=jnp.float32)
                    + b3_ref[...])                                 # (B, C_pad)


def init_params(key, input_size, hidden_size, num_classes, fc1_neurons, fc2_neurons):
    ks = jax.random.split(key, 12)
    s = 0.1
    H = hidden_size
    params = {
        "w_ih": jax.random.normal(ks[0], (input_size, 4 * H), jnp.float32) * s,
        "w_hh": jax.random.normal(ks[1], (H, 4 * H), jnp.float32) * s,
        "b_lstm": jax.random.normal(ks[2], (1, 4 * H), jnp.float32) * s,   # b_ih + b_hh
        "w_att": jax.random.normal(ks[3], (1, H), jnp.float32) * s,        # Linear(H,1) weight
        "b_att": jax.random.normal(ks[4], (1, 1), jnp.float32) * s,        # cancels in softmax
        "w1f": jax.random.normal(ks[5], (2048, fc1_neurons), jnp.float32) * s,
        "w1h": jax.random.normal(ks[6], (H, fc1_neurons), jnp.float32) * s,
        "b1": jax.random.normal(ks[7], (1, fc1_neurons), jnp.float32) * s,
        "w2": jax.random.normal(ks[8], (fc1_neurons, fc2_neurons), jnp.float32) * s,
        "b2": jax.random.normal(ks[9], (1, fc2_neurons), jnp.float32) * s,
        "w3": jax.random.normal(ks[10], (fc2_neurons, num_classes), jnp.float32) * s,
        "b3": jax.random.normal(ks[11], (1, num_classes), jnp.float32) * s,
    }
    return params


@jax.jit
def _run_kernel(x_tmajor, params, features=None):
    """x_tmajor: (T, B, I) time-major LSTM input; features: None or (B, 2048)."""
    T, B, _ = x_tmajor.shape
    H = params["w_hh"].shape[0]
    num_classes = params["w3"].shape[1]
    c_pad = ((num_classes + 127) // 128) * 128          # lane-dense output store

    # Split W_hh into four lane-aligned (H, H) gate matrices (i, f, g, o).
    w_hh = params["w_hh"]
    whh = [w_hh[:, k * H:(k + 1) * H] for k in range(4)]

    # Pad fc3 to a lane-dense output width; sliced back in the wrapper.
    w3p = jnp.pad(params["w3"], ((0, 0), (0, c_pad - num_classes)))
    b3p = jnp.pad(params["b3"], ((0, 0), (0, c_pad - num_classes)))

    has_image = features is not None
    args = [x_tmajor]
    if has_image:
        args.append(features)
    args += [params["w_ih"], params["b_lstm"], *whh, params["w_att"]]
    if has_image:
        args.append(params["w1f"])
    args += [params["w1h"], params["b1"], params["w2"], params["b2"], w3p, b3p]

    vmem_spec = pl.BlockSpec(memory_space=pltpu.MemorySpace.VMEM)
    out = pl.pallas_call(
        functools.partial(_combined_kernel, has_image=has_image),
        out_shape=jax.ShapeDtypeStruct((B, c_pad), jnp.float32),
        in_specs=[vmem_spec] * len(args),
        out_specs=vmem_spec,
    )(*args)
    return out[:, :num_classes]


def combined_model_apply(features_after, heat_treatment_parameters, params, *, input_size):
    """Runs the fused LSTM+attention+MLP head.  features_after: None or (B, 2048)."""
    # ---- heat-treatment-parameter shape handling (as in the PyTorch forward) ----
    htp = heat_treatment_parameters
    if htp.ndim == 2:
        htp = htp[:, :, None]                 # unsqueeze(-1)
        htp = jnp.transpose(htp, (0, 2, 1))   # permute(0, 2, 1)
    elif htp.ndim == 3:
        if htp.shape[-1] == input_size:
            pass
        elif htp.shape[-2] == input_size:
            htp = jnp.transpose(htp, (0, 2, 1))
        else:
            raise ValueError(f"Expected input size {input_size}, got {htp.shape[-1]}")
    else:
        raise ValueError(f"Expected 2 or 3 dimensions, got {htp.ndim}")
    htp = htp.astype(jnp.float32)

    x_tmajor = jnp.transpose(htp, (1, 0, 2))  # (B, T, I) -> (T, B, I)
    if features_after is None:
        return _run_kernel(x_tmajor, params)
    return _run_kernel(x_tmajor, params, jnp.asarray(features_after, jnp.float32))


def combined_model_forward(image_after, heat_treatment_parameters, params, *, input_size):
    """Mirrors CombinedModel.forward (use_attention=True, eval mode)."""
    if image_after is None:
        features_after = None                 # zero features -> term dropped in-kernel
    else:
        # TODO(synk): pretrained ResNet-50 feature extractor not ported to Pallas.
        raise NotImplementedError(
            "ResNet-50 backbone not ported; pass image_after=None or use "
            "combined_model_apply() with precomputed (B, 2048) features")
    return combined_model_apply(features_after, heat_treatment_parameters, params,
                                input_size=input_size)


if __name__ == "__main__":
    # Small configuration consistent with the module's constructor arguments.
    input_size, hidden_size, num_classes = 4, 32, 5
    fc1_neurons, fc2_neurons = 64, 32
    B, T = 2, 8

    key = jax.random.PRNGKey(0)
    pkey, xkey, fkey = jax.random.split(key, 3)
    params = init_params(pkey, input_size, hidden_size, num_classes,
                         fc1_neurons, fc2_neurons)

    heat_treatment_parameters = jax.random.normal(xkey, (B, T, input_size), jnp.float32)

    # Path 1: image_after is None (zero image features; fc1 image block skipped).
    out = combined_model_forward(None, heat_treatment_parameters, params,
                                 input_size=input_size)
    out = jax.block_until_ready(out)
    assert out.shape == (B, num_classes) and out.dtype == jnp.float32

    # Path 2: image-present variant with precomputed ResNet-50 features.
    features_after = jax.random.normal(fkey, (B, 2048), jnp.float32)
    out_img = combined_model_apply(features_after, heat_treatment_parameters, params,
                                   input_size=input_size)
    out_img = jax.block_until_ready(out_img)
    assert out_img.shape == (B, num_classes) and out_img.dtype == jnp.float32

    print("KERNEL_OK")
</pallas_src>

<mosaic_0001>
module attributes {stable_mosaic.version = 11 : i64} {
  func.func @_combined_kernel(%arg0: memref<8x2x4xf32, #tpu.memory_space<vmem>>, %arg1: memref<4x128xf32, #tpu.memory_space<vmem>>, %arg2: memref<1x128xf32, #tpu.memory_space<vmem>>, %arg3: memref<32x32xf32, #tpu.memory_space<vmem>>, %arg4: memref<32x32xf32, #tpu.memory_space<vmem>>, %arg5: memref<32x32xf32, #tpu.memory_space<vmem>>, %arg6: memref<32x32xf32, #tpu.memory_space<vmem>>, %arg7: memref<1x32xf32, #tpu.memory_space<vmem>>, %arg8: memref<32x64xf32, #tpu.memory_space<vmem>>, %arg9: memref<1x64xf32, #tpu.memory_space<vmem>>, %arg10: memref<64x32xf32, #tpu.memory_space<vmem>>, %arg11: memref<1x32xf32, #tpu.memory_space<vmem>>, %arg12: memref<32x128xf32, #tpu.memory_space<vmem>>, %arg13: memref<1x128xf32, #tpu.memory_space<vmem>>, %arg14: memref<2x128xf32, #tpu.memory_space<vmem>>) attributes {dimension_semantics = [], scalar_prefetch = 0 : i64, scratch_operands = 0 : i64, tpu.core_type = #tpu.core_type<tc>} {
    %c0 = arith.constant 0 : index
    %c0_0 = arith.constant 0 : index
    %c0_1 = arith.constant 0 : index
    %0 = vector.load %arg0[%c0, %c0_0, %c0_1] : memref<8x2x4xf32, #tpu.memory_space<vmem>>, vector<8x2x4xf32>
    %1 = vector.shape_cast %0 : vector<8x2x4xf32> to vector<16x4xf32>
    %c0_2 = arith.constant 0 : index
    %c0_3 = arith.constant 0 : index
    %2 = vector.load %arg1[%c0_2, %c0_3] : memref<4x128xf32, #tpu.memory_space<vmem>>, vector<4x128xf32>
    %cst = arith.constant dense<0.000000e+00> : vector<16x128xf32>
    %3 = tpu.matmul %1, %2, %cst {dimension_numbers = #tpu.dot_dimension_numbers<[1], [0], [0], [1], [0, 0, 1, 1], [], []>} : vector<16x4xf32>, vector<4x128xf32>, vector<16x128xf32> -> vector<16x128xf32>
    %c0_4 = arith.constant 0 : index
    %c0_5 = arith.constant 0 : index
    %4 = vector.load %arg2[%c0_4, %c0_5] : memref<1x128xf32, #tpu.memory_space<vmem>>, vector<1x128xf32>
    %5 = vector.broadcast %4 : vector<1x128xf32> to vector<16x128xf32>
    %6 = arith.addf %3, %5 : vector<16x128xf32>
    %7 = vector.extract_strided_slice %6 {offsets = [0, 0], sizes = [16, 32], strides = [1, 1]} : vector<16x128xf32> to vector<16x32xf32>
    %8 = vector.extract_strided_slice %6 {offsets = [0, 32], sizes = [16, 32], strides = [1, 1]} : vector<16x128xf32> to vector<16x32xf32>
    %9 = vector.extract_strided_slice %6 {offsets = [0, 64], sizes = [16, 32], strides = [1, 1]} : vector<16x128xf32> to vector<16x32xf32>
    %10 = vector.extract_strided_slice %6 {offsets = [0, 96], sizes = [16, 32], strides = [1, 1]} : vector<16x128xf32> to vector<16x32xf32>
    %c0_6 = arith.constant 0 : index
    %c0_7 = arith.constant 0 : index
    %11 = vector.load %arg3[%c0_6, %c0_7] : memref<32x32xf32, #tpu.memory_space<vmem>>, vector<32x32xf32>
    %c0_8 = arith.constant 0 : index
    %c0_9 = arith.constant 0 : index
    %12 = vector.load %arg4[%c0_8, %c0_9] : memref<32x32xf32, #tpu.memory_space<vmem>>, vector<32x32xf32>
    %c0_10 = arith.constant 0 : index
    %c0_11 = arith.constant 0 : index
    %13 = vector.load %arg5[%c0_10, %c0_11] : memref<32x32xf32, #tpu.memory_space<vmem>>, vector<32x32xf32>
    %c0_12 = arith.constant 0 : index
    %c0_13 = arith.constant 0 : index
    %14 = vector.load %arg6[%c0_12, %c0_13] : memref<32x32xf32, #tpu.memory_space<vmem>>, vector<32x32xf32>
    %c0_14 = arith.constant 0 : index
    %c0_15 = arith.constant 0 : index
    %15 = vector.load %arg7[%c0_14, %c0_15] : memref<1x32xf32, #tpu.memory_space<vmem>>, vector<1x32xf32>
    %cst_16 = arith.constant 0.000000e+00 : f32
    %16 = vector.broadcast %cst_16 : f32 to vector<2x32xf32>
    %cst_17 = arith.constant 0.000000e+00 : f32
    %17 = vector.broadcast %cst_17 : f32 to vector<2x32xf32>
    %18 = vector.extract_strided_slice %7 {offsets = [0, 0], sizes = [2, 32], strides = [1, 1]} : vector<16x32xf32> to vector<2x32xf32>
    %cst_18 = arith.constant dense<0.000000e+00> : vector<2x32xf32>
    %19 = tpu.matmul %16, %11, %cst_18 {dimension_numbers = #tpu.dot_dimension_numbers<[1], [0], [0], [1], [0, 0, 1, 1], [], []>} : vector<2x32xf32>, vector<32x32xf32>, vector<2x32xf32> -> vector<2x32xf32>
    %20 = arith.addf %18, %19 : vector<2x32xf32>
    %21 = arith.negf %20 : vector<2x32xf32>
    %22 = math.exp %21 : vector<2x32xf32>
    %cst_19 = arith.constant 1.000000e+00 : f32
    %23 = vector.broadcast %cst_19 : f32 to vector<2x32xf32>
    %24 = arith.addf %23, %22 : vector<2x32xf32>
    %25 = arith.divf %23, %24 : vector<2x32xf32>
    %26 = vector.extract_strided_slice %8 {offsets = [0, 0], sizes = [2, 32], strides = [1, 1]} : vector<16x32xf32> to vector<2x32xf32>
    %cst_20 = arith.constant dense<0.000000e+00> : vector<2x32xf32>
    %27 = tpu.matmul %16, %12, %cst_20 {dimension_numbers = #tpu.dot_dimension_numbers<[1], [0], [0], [1], [0, 0, 1, 1], [], []>} : vector<2x32xf32>, vector<32x32xf32>, vector<2x32xf32> -> vector<2x32xf32>
    %28 = arith.addf %26, %27 : vector<2x32xf32>
    %29 = arith.negf %28 : vector<2x32xf32>
    %30 = math.exp %29 : vector<2x32xf32>
    %cst_21 = arith.constant 1.000000e+00 : f32
    %31 = vector.broadcast %cst_21 : f32 to vector<2x32xf32>
    %32 = arith.addf %31, %30 : vector<2x32xf32>
    %33 = arith.divf %31, %32 : vector<2x32xf32>
    %34 = vector.extract_strided_slice %9 {offsets = [0, 0], sizes = [2, 32], strides = [1, 1]} : vector<16x32xf32> to vector<2x32xf32>
    %cst_22 = arith.constant dense<0.000000e+00> : vector<2x32xf32>
    %35 = tpu.matmul %16, %13, %cst_22 {dimension_numbers = #tpu.dot_dimension_numbers<[1], [0], [0], [1], [0, 0, 1, 1], [], []>} : vector<2x32xf32>, vector<32x32xf32>, vector<2x32xf32> -> vector<2x32xf32>
    %36 = arith.addf %34, %35 : vector<2x32xf32>
    %37 = math.tanh %36 : vector<2x32xf32>
    %38 = vector.extract_strided_slice %10 {offsets = [0, 0], sizes = [2, 32], strides = [1, 1]} : vector<16x32xf32> to vector<2x32xf32>
    %cst_23 = arith.constant dense<0.000000e+00> : vector<2x32xf32>
    %39 = tpu.matmul %16, %14, %cst_23 {dimension_numbers = #tpu.dot_dimension_numbers<[1], [0], [0], [1], [0, 0, 1, 1], [], []>} : vector<2x32xf32>, vector<32x32xf32>, vector<2x32xf32> -> vector<2x32xf32>
    %40 = arith.addf %38, %39 : vector<2x32xf32>
    %41 = arith.negf %40 : vector<2x32xf32>
    %42 = math.exp %41 : vector<2x32xf32>
    %cst_24 = arith.constant 1.000000e+00 : f32
    %43 = vector.broadcast %cst_24 : f32 to vector<2x32xf32>
    %44 = arith.addf %43, %42 : vector<2x32xf32>
    %45 = arith.divf %43, %44 : vector<2x32xf32>
    %46 = arith.mulf %33, %17 : vector<2x32xf32>
    %47 = arith.mulf %25, %37 : vector<2x32xf32>
    %48 = arith.addf %46, %47 : vector<2x32xf32>
    %49 = math.tanh %48 : vector<2x32xf32>
    %50 = arith.mulf %45, %49 : vector<2x32xf32>
    %51 = vector.broadcast %15 : vector<1x32xf32> to vector<2x32xf32>
    %52 = arith.mulf %50, %51 : vector<2x32xf32>
    %cst_25 = arith.constant dense<0.000000e+00> : vector<2xf32>
    %53 = vector.multi_reduction <add>, %52, %cst_25 [1] : vector<2x32xf32> to vector<2xf32>
    %54 = vector.shape_cast %53 : vector<2xf32> to vector<2x1xf32>
    %55 = vector.extract_strided_slice %7 {offsets = [2, 0], sizes = [2, 32], strides = [1, 1]} : vector<16x32xf32> to vector<2x32xf32>
    %cst_26 = arith.constant dense<0.000000e+00> : vector<2x32xf32>
    %56 = tpu.matmul %50, %11, %cst_26 {dimension_numbers = #tpu.dot_dimension_numbers<[1], [0], [0], [1], [0, 0, 1, 1], [], []>} : vector<2x32xf32>, vector<32x32xf32>, vector<2x32xf32> -> vector<2x32xf32>
    %57 = arith.addf %55, %56 : vector<2x32xf32>
    %58 = arith.negf %57 : vector<2x32xf32>
    %59 = math.exp %58 : vector<2x32xf32>
    %cst_27 = arith.constant 1.000000e+00 : f32
    %60 = vector.broadcast %cst_27 : f32 to vector<2x32xf32>
    %61 = arith.addf %60, %59 : vector<2x32xf32>
    %62 = arith.divf %60, %61 : vector<2x32xf32>
    %63 = vector.extract_strided_slice %8 {offsets = [2, 0], sizes = [2, 32], strides = [1, 1]} : vector<16x32xf32> to vector<2x32xf32>
    %cst_28 = arith.constant dense<0.000000e+00> : vector<2x32xf32>
    %64 = tpu.matmul %50, %12, %cst_28 {dimension_numbers = #tpu.dot_dimension_numbers<[1], [0], [0], [1], [0, 0, 1, 1], [], []>} : vector<2x32xf32>, vector<32x32xf32>, vector<2x32xf32> -> vector<2x32xf32>
    %65 = arith.addf %63, %64 : vector<2x32xf32>
    %66 = arith.negf %65 : vector<2x32xf32>
    %67 = math.exp %66 : vector<2x32xf32>
    %cst_29 = arith.constant 1.000000e+00 : f32
    %68 = vector.broadcast %cst_29 : f32 to vector<2x32xf32>
    %69 = arith.addf %68, %67 : vector<2x32xf32>
    %70 = arith.divf %68, %69 : vector<2x32xf32>
    %71 = vector.extract_strided_slice %9 {offsets = [2, 0], sizes = [2, 32], strides = [1, 1]} : vector<16x32xf32> to vector<2x32xf32>
    %cst_30 = arith.constant dense<0.000000e+00> : vector<2x32xf32>
    %72 = tpu.matmul %50, %13, %cst_30 {dimension_numbers = #tpu.dot_dimension_numbers<[1], [0], [0], [1], [0, 0, 1, 1], [], []>} : vector<2x32xf32>, vector<32x32xf32>, vector<2x32xf32> -> vector<2x32xf32>
    %73 = arith.addf %71, %72 : vector<2x32xf32>
    %74 = math.tanh %73 : vector<2x32xf32>
    %75 = vector.extract_strided_slice %10 {offsets = [2, 0], sizes = [2, 32], strides = [1, 1]} : vector<16x32xf32> to vector<2x32xf32>
    %cst_31 = arith.constant dense<0.000000e+00> : vector<2x32xf32>
    %76 = tpu.matmul %50, %14, %cst_31 {dimension_numbers = #tpu.dot_dimension_numbers<[1], [0], [0], [1], [0, 0, 1, 1], [], []>} : vector<2x32xf32>, vector<32x32xf32>, vector<2x32xf32> -> vector<2x32xf32>
    %77 = arith.addf %75, %76 : vector<2x32xf32>
    %78 = arith.negf %77 : vector<2x32xf32>
    %79 = math.exp %78 : vector<2x32xf32>
    %cst_32 = arith.constant 1.000000e+00 : f32
    %80 = vector.broadcast %cst_32 : f32 to vector<2x32xf32>
    %81 = arith.addf %80, %79 : vector<2x32xf32>
    %82 = arith.divf %80, %81 : vector<2x32xf32>
    %83 = arith.mulf %70, %48 : vector<2x32xf32>
    %84 = arith.mulf %62, %74 : vector<2x32xf32>
    %85 = arith.addf %83, %84 : vector<2x32xf32>
    %86 = math.tanh %85 : vector<2x32xf32>
    %87 = arith.mulf %82, %86 : vector<2x32xf32>
    %88 = vector.broadcast %15 : vector<1x32xf32> to vector<2x32xf32>
    %89 = arith.mulf %87, %88 : vector<2x32xf32>
    %cst_33 = arith.constant dense<0.000000e+00> : vector<2xf32>
    %90 = vector.multi_reduction <add>, %89, %cst_33 [1] : vector<2x32xf32> to vector<2xf32>
    %91 = vector.shape_cast %90 : vector<2xf32> to vector<2x1xf32>
    %92 = vector.extract_strided_slice %7 {offsets = [4, 0], sizes = [2, 32], strides = [1, 1]} : vector<16x32xf32> to vector<2x32xf32>
    %cst_34 = arith.constant dense<0.000000e+00> : vector<2x32xf32>
    %93 = tpu.matmul %87, %11, %cst_34 {dimension_numbers = #tpu.dot_dimension_numbers<[1], [0], [0], [1], [0, 0, 1, 1], [], []>} : vector<2x32xf32>, vector<32x32xf32>, vector<2x32xf32> -> vector<2x32xf32>
    %94 = arith.addf %92, %93 : vector<2x32xf32>
    %95 = arith.negf %94 : vector<2x32xf32>
    %96 = math.exp %95 : vector<2x32xf32>
    %cst_35 = arith.constant 1.000000e+00 : f32
    %97 = vector.broadcast %cst_35 : f32 to vector<2x32xf32>
    %98 = arith.addf %97, %96 : vector<2x32xf32>
    %99 = arith.divf %97, %98 : vector<2x32xf32>
    %100 = vector.extract_strided_slice %8 {offsets = [4, 0], sizes = [2, 32], strides = [1, 1]} : vector<16x32xf32> to vector<2x32xf32>
    %cst_36 = arith.constant dense<0.000000e+00> : vector<2x32xf32>
    %101 = tpu.matmul %87, %12, %cst_36 {dimension_numbers = #tpu.dot_dimension_numbers<[1], [0], [0], [1], [0, 0, 1, 1], [], []>} : vector<2x32xf32>, vector<32x32xf32>, vector<2x32xf32> -> vector<2x32xf32>
    %102 = arith.addf %100, %101 : vector<2x32xf32>
    %103 = arith.negf %102 : vector<2x32xf32>
    %104 = math.exp %103 : vector<2x32xf32>
    %cst_37 = arith.constant 1.000000e+00 : f32
    %105 = vector.broadcast %cst_37 : f32 to vector<2x32xf32>
    %106 = arith.addf %105, %104 : vector<2x32xf32>
    %107 = arith.divf %105, %106 : vector<2x32xf32>
    %108 = vector.extract_strided_slice %9 {offsets = [4, 0], sizes = [2, 32], strides = [1, 1]} : vector<16x32xf32> to vector<2x32xf32>
    %cst_38 = arith.constant dense<0.000000e+00> : vector<2x32xf32>
    %109 = tpu.matmul %87, %13, %cst_38 {dimension_numbers = #tpu.dot_dimension_numbers<[1], [0], [0], [1], [0, 0, 1, 1], [], []>} : vector<2x32xf32>, vector<32x32xf32>, vector<2x32xf32> -> vector<2x32xf32>
    %110 = arith.addf %108, %109 : vector<2x32xf32>
    %111 = math.tanh %110 : vector<2x32xf32>
    %112 = vector.extract_strided_slice %10 {offsets = [4, 0], sizes = [2, 32], strides = [1, 1]} : vector<16x32xf32> to vector<2x32xf32>
    %cst_39 = arith.constant dense<0.000000e+00> : vector<2x32xf32>
    %113 = tpu.matmul %87, %14, %cst_39 {dimension_numbers = #tpu.dot_dimension_numbers<[1], [0], [0], [1], [0, 0, 1, 1], [], []>} : vector<2x32xf32>, vector<32x32xf32>, vector<2x32xf32> -> vector<2x32xf32>
    %114 = arith.addf %112, %113 : vector<2x32xf32>
    %115 = arith.negf %114 : vector<2x32xf32>
    %116 = math.exp %115 : vector<2x32xf32>
    %cst_40 = arith.constant 1.000000e+00 : f32
    %117 = vector.broadcast %cst_40 : f32 to vector<2x32xf32>
    %118 = arith.addf %117, %116 : vector<2x32xf32>
    %119 = arith.divf %117, %118 : vector<2x32xf32>
    %120 = arith.mulf %107, %85 : vector<2x32xf32>
    %121 = arith.mulf %99, %111 : vector<2x32xf32>
    %122 = arith.addf %120, %121 : vector<2x32xf32>
    %123 = math.tanh %122 : vector<2x32xf32>
    %124 = arith.mulf %119, %123 : vector<2x32xf32>
    %125 = vector.broadcast %15 : vector<1x32xf32> to vector<2x32xf32>
    %126 = arith.mulf %124, %125 : vector<2x32xf32>
    %cst_41 = arith.constant dense<0.000000e+00> : vector<2xf32>
    %127 = vector.multi_reduction <add>, %126, %cst_41 [1] : vector<2x32xf32> to vector<2xf32>
    %128 = vector.shape_cast %127 : vector<2xf32> to vector<2x1xf32>
    %129 = vector.extract_strided_slice %7 {offsets = [6, 0], sizes = [2, 32], strides = [1, 1]} : vector<16x32xf32> to vector<2x32xf32>
    %cst_42 = arith.constant dense<0.000000e+00> : vector<2x32xf32>
    %130 = tpu.matmul %124, %11, %cst_42 {dimension_numbers = #tpu.dot_dimension_numbers<[1], [0], [0], [1], [0, 0, 1, 1], [], []>} : vector<2x32xf32>, vector<32x32xf32>, vector<2x32xf32> -> vector<2x32xf32>
    %131 = arith.addf %129, %130 : vector<2x32xf32>
    %132 = arith.negf %131 : vector<2x32xf32>
    %133 = math.exp %132 : vector<2x32xf32>
    %cst_43 = arith.constant 1.000000e+00 : f32
    %134 = vector.broadcast %cst_43 : f32 to vector<2x32xf32>
    %135 = arith.addf %134, %133 : vector<2x32xf32>
    %136 = arith.divf %134, %135 : vector<2x32xf32>
    %137 = vector.extract_strided_slice %8 {offsets = [6, 0], sizes = [2, 32], strides = [1, 1]} : vector<16x32xf32> to vector<2x32xf32>
    %cst_44 = arith.constant dense<0.000000e+00> : vector<2x32xf32>
    %138 = tpu.matmul %124, %12, %cst_44 {dimension_numbers = #tpu.dot_dimension_numbers<[1], [0], [0], [1], [0, 0, 1, 1], [], []>} : vector<2x32xf32>, vector<32x32xf32>, vector<2x32xf32> -> vector<2x32xf32>
    %139 = arith.addf %137, %138 : vector<2x32xf32>
    %140 = arith.negf %139 : vector<2x32xf32>
    %141 = math.exp %140 : vector<2x32xf32>
    %cst_45 = arith.constant 1.000000e+00 : f32
    %142 = vector.broadcast %cst_45 : f32 to vector<2x32xf32>
    %143 = arith.addf %142, %141 : vector<2x32xf32>
    %144 = arith.divf %142, %143 : vector<2x32xf32>
    %145 = vector.extract_strided_slice %9 {offsets = [6, 0], sizes = [2, 32], strides = [1, 1]} : vector<16x32xf32> to vector<2x32xf32>
    %cst_46 = arith.constant dense<0.000000e+00> : vector<2x32xf32>
    %146 = tpu.matmul %124, %13, %cst_46 {dimension_numbers = #tpu.dot_dimension_numbers<[1], [0], [0], [1], [0, 0, 1, 1], [], []>} : vector<2x32xf32>, vector<32x32xf32>, vector<2x32xf32> -> vector<2x32xf32>
    %147 = arith.addf %145, %146 : vector<2x32xf32>
    %148 = math.tanh %147 : vector<2x32xf32>
    %149 = vector.extract_strided_slice %10 {offsets = [6, 0], sizes = [2, 32], strides = [1, 1]} : vector<16x32xf32> to vector<2x32xf32>
    %cst_47 = arith.constant dense<0.000000e+00> : vector<2x32xf32>
    %150 = tpu.matmul %124, %14, %cst_47 {dimension_numbers = #tpu.dot_dimension_numbers<[1], [0], [0], [1], [0, 0, 1, 1], [], []>} : vector<2x32xf32>, vector<32x32xf32>, vector<2x32xf32> -> vector<2x32xf32>
    %151 = arith.addf %149, %150 : vector<2x32xf32>
    %152 = arith.negf %151 : vector<2x32xf32>
    %153 = math.exp %152 : vector<2x32xf32>
    %cst_48 = arith.constant 1.000000e+00 : f32
    %154 = vector.broadcast %cst_48 : f32 to vector<2x32xf32>
    %155 = arith.addf %154, %153 : vector<2x32xf32>
    %156 = arith.divf %154, %155 : vector<2x32xf32>
    %157 = arith.mulf %144, %122 : vector<2x32xf32>
    %158 = arith.mulf %136, %148 : vector<2x32xf32>
    %159 = arith.addf %157, %158 : vector<2x32xf32>
    %160 = math.tanh %159 : vector<2x32xf32>
    %161 = arith.mulf %156, %160 : vector<2x32xf32>
    %162 = vector.broadcast %15 : vector<1x32xf32> to vector<2x32xf32>
    %163 = arith.mulf %161, %162 : vector<2x32xf32>
    %cst_49 = arith.constant dense<0.000000e+00> : vector<2xf32>
    %164 = vector.multi_reduction <add>, %163, %cst_49 [1] : vector<2x32xf32> to vector<2xf32>
    %165 = vector.shape_cast %164 : vector<2xf32> to vector<2x1xf32>
    %166 = vector.extract_strided_slice %7 {offsets = [8, 0], sizes = [2, 32], strides = [1, 1]} : vector<16x32xf32> to vector<2x32xf32>
    %cst_50 = arith.constant dense<0.000000e+00> : vector<2x32xf32>
    %167 = tpu.matmul %161, %11, %cst_50 {dimension_numbers = #tpu.dot_dimension_numbers<[1], [0], [0], [1], [0, 0, 1, 1], [], []>} : vector<2x32xf32>, vector<32x32xf32>, vector<2x32xf32> -> vector<2x32xf32>
    %168 = arith.addf %166, %167 : vector<2x32xf32>
    %169 = arith.negf %168 : vector<2x32xf32>
    %170 = math.exp %169 : vector<2x32xf32>
    %cst_51 = arith.constant 1.000000e+00 : f32
    %171 = vector.broadcast %cst_51 : f32 to vector<2x32xf32>
    %172 = arith.addf %171, %170 : vector<2x32xf32>
    %173 = arith.divf %171, %172 : vector<2x32xf32>
    %174 = vector.extract_strided_slice %8 {offsets = [8, 0], sizes = [2, 32], strides = [1, 1]} : vector<16x32xf32> to vector<2x32xf32>
    %cst_52 = arith.constant dense<0.000000e+00> : vector<2x32xf32>
    %175 = tpu.matmul %161, %12, %cst_52 {dimension_numbers = #tpu.dot_dimension_numbers<[1], [0], [0], [1], [0, 0, 1, 1], [], []>} : vector<2x32xf32>, vector<32x32xf32>, vector<2x32xf32> -> vector<2x32xf32>
    %176 = arith.addf %174, %175 : vector<2x32xf32>
    %177 = arith.negf %176 : vector<2x32xf32>
    %178 = math.exp %177 : vector<2x32xf32>
    %cst_53 = arith.constant 1.000000e+00 : f32
    %179 = vector.broadcast %cst_53 : f32 to vector<2x32xf32>
    %180 = arith.addf %179, %178 : vector<2x32xf32>
    %181 = arith.divf %179, %180 : vector<2x32xf32>
    %182 = vector.extract_strided_slice %9 {offsets = [8, 0], sizes = [2, 32], strides = [1, 1]} : vector<16x32xf32> to vector<2x32xf32>
    %cst_54 = arith.constant dense<0.000000e+00> : vector<2x32xf32>
    %183 = tpu.matmul %161, %13, %cst_54 {dimension_numbers = #tpu.dot_dimension_numbers<[1], [0], [0], [1], [0, 0, 1, 1], [], []>} : vector<2x32xf32>, vector<32x32xf32>, vector<2x32xf32> -> vector<2x32xf32>
    %184 = arith.addf %182, %183 : vector<2x32xf32>
    %185 = math.tanh %184 : vector<2x32xf32>
    %186 = vector.extract_strided_slice %10 {offsets = [8, 0], sizes = [2, 32], strides = [1, 1]} : vector<16x32xf32> to vector<2x32xf32>
    %cst_55 = arith.constant dense<0.000000e+00> : vector<2x32xf32>
    %187 = tpu.matmul %161, %14, %cst_55 {dimension_numbers = #tpu.dot_dimension_numbers<[1], [0], [0], [1], [0, 0, 1, 1], [], []>} : vector<2x32xf32>, vector<32x32xf32>, vector<2x32xf32> -> vector<2x32xf32>
    %188 = arith.addf %186, %187 : vector<2x32xf32>
    %189 = arith.negf %188 : vector<2x32xf32>
    %190 = math.exp %189 : vector<2x32xf32>
    %cst_56 = arith.constant 1.000000e+00 : f32
    %191 = vector.broadcast %cst_56 : f32 to vector<2x32xf32>
    %192 = arith.addf %191, %190 : vector<2x32xf32>
    %193 = arith.divf %191, %192 : vector<2x32xf32>
    %194 = arith.mulf %181, %159 : vector<2x32xf32>
    %195 = arith.mulf %173, %185 : vector<2x32xf32>
    %196 = arith.addf %194, %195 : vector<2x32xf32>
    %197 = math.tanh %196 : vector<2x32xf32>
    %198 = arith.mulf %193, %197 : vector<2x32xf32>
    %199 = vector.broadcast %15 : vector<1x32xf32> to vector<2x32xf32>
    %200 = arith.mulf %198, %199 : vector<2x32xf32>
    %cst_57 = arith.constant dense<0.000000e+00> : vector<2xf32>
    %201 = vector.multi_reduction <add>, %200, %cst_57 [1] : vector<2x32xf32> to vector<2xf32>
    %202 = vector.shape_cast %201 : vector<2xf32> to vector<2x1xf32>
    %203 = vector.extract_strided_slice %7 {offsets = [10, 0], sizes = [2, 32], strides = [1, 1]} : vector<16x32xf32> to vector<2x32xf32>
    %cst_58 = arith.constant dense<0.000000e+00> : vector<2x32xf32>
    %204 = tpu.matmul %198, %11, %cst_58 {dimension_numbers = #tpu.dot_dimension_numbers<[1], [0], [0], [1], [0, 0, 1, 1], [], []>} : vector<2x32xf32>, vector<32x32xf32>, vector<2x32xf32> -> vector<2x32xf32>
    %205 = arith.addf %203, %204 : vector<2x32xf32>
    %206 = arith.negf %205 : vector<2x32xf32>
    %207 = math.exp %206 : vector<2x32xf32>
    %cst_59 = arith.constant 1.000000e+00 : f32
    %208 = vector.broadcast %cst_59 : f32 to vector<2x32xf32>
    %209 = arith.addf %208, %207 : vector<2x32xf32>
    %210 = arith.divf %208, %209 : vector<2x32xf32>
    %211 = vector.extract_strided_slice %8 {offsets = [10, 0], sizes = [2, 32], strides = [1, 1]} : vector<16x32xf32> to vector<2x32xf32>
    %cst_60 = arith.constant dense<0.000000e+00> : vector<2x32xf32>
    %212 = tpu.matmul %198, %12, %cst_60 {dimension_numbers = #tpu.dot_dimension_numbers<[1], [0], [0], [1], [0, 0, 1, 1], [], []>} : vector<2x32xf32>, vector<32x32xf32>, vector<2x32xf32> -> vector<2x32xf32>
    %213 = arith.addf %211, %212 : vector<2x32xf32>
    %214 = arith.negf %213 : vector<2x32xf32>
    %215 = math.exp %214 : vector<2x32xf32>
    %cst_61 = arith.constant 1.000000e+00 : f32
    %216 = vector.broadcast %cst_61 : f32 to vector<2x32xf32>
    %217 = arith.addf %216, %215 : vector<2x32xf32>
    %218 = arith.divf %216, %217 : vector<2x32xf32>
    %219 = vector.extract_strided_slice %9 {offsets = [10, 0], sizes = [2, 32], strides = [1, 1]} : vector<16x32xf32> to vector<2x32xf32>
    %cst_62 = arith.constant dense<0.000000e+00> : vector<2x32xf32>
    %220 = tpu.matmul %198, %13, %cst_62 {dimension_numbers = #tpu.dot_dimension_numbers<[1], [0], [0], [1], [0, 0, 1, 1], [], []>} : vector<2x32xf32>, vector<32x32xf32>, vector<2x32xf32> -> vector<2x32xf32>
    %221 = arith.addf %219, %220 : vector<2x32xf32>
    %222 = math.tanh %221 : vector<2x32xf32>
    %223 = vector.extract_strided_slice %10 {offsets = [10, 0], sizes = [2, 32], strides = [1, 1]} : vector<16x32xf32> to vector<2x32xf32>
    %cst_63 = arith.constant dense<0.000000e+00> : vector<2x32xf32>
    %224 = tpu.matmul %198, %14, %cst_63 {dimension_numbers = #tpu.dot_dimension_numbers<[1], [0], [0], [1], [0, 0, 1, 1], [], []>} : vector<2x32xf32>, vector<32x32xf32>, vector<2x32xf32> -> vector<2x32xf32>
    %225 = arith.addf %223, %224 : vector<2x32xf32>
    %226 = arith.negf %225 : vector<2x32xf32>
    %227 = math.exp %226 : vector<2x32xf32>
    %cst_64 = arith.constant 1.000000e+00 : f32
    %228 = vector.broadcast %cst_64 : f32 to vector<2x32xf32>
    %229 = arith.addf %228, %227 : vector<2x32xf32>
    %230 = arith.divf %228, %229 : vector<2x32xf32>
    %231 = arith.mulf %218, %196 : vector<2x32xf32>
    %232 = arith.mulf %210, %222 : vector<2x32xf32>
    %233 = arith.addf %231, %232 : vector<2x32xf32>
    %234 = math.tanh %233 : vector<2x32xf32>
    %235 = arith.mulf %230, %234 : vector<2x32xf32>
    %236 = vector.broadcast %15 : vector<1x32xf32> to vector<2x32xf32>
    %237 = arith.mulf %235, %236 : vector<2x32xf32>
    %cst_65 = arith.constant dense<0.000000e+00> : vector<2xf32>
    %238 = vector.multi_reduction <add>, %237, %cst_65 [1] : vector<2x32xf32> to vector<2xf32>
    %239 = vector.shape_cast %238 : vector<2xf32> to vector<2x1xf32>
    %240 = vector.extract_strided_slice %7 {offsets = [12, 0], sizes = [2, 32], strides = [1, 1]} : vector<16x32xf32> to vector<2x32xf32>
    %cst_66 = arith.constant dense<0.000000e+00> : vector<2x32xf32>
    %241 = tpu.matmul %235, %11, %cst_66 {dimension_numbers = #tpu.dot_dimension_numbers<[1], [0], [0], [1], [0, 0, 1, 1], [], []>} : vector<2x32xf32>, vector<32x32xf32>, vector<2x32xf32> -> vector<2x32xf32>
    %242 = arith.addf %240, %241 : vector<2x32xf32>
    %243 = arith.negf %242 : vector<2x32xf32>
    %244 = math.exp %243 : vector<2x32xf32>
    %cst_67 = arith.constant 1.000000e+00 : f32
    %245 = vector.broadcast %cst_67 : f32 to vector<2x32xf32>
    %246 = arith.addf %245, %244 : vector<2x32xf32>
    %247 = arith.divf %245, %246 : vector<2x32xf32>
    %248 = vector.extract_strided_slice %8 {offsets = [12, 0], sizes = [2, 32], strides = [1, 1]} : vector<16x32xf32> to vector<2x32xf32>
    %cst_68 = arith.constant dense<0.000000e+00> : vector<2x32xf32>
    %249 = tpu.matmul %235, %12, %cst_68 {dimension_numbers = #tpu.dot_dimension_numbers<[1], [0], [0], [1], [0, 0, 1, 1], [], []>} : vector<2x32xf32>, vector<32x32xf32>, vector<2x32xf32> -> vector<2x32xf32>
    %250 = arith.addf %248, %249 : vector<2x32xf32>
    %251 = arith.negf %250 : vector<2x32xf32>
    %252 = math.exp %251 : vector<2x32xf32>
    %cst_69 = arith.constant 1.000000e+00 : f32
    %253 = vector.broadcast %cst_69 : f32 to vector<2x32xf32>
    %254 = arith.addf %253, %252 : vector<2x32xf32>
    %255 = arith.divf %253, %254 : vector<2x32xf32>
    %256 = vector.extract_strided_slice %9 {offsets = [12, 0], sizes = [2, 32], strides = [1, 1]} : vector<16x32xf32> to vector<2x32xf32>
    %cst_70 = arith.constant dense<0.000000e+00> : vector<2x32xf32>
    %257 = tpu.matmul %235, %13, %cst_70 {dimension_numbers = #tpu.dot_dimension_numbers<[1], [0], [0], [1], [0, 0, 1, 1], [], []>} : vector<2x32xf32>, vector<32x32xf32>, vector<2x32xf32> -> vector<2x32xf32>
    %258 = arith.addf %256, %257 : vector<2x32xf32>
    %259 = math.tanh %258 : vector<2x32xf32>
    %260 = vector.extract_strided_slice %10 {offsets = [12, 0], sizes = [2, 32], strides = [1, 1]} : vector<16x32xf32> to vector<2x32xf32>
    %cst_71 = arith.constant dense<0.000000e+00> : vector<2x32xf32>
    %261 = tpu.matmul %235, %14, %cst_71 {dimension_numbers = #tpu.dot_dimension_numbers<[1], [0], [0], [1], [0, 0, 1, 1], [], []>} : vector<2x32xf32>, vector<32x32xf32>, vector<2x32xf32> -> vector<2x32xf32>
    %262 = arith.addf %260, %261 : vector<2x32xf32>
    %263 = arith.negf %262 : vector<2x32xf32>
    %264 = math.exp %263 : vector<2x32xf32>
    %cst_72 = arith.constant 1.000000e+00 : f32
    %265 = vector.broadcast %cst_72 : f32 to vector<2x32xf32>
    %266 = arith.addf %265, %264 : vector<2x32xf32>
    %267 = arith.divf %265, %266 : vector<2x32xf32>
    %268 = arith.mulf %255, %233 : vector<2x32xf32>
    %269 = arith.mulf %247, %259 : vector<2x32xf32>
    %270 = arith.addf %268, %269 : vector<2x32xf32>
    %271 = math.tanh %270 : vector<2x32xf32>
    %272 = arith.mulf %267, %271 : vector<2x32xf32>
    %273 = vector.broadcast %15 : vector<1x32xf32> to vector<2x32xf32>
    %274 = arith.mulf %272, %273 : vector<2x32xf32>
    %cst_73 = arith.constant dense<0.000000e+00> : vector<2xf32>
    %275 = vector.multi_reduction <add>, %274, %cst_73 [1] : vector<2x32xf32> to vector<2xf32>
    %276 = vector.shape_cast %275 : vector<2xf32> to vector<2x1xf32>
    %277 = vector.extract_strided_slice %7 {offsets = [14, 0], sizes = [2, 32], strides = [1, 1]} : vector<16x32xf32> to vector<2x32xf32>
    %cst_74 = arith.constant dense<0.000000e+00> : vector<2x32xf32>
    %278 = tpu.matmul %272, %11, %cst_74 {dimension_numbers = #tpu.dot_dimension_numbers<[1], [0], [0], [1], [0, 0, 1, 1], [], []>} : vector<2x32xf32>, vector<32x32xf32>, vector<2x32xf32> -> vector<2x32xf32>
    %279 = arith.addf %277, %278 : vector<2x32xf32>
    %280 = arith.negf %279 : vector<2x32xf32>
    %281 = math.exp %280 : vector<2x32xf32>
    %cst_75 = arith.constant 1.000000e+00 : f32
    %282 = vector.broadcast %cst_75 : f32 to vector<2x32xf32>
    %283 = arith.addf %282, %281 : vector<2x32xf32>
    %284 = arith.divf %282, %283 : vector<2x32xf32>
    %285 = vector.extract_strided_slice %8 {offsets = [14, 0], sizes = [2, 32], strides = [1, 1]} : vector<16x32xf32> to vector<2x32xf32>
    %cst_76 = arith.constant dense<0.000000e+00> : vector<2x32xf32>
    %286 = tpu.matmul %272, %12, %cst_76 {dimension_numbers = #tpu.dot_dimension_numbers<[1], [0], [0], [1], [0, 0, 1, 1], [], []>} : vector<2x32xf32>, vector<32x32xf32>, vector<2x32xf32> -> vector<2x32xf32>
    %287 = arith.addf %285, %286 : vector<2x32xf32>
    %288 = arith.negf %287 : vector<2x32xf32>
    %289 = math.exp %288 : vector<2x32xf32>
    %cst_77 = arith.constant 1.000000e+00 : f32
    %290 = vector.broadcast %cst_77 : f32 to vector<2x32xf32>
    %291 = arith.addf %290, %289 : vector<2x32xf32>
    %292 = arith.divf %290, %291 : vector<2x32xf32>
    %293 = vector.extract_strided_slice %9 {offsets = [14, 0], sizes = [2, 32], strides = [1, 1]} : vector<16x32xf32> to vector<2x32xf32>
    %cst_78 = arith.constant dense<0.000000e+00> : vector<2x32xf32>
    %294 = tpu.matmul %272, %13, %cst_78 {dimension_numbers = #tpu.dot_dimension_numbers<[1], [0], [0], [1], [0, 0, 1, 1], [], []>} : vector<2x32xf32>, vector<32x32xf32>, vector<2x32xf32> -> vector<2x32xf32>
    %295 = arith.addf %293, %294 : vector<2x32xf32>
    %296 = math.tanh %295 : vector<2x32xf32>
    %297 = vector.extract_strided_slice %10 {offsets = [14, 0], sizes = [2, 32], strides = [1, 1]} : vector<16x32xf32> to vector<2x32xf32>
    %cst_79 = arith.constant dense<0.000000e+00> : vector<2x32xf32>
    %298 = tpu.matmul %272, %14, %cst_79 {dimension_numbers = #tpu.dot_dimension_numbers<[1], [0], [0], [1], [0, 0, 1, 1], [], []>} : vector<2x32xf32>, vector<32x32xf32>, vector<2x32xf32> -> vector<2x32xf32>
    %299 = arith.addf %297, %298 : vector<2x32xf32>
    %300 = arith.negf %299 : vector<2x32xf32>
    %301 = math.exp %300 : vector<2x32xf32>
    %cst_80 = arith.constant 1.000000e+00 : f32
    %302 = vector.broadcast %cst_80 : f32 to vector<2x32xf32>
    %303 = arith.addf %302, %301 : vector<2x32xf32>
    %304 = arith.divf %302, %303 : vector<2x32xf32>
    %305 = arith.mulf %292, %270 : vector<2x32xf32>
    %306 = arith.mulf %284, %296 : vector<2x32xf32>
    %307 = arith.addf %305, %306 : vector<2x32xf32>
    %308 = math.tanh %307 : vector<2x32xf32>
    %309 = arith.mulf %304, %308 : vector<2x32xf32>
    %310 = vector.broadcast %15 : vector<1x32xf32> to vector<2x32xf32>
    %311 = arith.mulf %309, %310 : vector<2x32xf32>
    %cst_81 = arith.constant dense<0.000000e+00> : vector<2xf32>
    %312 = vector.multi_reduction <add>, %311, %cst_81 [1] : vector<2x32xf32> to vector<2xf32>
    %313 = vector.shape_cast %312 : vector<2xf32> to vector<2x1xf32>
    %314 = arith.maximumf %54, %91 : vector<2x1xf32>
    %315 = arith.maximumf %314, %128 : vector<2x1xf32>
    %316 = arith.maximumf %315, %165 : vector<2x1xf32>
    %317 = arith.maximumf %316, %202 : vector<2x1xf32>
    %318 = arith.maximumf %317, %239 : vector<2x1xf32>
    %319 = arith.maximumf %318, %276 : vector<2x1xf32>
    %320 = arith.maximumf %319, %313 : vector<2x1xf32>
    %cst_82 = arith.constant 0.000000e+00 : f32
    %321 = vector.broadcast %cst_82 : f32 to vector<2x1xf32>
    %cst_83 = arith.constant 0.000000e+00 : f32
    %322 = vector.broadcast %cst_83 : f32 to vector<2x32xf32>
    %323 = arith.subf %54, %320 : vector<2x1xf32>
    %324 = math.exp %323 : vector<2x1xf32>
    %325 = arith.addf %321, %324 : vector<2x1xf32>
    %326 = vector.broadcast %324 : vector<2x1xf32> to vector<2x32xf32>
    %327 = arith.mulf %326, %50 : vector<2x32xf32>
    %328 = arith.addf %322, %327 : vector<2x32xf32>
    %329 = arith.subf %91, %320 : vector<2x1xf32>
    %330 = math.exp %329 : vector<2x1xf32>
    %331 = arith.addf %325, %330 : vector<2x1xf32>
    %332 = vector.broadcast %330 : vector<2x1xf32> to vector<2x32xf32>
    %333 = arith.mulf %332, %87 : vector<2x32xf32>
    %334 = arith.addf %328, %333 : vector<2x32xf32>
    %335 = arith.subf %128, %320 : vector<2x1xf32>
    %336 = math.exp %335 : vector<2x1xf32>
    %337 = arith.addf %331, %336 : vector<2x1xf32>
    %338 = vector.broadcast %336 : vector<2x1xf32> to vector<2x32xf32>
    %339 = arith.mulf %338, %124 : vector<2x32xf32>
    %340 = arith.addf %334, %339 : vector<2x32xf32>
    %341 = arith.subf %165, %320 : vector<2x1xf32>
    %342 = math.exp %341 : vector<2x1xf32>
    %343 = arith.addf %337, %342 : vector<2x1xf32>
    %344 = vector.broadcast %342 : vector<2x1xf32> to vector<2x32xf32>
    %345 = arith.mulf %344, %161 : vector<2x32xf32>
    %346 = arith.addf %340, %345 : vector<2x32xf32>
    %347 = arith.subf %202, %320 : vector<2x1xf32>
    %348 = math.exp %347 : vector<2x1xf32>
    %349 = arith.addf %343, %348 : vector<2x1xf32>
    %350 = vector.broadcast %348 : vector<2x1xf32> to vector<2x32xf32>
    %351 = arith.mulf %350, %198 : vector<2x32xf32>
    %352 = arith.addf %346, %351 : vector<2x32xf32>
    %353 = arith.subf %239, %320 : vector<2x1xf32>
    %354 = math.exp %353 : vector<2x1xf32>
    %355 = arith.addf %349, %354 : vector<2x1xf32>
    %356 = vector.broadcast %354 : vector<2x1xf32> to vector<2x32xf32>
    %357 = arith.mulf %356, %235 : vector<2x32xf32>
    %358 = arith.addf %352, %357 : vector<2x32xf32>
    %359 = arith.subf %276, %320 : vector<2x1xf32>
    %360 = math.exp %359 : vector<2x1xf32>
    %361 = arith.addf %355, %360 : vector<2x1xf32>
    %362 = vector.broadcast %360 : vector<2x1xf32> to vector<2x32xf32>
    %363 = arith.mulf %362, %272 : vector<2x32xf32>
    %364 = arith.addf %358, %363 : vector<2x32xf32>
    %365 = arith.subf %313, %320 : vector<2x1xf32>
    %366 = math.exp %365 : vector<2x1xf32>
    %367 = arith.addf %361, %366 : vector<2x1xf32>
    %368 = vector.broadcast %366 : vector<2x1xf32> to vector<2x32xf32>
    %369 = arith.mulf %368, %309 : vector<2x32xf32>
    %370 = arith.addf %364, %369 : vector<2x32xf32>
    %371 = vector.broadcast %367 : vector<2x1xf32> to vector<2x32xf32>
    %372 = arith.divf %370, %371 : vector<2x32xf32>
    %c0_84 = arith.constant 0 : index
    %c0_85 = arith.constant 0 : index
    %373 = vector.load %arg8[%c0_84, %c0_85] : memref<32x64xf32, #tpu.memory_space<vmem>>, vector<32x64xf32>
    %cst_86 = arith.constant dense<0.000000e+00> : vector<2x64xf32>
    %374 = tpu.matmul %372, %373, %cst_86 {dimension_numbers = #tpu.dot_dimension_numbers<[1], [0], [0], [1], [0, 0, 1, 1], [], []>} : vector<2x32xf32>, vector<32x64xf32>, vector<2x64xf32> -> vector<2x64xf32>
    %c0_87 = arith.constant 0 : index
    %c0_88 = arith.constant 0 : index
    %375 = vector.load %arg9[%c0_87, %c0_88] : memref<1x64xf32, #tpu.memory_space<vmem>>, vector<1x64xf32>
    %376 = vector.broadcast %375 : vector<1x64xf32> to vector<2x64xf32>
    %377 = arith.addf %374, %376 : vector<2x64xf32>
    %cst_89 = arith.constant 0.000000e+00 : f32
    %378 = vector.broadcast %cst_89 : f32 to vector<2x64xf32>
    %379 = arith.maximumf %377, %378 : vector<2x64xf32>
    %c0_90 = arith.constant 0 : index
    %c0_91 = arith.constant 0 : index
    %380 = vector.load %arg10[%c0_90, %c0_91] : memref<64x32xf32, #tpu.memory_space<vmem>>, vector<64x32xf32>
    %cst_92 = arith.constant dense<0.000000e+00> : vector<2x32xf32>
    %381 = tpu.matmul %379, %380, %cst_92 {dimension_numbers = #tpu.dot_dimension_numbers<[1], [0], [0], [1], [0, 0, 1, 1], [], []>} : vector<2x64xf32>, vector<64x32xf32>, vector<2x32xf32> -> vector<2x32xf32>
    %c0_93 = arith.constant 0 : index
    %c0_94 = arith.constant 0 : index
    %382 = vector.load %arg11[%c0_93, %c0_94] : memref<1x32xf32, #tpu.memory_space<vmem>>, vector<1x32xf32>
    %383 = vector.broadcast %382 : vector<1x32xf32> to vector<2x32xf32>
    %384 = arith.addf %381, %383 : vector<2x32xf32>
    %cst_95 = arith.constant 0.000000e+00 : f32
    %385 = vector.broadcast %cst_95 : f32 to vector<2x32xf32>
    %386 = arith.maximumf %384, %385 : vector<2x32xf32>
    %c0_96 = arith.constant 0 : index
    %c0_97 = arith.constant 0 : index
    %387 = vector.load %arg12[%c0_96, %c0_97] : memref<32x128xf32, #tpu.memory_space<vmem>>, vector<32x128xf32>
    %cst_98 = arith.constant dense<0.000000e+00> : vector<2x128xf32>
    %388 = tpu.matmul %386, %387, %cst_98 {dimension_numbers = #tpu.dot_dimension_numbers<[1], [0], [0], [1], [0, 0, 1, 1], [], []>} : vector<2x32xf32>, vector<32x128xf32>, vector<2x128xf32> -> vector<2x128xf32>
    %c0_99 = arith.constant 0 : index
    %c0_100 = arith.constant 0 : index
    %389 = vector.load %arg13[%c0_99, %c0_100] : memref<1x128xf32, #tpu.memory_space<vmem>>, vector<1x128xf32>
    %390 = vector.broadcast %389 : vector<1x128xf32> to vector<2x128xf32>
    %391 = arith.addf %388, %390 : vector<2x128xf32>
    %c0_101 = arith.constant 0 : index
    %c0_102 = arith.constant 0 : index
    %392 = vector.load %arg14[%c0_101, %c0_102] : memref<2x128xf32, #tpu.memory_space<vmem>>, vector<2x128xf32>
    tpu.vector_store %arg14[%c0_101, %c0_102], %391 {strides = array<i32>} : memref<2x128xf32, #tpu.memory_space<vmem>>, vector<2x128xf32>,
    return
  }
}

</mosaic_0001>

<llo_original>
// kernel: _run_kernel.1
$region0: #{_run_kernel.1}
  #allocation0 [shape = 'u32[]', space=smem, size = 0x4, offset = 0x4, fixed_abs, tag = 'smem constant byte address 0x4 - core index']
  #allocation1 [shape = 'u32[144,128]{1,0:T(1,128)}', space=vmem, size = 0x12000, scoped, tag = 'internal scratch']
  %s0 = inlined_call_operand.vmem [shape: f32[8,2,4], index: 0, kind: input, shape index: {}]
  %s1 = inlined_call_operand.vmem [shape: f32[4,128], index: 1, kind: input, shape index: {}]
  %s2 = inlined_call_operand.vmem [shape: f32[1,128], index: 2, kind: input, shape index: {}]
  %s3 = inlined_call_operand.vmem [shape: f32[32,32], index: 3, kind: input, shape index: {}]
  %s4 = inlined_call_operand.vmem [shape: f32[32,32], index: 4, kind: input, shape index: {}]
  %s5 = inlined_call_operand.vmem [shape: f32[32,32], index: 5, kind: input, shape index: {}]
  %s6 = inlined_call_operand.vmem [shape: f32[32,32], index: 6, kind: input, shape index: {}]
  %s7 = inlined_call_operand.vmem [shape: f32[1,32], index: 7, kind: input, shape index: {}]
  %s8 = inlined_call_operand.vmem [shape: f32[32,64], index: 8, kind: input, shape index: {}]
  %s9 = inlined_call_operand.vmem [shape: f32[1,64], index: 9, kind: input, shape index: {}]
  %s10 = inlined_call_operand.vmem [shape: f32[64,32], index: 10, kind: input, shape index: {}]
  %s11 = inlined_call_operand.vmem [shape: f32[1,32], index: 11, kind: input, shape index: {}]
  %s12 = inlined_call_operand.vmem [shape: f32[32,128], index: 12, kind: input, shape index: {}]
  %s13 = inlined_call_operand.vmem [shape: f32[1,128], index: 13, kind: input, shape index: {}]
  %s14 = inlined_call_operand.hbm [shape: f32[2,128], index: 14, kind: output, shape index: {}]
  %s15 = sld [smem:[#allocation0]]
  $region66: #{_run_kernel.1} parent=0
    _
  %s17 = ssub.s32 1, %s15
  %s18 = scalar_select 0, %s17, %s15
  $region1: #{_run_kernel.1} parent=0
    #allocation2 [shape = 'u8[1024]{0}', space=vmem, size = 0x400, scoped, tag = 'output window, operand 0, single buffered']
    #allocation3 [shape = 's32[1]{0}', space=sflag, size = 0x4, scoped, tag = 'scoped memory for _run_kernel.1']
    %19 = vsyncpa [#allocation3], 0
    // Predicated region
    $region2: #{_run_kernel.1} parent=1 // pred_check
      _
    $region3: #{_run_kernel.1} parent=1 // pred_check_branch
      %21 = sbr.rel (0) target = $region5
    $region4: #{_run_kernel.1} parent=1 // pred_region
      _
    $region5: #{_run_kernel.1} parent=1 // pred_fallthru
      _
    // Predicated region
    $region6: #{_run_kernel.1} parent=1 // pred_check
      _
    $region7: #{_run_kernel.1} parent=1 // pred_check_branch
      %23 = sbr.rel (0) target = $region9
    $region8: #{_run_kernel.1} parent=1 // pred_region
      _
    $region9: #{_run_kernel.1} parent=1 // pred_fallthru
      _
    // Predicated region
    $region10: #{_run_kernel.1} parent=1 // pred_check
      _
    $region11: #{_run_kernel.1} parent=1 // pred_check_branch
      %25 = sbr.rel (0) target = $region13
    $region12: #{_run_kernel.1} parent=1 // pred_region
      _
    $region13: #{_run_kernel.1} parent=1 // pred_fallthru
      _
    // Predicated region
    $region14: #{_run_kernel.1} parent=1 // pred_check
      _
    $region15: #{_run_kernel.1} parent=1 // pred_check_branch
      %27 = sbr.rel (0) target = $region17
    $region16: #{_run_kernel.1} parent=1 // pred_region
      _
    $region17: #{_run_kernel.1} parent=1 // pred_fallthru
      _
    // Predicated region
    $region18: #{_run_kernel.1} parent=1 // pred_check
      _
    $region19: #{_run_kernel.1} parent=1 // pred_check_branch
      %29 = sbr.rel (0) target = $region21
    $region20: #{_run_kernel.1} parent=1 // pred_region
      _
    $region21: #{_run_kernel.1} parent=1 // pred_fallthru
      _
    // Predicated region
    $region22: #{_run_kernel.1} parent=1 // pred_check
      _
    $region23: #{_run_kernel.1} parent=1 // pred_check_branch
      %31 = sbr.rel (0) target = $region25
    $region24: #{_run_kernel.1} parent=1 // pred_region
      _
    $region25: #{_run_kernel.1} parent=1 // pred_fallthru
      _
    // Predicated region
    $region26: #{_run_kernel.1} parent=1 // pred_check
      _
    $region27: #{_run_kernel.1} parent=1 // pred_check_branch
      %33 = sbr.rel (0) target = $region29
    $region28: #{_run_kernel.1} parent=1 // pred_region
      _
    $region29: #{_run_kernel.1} parent=1 // pred_fallthru
      _
    // Predicated region
    $region30: #{_run_kernel.1} parent=1 // pred_check
      _
    $region31: #{_run_kernel.1} parent=1 // pred_check_branch
      %35 = sbr.rel (0) target = $region33
    $region32: #{_run_kernel.1} parent=1 // pred_region
      _
    $region33: #{_run_kernel.1} parent=1 // pred_fallthru
      _
    // Predicated region
    $region34: #{_run_kernel.1} parent=1 // pred_check
      _
    $region35: #{_run_kernel.1} parent=1 // pred_check_branch
      %37 = sbr.rel (0) target = $region37
    $region36: #{_run_kernel.1} parent=1 // pred_region
      _
    $region37: #{_run_kernel.1} parent=1 // pred_fallthru
      _
    // Predicated region
    $region38: #{_run_kernel.1} parent=1 // pred_check
      _
    $region39: #{_run_kernel.1} parent=1 // pred_check_branch
      %39 = sbr.rel (0) target = $region41
    $region40: #{_run_kernel.1} parent=1 // pred_region
      _
    $region41: #{_run_kernel.1} parent=1 // pred_fallthru
      _
    // Predicated region
    $region42: #{_run_kernel.1} parent=1 // pred_check
      _
    $region43: #{_run_kernel.1} parent=1 // pred_check_branch
      %41 = sbr.rel (0) target = $region45
    $region44: #{_run_kernel.1} parent=1 // pred_region
      _
    $region45: #{_run_kernel.1} parent=1 // pred_fallthru
      _
    // Predicated region
    $region46: #{_run_kernel.1} parent=1 // pred_check
      _
    $region47: #{_run_kernel.1} parent=1 // pred_check_branch
      %43 = sbr.rel (0) target = $region49
    $region48: #{_run_kernel.1} parent=1 // pred_region
      _
    $region49: #{_run_kernel.1} parent=1 // pred_fallthru
      _
    // Predicated region
    $region50: #{_run_kernel.1} parent=1 // pred_check
      _
    $region51: #{_run_kernel.1} parent=1 // pred_check_branch
      %45 = sbr.rel (0) target = $region53
    $region52: #{_run_kernel.1} parent=1 // pred_region
      _
    $region53: #{_run_kernel.1} parent=1 // pred_fallthru
      _
    // Predicated region
    $region54: #{_run_kernel.1} parent=1 // pred_check
      _
    $region55: #{_run_kernel.1} parent=1 // pred_check_branch
      %47 = sbr.rel (0) target = $region57
    $region56: #{_run_kernel.1} parent=1 // pred_region
      _
    $region57: #{_run_kernel.1} parent=1 // pred_fallthru
      _
    %v48 = vld [vmem:[%s0] sm:$0x3]
    %v49 = vld [vmem:[%s0 + $0x2] sm:$0x3]
    %v50 = vld [vmem:[%s0 + $0x4] sm:$0x3]
    %v51 = vld [vmem:[%s0 + $0x6] sm:$0x3]
    %v52 = vld [vmem:[%s0 + $0x8] sm:$0x3]
    %v53 = vld [vmem:[%s0 + $0xa] sm:$0x3]
    %v54 = vld [vmem:[%s0 + $0xc] sm:$0x3]
    %v55 = vld [vmem:[%s0 + $0xe] sm:$0x3]
    %v56 = vld [vmem:[%s1] sm:$0xf]
    %v57 = vld [vmem:[%s2] sm:$0x1]
    %v59 = vlaneseq
    %v60 = vshrl.u32 %v59, 7
    %v61 = vsub.s32 0, %v60
    %v62 = vrot.slane %v57, %v61
    %v72 = vcombine.low %v48, %v49
    %v73 = vcombine.low %v50, %v51
    %v75 = vunpack.c.l.s4 1983009808
    %v76 = vunpack.c.0.s8 %v75
    %v77 = vlaneseq
    %v78 = vshrl.u32 %v77, 7
    %v79 = vsub.s32 %v76, %v78
    %v80 = vrot.slane %v72, %v79
    %v82 = vunpack.c.l.s4 1983009808
    %v83 = vunpack.c.0.s8 %v82
    %v84 = vlaneseq
    %v85 = vshrl.u32 %v84, 7
    %v86 = vsub.s32 %v83, %v85
    %v87 = vrot.slane %v73, %v86
    %v88 = vcombine.low %v80, %v87
    %v89 = vcombine.low %v52, %v53
    %v90 = vcombine.low %v54, %v55
    %v92 = vunpack.c.l.s4 1983009808
    %v93 = vunpack.c.0.s8 %v92
    %v94 = vlaneseq
    %v95 = vshrl.u32 %v94, 7
    %v96 = vsub.s32 %v93, %v95
    %v97 = vrot.slane %v89, %v96
    %v99 = vunpack.c.l.s4 1983009808
    %v100 = vunpack.c.0.s8 %v99
    %v101 = vlaneseq
    %v102 = vshrl.u32 %v101, 7
    %v103 = vsub.s32 %v100, %v102
    %v104 = vrot.slane %v90, %v103
    %v105 = vcombine.low %v97, %v104
    %vm106 = vcmask 31744
    %v107 = vsel %vm106, %v88, 0
    %v109 = vsel %vm106, %v105, 0
    %vm111 = vcmask 1043456
    %v113 = vsel %vm111, %v56, 0
    %115 = vmatprep.subr.mxu0 0.0
    %116 = vmatpush1.msra.mxu0 %v113
    %117 = vmatprep.subr.mxu0 0.0
    %118 = vmatpush1.msra.mxu0 0.0
    %119 = vmatprep.subr.mxu0 0.0
    %120 = vmatpush1.msra.mxu0 0.0
    %121 = vmatprep.subr.mxu0 0.0
    %122 = vmatpush1.msra.mxu0 0.0
    %123 = vmatprep.subr.mxu0 0.0
    %124 = vmatpush1.msra.mxu0 0.0
    %125 = vmatprep.subr.mxu0 0.0
    %126 = vmatpush1.msra.mxu0 0.0
    %127 = vmatprep.subr.mxu0 0.0
    %128 = vmatpush1.msra.mxu0 0.0
    %129 = vmatprep.subr.mxu0 0.0
    %130 = vmatpush1.msra.mxu0 0.0
    %131 = vmatprep.subr.mxu0 0.0
    %132 = vmatpush1.msra.mxu0 0.0
    %133 = vmatprep.subr.mxu0 0.0
    %134 = vmatpush1.msra.mxu0 0.0
    %135 = vmatprep.subr.mxu0 0.0
    %136 = vmatpush1.msra.mxu0 0.0
    %137 = vmatprep.subr.mxu0 0.0
    %138 = vmatpush1.msra.mxu0 0.0
    %139 = vmatprep.subr.mxu0 0.0
    %140 = vmatpush1.msra.mxu0 0.0
    %141 = vmatprep.subr.mxu0 0.0
    %142 = vmatpush1.msra.mxu0 0.0
    %143 = vmatprep.subr.mxu0 0.0
    %144 = vmatpush1.msra.mxu0 0.0
    %145 = vmatprep.subr.mxu0 0.0
    %146 = vmatpush1.msra.mxu0 0.0
    %147 = vmatprep.subr.mxu0 0.0
    %148 = vmatpush1.msra.mxu0 0.0
    %149 = vmatprep.subr.mxu0 0.0
    %150 = vmatpush1.msra.mxu0 0.0
    %151 = vmatprep.subr.mxu0 0.0
    %152 = vmatpush1.msra.mxu0 0.0
    %153 = vmatprep.subr.mxu0 0.0
    %154 = vmatpush1.msra.mxu0 0.0
    %155 = vmatprep.subr.mxu0 0.0
    %156 = vmatpush1.msra.mxu0 0.0
    %157 = vmatprep.subr.mxu0 0.0
    %158 = vmatpush1.msra.mxu0 0.0
    %159 = vmatprep.subr.mxu0 0.0
    %160 = vmatpush1.msra.mxu0 0.0
    %161 = vmatprep.subr.mxu0 0.0
    %162 = vmatpush1.msra.mxu0 0.0
    %163 = vmatprep.subr.mxu0 0.0
    %164 = vmatpush1.msra.mxu0 0.0
    %165 = vmatprep.subr.mxu0 0.0
    %166 = vmatpush1.msra.mxu0 0.0
    %167 = vmatprep.subr.mxu0 0.0
    %168 = vmatpush1.msra.mxu0 0.0
    %169 = vmatprep.subr.mxu0 0.0
    %170 = vmatpush1.msra.mxu0 0.0
    %171 = vmatprep.subr.mxu0 0.0
    %172 = vmatpush1.msra.mxu0 0.0
    %173 = vmatprep.subr.mxu0 0.0
    %174 = vmatpush1.msra.mxu0 0.0
    %175 = vmatprep.subr.mxu0 0.0
    %176 = vmatpush1.msra.mxu0 0.0
    %177 = vmatprep.subr.mxu0 0.0
    %178 = vmatpush1.msra.mxu0 0.0
    %179 = vmatprep.mubr.f32.mxu0 0.0
    %180 = vmatmul.mubr.f32.gmra.mrb[0].mxu0 %v107
    %v181 = vpop.f32.mrb[0].mxu0
    %v182 = vadd.f32 %v62, %v181
    %v183 = vpop.f32.mrb[0].mxu0
    %184 = vmatprep.mubr.f32.mxu0 0.0
    %185 = vmatmul.mubr.f32.gmra.mrb[0].mxu0 %v109
    %v186 = vpop.f32.mrb[0].mxu0
    %v187 = vadd.f32 %v62, %v186
    %v188 = vpop.f32.mrb[0].mxu0
    %189 = vdwg.mxu0
    %v190 = vld [vmem:[%s3] sm:$0xff]
    %v191 = vld [vmem:[%s3 + $0x8] sm:$0xff]
    %v192 = vld [vmem:[%s3 + $0x10] sm:$0xff]
    %v193 = vld [vmem:[%s3 + $0x18] sm:$0xff]
    %v194 = vld [vmem:[%s4] sm:$0xff]
    %v195 = vld [vmem:[%s4 + $0x8] sm:$0xff]
    %v196 = vld [vmem:[%s4 + $0x10] sm:$0xff]
    %v197 = vld [vmem:[%s4 + $0x18] sm:$0xff]
    %v198 = vld [vmem:[%s5] sm:$0xff]
    %v199 = vld [vmem:[%s5 + $0x8] sm:$0xff]
    %v200 = vld [vmem:[%s5 + $0x10] sm:$0xff]
    %v201 = vld [vmem:[%s5 + $0x18] sm:$0xff]
    %v202 = vld [vmem:[%s6] sm:$0xff]
    %v203 = vld [vmem:[%s6 + $0x8] sm:$0xff]
    %v204 = vld [vmem:[%s6 + $0x10] sm:$0xff]
    %v205 = vld [vmem:[%s6 + $0x18] sm:$0xff]
    %v206 = vld [vmem:[%s7] sm:$0x1]
    %vm207 = vcmask 261120
    %v209 = vsel %vm207, 0.0, 0
    %211 = vmatprep.subr.mxu0 0.0
    %212 = vmatpush1.msra.mxu0 %v190
    %213 = vmatprep.subr.mxu0 0.0
    %214 = vmatpush1.msra.mxu0 %v191
    %215 = vmatprep.subr.mxu0 0.0
    %216 = vmatpush1.msra.mxu0 %v192
    %217 = vmatprep.subr.mxu0 0.0
    %218 = vmatpush1.msra.mxu0 %v193
    %219 = vmatprep.subr.mxu0 0.0
    %220 = vmatpush1.msra.mxu0 0.0
    %221 = vmatprep.subr.mxu0 0.0
    %222 = vmatpush1.msra.mxu0 0.0
    %223 = vmatprep.subr.mxu0 0.0
    %224 = vmatpush1.msra.mxu0 0.0
    %225 = vmatprep.subr.mxu0 0.0
    %226 = vmatpush1.msra.mxu0 0.0
    %227 = vmatprep.subr.mxu0 0.0
    %228 = vmatpush1.msra.mxu0 0.0
    %229 = vmatprep.subr.mxu0 0.0
    %230 = vmatpush1.msra.mxu0 0.0
    %231 = vmatprep.subr.mxu0 0.0
    %232 = vmatpush1.msra.mxu0 0.0
    %233 = vmatprep.subr.mxu0 0.0
    %234 = vmatpush1.msra.mxu0 0.0
    %235 = vmatprep.subr.mxu0 0.0
    %236 = vmatpush1.msra.mxu0 0.0
    %237 = vmatprep.subr.mxu0 0.0
    %238 = vmatpush1.msra.mxu0 0.0
    %239 = vmatprep.subr.mxu0 0.0
    %240 = vmatpush1.msra.mxu0 0.0
    %241 = vmatprep.subr.mxu0 0.0
    %242 = vmatpush1.msra.mxu0 0.0
    %243 = vmatprep.subr.mxu0 0.0
    %244 = vmatpush1.msra.mxu0 0.0
    %245 = vmatprep.subr.mxu0 0.0
    %246 = vmatpush1.msra.mxu0 0.0
    %247 = vmatprep.subr.mxu0 0.0
    %248 = vmatpush1.msra.mxu0 0.0
    %249 = vmatprep.subr.mxu0 0.0
    %250 = vmatpush1.msra.mxu0 0.0
    %251 = vmatprep.subr.mxu0 0.0
    %252 = vmatpush1.msra.mxu0 0.0
    %253 = vmatprep.subr.mxu0 0.0
    %254 = vmatpush1.msra.mxu0 0.0
    %255 = vmatprep.subr.mxu0 0.0
    %256 = vmatpush1.msra.mxu0 0.0
    %257 = vmatprep.subr.mxu0 0.0
    %258 = vmatpush1.msra.mxu0 0.0
    %259 = vmatprep.subr.mxu0 0.0
    %260 = vmatpush1.msra.mxu0 0.0
    %261 = vmatprep.subr.mxu0 0.0
    %262 = vmatpush1.msra.mxu0 0.0
    %263 = vmatprep.subr.mxu0 0.0
    %264 = vmatpush1.msra.mxu0 0.0
    %265 = vmatprep.subr.mxu0 0.0
    %266 = vmatpush1.msra.mxu0 0.0
    %267 = vmatprep.subr.mxu0 0.0
    %268 = vmatpush1.msra.mxu0 0.0
    %269 = vmatprep.subr.mxu0 0.0
    %270 = vmatpush1.msra.mxu0 0.0
    %271 = vmatprep.subr.mxu0 0.0
    %272 = vmatpush1.msra.mxu0 0.0
    %273 = vmatprep.subr.mxu0 0.0
    %274 = vmatpush1.msra.mxu0 0.0
    %275 = vmatprep.mubr.f32.mxu0 0.0
    %276 = vmatmul.mubr.f32.gmra.mrb[0].mxu0 %v209
    %v277 = vpop.f32.mrb[0].mxu0
    %v278 = vadd.f32 0.0, %v277
    %v279 = vpop.f32.mrb[0].mxu0
    %280 = vdwg.mxu0
    %v281 = vadd.f32 %v182, %v278
    %v282 = vxor.u32 %v281, 2147483648
    %v283 = vmul.f32 %v282, 1.442695
    %v284 = vpow.pop %v283
    %v285 = vadd.f32 %v284, 1.0
    %v286 = vrcp.pop %v285
    %v287 = vmul.f32 1.0, %v286
    %288 = vmatprep.subr.mxu0 0.0
    %289 = vmatpush1.msra.mxu0 %v194
    %290 = vmatprep.subr.mxu0 0.0
    %291 = vmatpush1.msra.mxu0 %v195
    %292 = vmatprep.subr.mxu0 0.0
    %293 = vmatpush1.msra.mxu0 %v196
    %294 = vmatprep.subr.mxu0 0.0
    %295 = vmatpush1.msra.mxu0 %v197
    %296 = vmatprep.subr.mxu0 0.0
    %297 = vmatpush1.msra.mxu0 0.0
    %298 = vmatprep.subr.mxu0 0.0
    %299 = vmatpush1.msra.mxu0 0.0
    %300 = vmatprep.subr.mxu0 0.0
    %301 = vmatpush1.msra.mxu0 0.0
    %302 = vmatprep.subr.mxu0 0.0
    %303 = vmatpush1.msra.mxu0 0.0
    %304 = vmatprep.subr.mxu0 0.0
    %305 = vmatpush1.msra.mxu0 0.0
    %306 = vmatprep.subr.mxu0 0.0
    %307 = vmatpush1.msra.mxu0 0.0
    %308 = vmatprep.subr.mxu0 0.0
    %309 = vmatpush1.msra.mxu0 0.0
    %310 = vmatprep.subr.mxu0 0.0
    %311 = vmatpush1.msra.mxu0 0.0
    %312 = vmatprep.subr.mxu0 0.0
    %313 = vmatpush1.msra.mxu0 0.0
    %314 = vmatprep.subr.mxu0 0.0
    %315 = vmatpush1.msra.mxu0 0.0
    %316 = vmatprep.subr.mxu0 0.0
    %317 = vmatpush1.msra.mxu0 0.0
    %318 = vmatprep.subr.mxu0 0.0
    %319 = vmatpush1.msra.mxu0 0.0
    %320 = vmatprep.subr.mxu0 0.0
    %321 = vmatpush1.msra.mxu0 0.0
    %322 = vmatprep.subr.mxu0 0.0
    %323 = vmatpush1.msra.mxu0 0.0
    %324 = vmatprep.subr.mxu0 0.0
    %325 = vmatpush1.msra.mxu0 0.0
    %326 = vmatprep.subr.mxu0 0.0
    %327 = vmatpush1.msra.mxu0 0.0
    %328 = vmatprep.subr.mxu0 0.0
    %329 = vmatpush1.msra.mxu0 0.0
    %330 = vmatprep.subr.mxu0 0.0
    %331 = vmatpush1.msra.mxu0 0.0
    %332 = vmatprep.subr.mxu0 0.0
    %333 = vmatpush1.msra.mxu0 0.0
    %334 = vmatprep.subr.mxu0 0.0
    %335 = vmatpush1.msra.mxu0 0.0
    %336 = vmatprep.subr.mxu0 0.0
    %337 = vmatpush1.msra.mxu0 0.0
    %338 = vmatprep.subr.mxu0 0.0
    %339 = vmatpush1.msra.mxu0 0.0
    %340 = vmatprep.subr.mxu0 0.0
    %341 = vmatpush1.msra.mxu0 0.0
    %342 = vmatprep.subr.mxu0 0.0
    %343 = vmatpush1.msra.mxu0 0.0
    %344 = vmatprep.subr.mxu0 0.0
    %345 = vmatpush1.msra.mxu0 0.0
    %346 = vmatprep.subr.mxu0 0.0
    %347 = vmatpush1.msra.mxu0 0.0
    %348 = vmatprep.subr.mxu0 0.0
    %349 = vmatpush1.msra.mxu0 0.0
    %350 = vmatprep.subr.mxu0 0.0
    %351 = vmatpush1.msra.mxu0 0.0
    %352 = vmatprep.mubr.f32.mxu0 0.0
    %353 = vmatmul.mubr.f32.gmra.mrb[0].mxu0 %v209
    %v354 = vpop.f32.mrb[0].mxu0
    %v355 = vadd.f32 0.0, %v354
    %v356 = vpop.f32.mrb[0].mxu0
    %357 = vdwg.mxu0
    %359 = vrot.lane.b32.xlu0 %v355, 32
    %v360 = vpop.permute.xlu0 %359
    %v362 = vadd.f32 %v182, %v360
    %v363 = vxor.u32 %v362, 2147483648
    %v364 = vmul.f32 %v363, 1.442695
    %v365 = vpow.pop %v364
    %v366 = vadd.f32 %v365, 1.0
    %v367 = vrcp.pop %v366
    %v368 = vmul.f32 1.0, %v367
    %369 = vmatprep.subr.mxu0 0.0
    %370 = vmatpush1.msra.mxu0 %v198
    %371 = vmatprep.subr.mxu0 0.0
    %372 = vmatpush1.msra.mxu0 %v199
    %373 = vmatprep.subr.mxu0 0.0
    %374 = vmatpush1.msra.mxu0 %v200
    %375 = vmatprep.subr.mxu0 0.0
    %376 = vmatpush1.msra.mxu0 %v201
    %377 = vmatprep.subr.mxu0 0.0
    %378 = vmatpush1.msra.mxu0 0.0
    %379 = vmatprep.subr.mxu0 0.0
    %380 = vmatpush1.msra.mxu0 0.0
    %381 = vmatprep.subr.mxu0 0.0
    %382 = vmatpush1.msra.mxu0 0.0
    %383 = vmatprep.subr.mxu0 0.0
    %384 = vmatpush1.msra.mxu0 0.0
    %385 = vmatprep.subr.mxu0 0.0
    %386 = vmatpush1.msra.mxu0 0.0
    %387 = vmatprep.subr.mxu0 0.0
    %388 = vmatpush1.msra.mxu0 0.0
    %389 = vmatprep.subr.mxu0 0.0
    %390 = vmatpush1.msra.mxu0 0.0
    %391 = vmatprep.subr.mxu0 0.0
    %392 = vmatpush1.msra.mxu0 0.0
    %393 = vmatprep.subr.mxu0 0.0
    %394 = vmatpush1.msra.mxu0 0.0
    %395 = vmatprep.subr.mxu0 0.0
    %396 = vmatpush1.msra.mxu0 0.0
    %397 = vmatprep.subr.mxu0 0.0
    %398 = vmatpush1.msra.mxu0 0.0
    %399 = vmatprep.subr.mxu0 0.0
    %400 = vmatpush1.msra.mxu0 0.0
    %401 = vmatprep.subr.mxu0 0.0
    %402 = vmatpush1.msra.mxu0 0.0
    %403 = vmatprep.subr.mxu0 0.0
    %404 = vmatpush1.msra.mxu0 0.0
    %405 = vmatprep.subr.mxu0 0.0
    %406 = vmatpush1.msra.mxu0 0.0
    %407 = vmatprep.subr.mxu0 0.0
    %408 = vmatpush1.msra.mxu0 0.0
    %409 = vmatprep.subr.mxu0 0.0
    %410 = vmatpush1.msra.mxu0 0.0
    %411 = vmatprep.subr.mxu0 0.0
    %412 = vmatpush1.msra.mxu0 0.0
    %413 = vmatprep.subr.mxu0 0.0
    %414 = vmatpush1.msra.mxu0 0.0
    %415 = vmatprep.subr.mxu0 0.0
    %416 = vmatpush1.msra.mxu0 0.0
    %417 = vmatprep.subr.mxu0 0.0
    %418 = vmatpush1.msra.mxu0 0.0
    %419 = vmatprep.subr.mxu0 0.0
    %420 = vmatpush1.msra.mxu0 0.0
    %421 = vmatprep.subr.mxu0 0.0
    %422 = vmatpush1.msra.mxu0 0.0
    %423 = vmatprep.subr.mxu0 0.0
    %424 = vmatpush1.msra.mxu0 0.0
    %425 = vmatprep.subr.mxu0 0.0
    %426 = vmatpush1.msra.mxu0 0.0
    %427 = vmatprep.subr.mxu0 0.0
    %428 = vmatpush1.msra.mxu0 0.0
    %429 = vmatprep.subr.mxu0 0.0
    %430 = vmatpush1.msra.mxu0 0.0
    %431 = vmatprep.subr.mxu0 0.0
    %432 = vmatpush1.msra.mxu0 0.0
    %433 = vmatprep.mubr.f32.mxu0 0.0
    %434 = vmatmul.mubr.f32.gmra.mrb[0].mxu0 %v209
    %v435 = vpop.f32.mrb[0].mxu0
    %v436 = vadd.f32 0.0, %v435
    %v437 = vpop.f32.mrb[0].mxu0
    %438 = vdwg.mxu0
    %440 = vrot.lane.b32.xlu0 %v436, 64
    %v441 = vpop.permute.xlu0 %440
    %v443 = vadd.f32 %v182, %v441
    %v444 = vtanh.pop %v443
    %445 = vmatprep.subr.mxu0 0.0
    %446 = vmatpush1.msra.mxu0 %v202
    %447 = vmatprep.subr.mxu0 0.0
    %448 = vmatpush1.msra.mxu0 %v203
    %449 = vmatprep.subr.mxu0 0.0
    %450 = vmatpush1.msra.mxu0 %v204
    %451 = vmatprep.subr.mxu0 0.0
    %452 = vmatpush1.msra.mxu0 %v205
    %453 = vmatprep.subr.mxu0 0.0
    %454 = vmatpush1.msra.mxu0 0.0
    %455 = vmatprep.subr.mxu0 0.0
    %456 = vmatpush1.msra.mxu0 0.0
    %457 = vmatprep.subr.mxu0 0.0
    %458 = vmatpush1.msra.mxu0 0.0
    %459 = vmatprep.subr.mxu0 0.0
    %460 = vmatpush1.msra.mxu0 0.0
    %461 = vmatprep.subr.mxu0 0.0
    %462 = vmatpush1.msra.mxu0 0.0
    %463 = vmatprep.subr.mxu0 0.0
    %464 = vmatpush1.msra.mxu0 0.0
    %465 = vmatprep.subr.mxu0 0.0
    %466 = vmatpush1.msra.mxu0 0.0
    %467 = vmatprep.subr.mxu0 0.0
    %468 = vmatpush1.msra.mxu0 0.0
    %469 = vmatprep.subr.mxu0 0.0
    %470 = vmatpush1.msra.mxu0 0.0
    %471 = vmatprep.subr.mxu0 0.0
    %472 = vmatpush1.msra.mxu0 0.0
    %473 = vmatprep.subr.mxu0 0.0
    %474 = vmatpush1.msra.mxu0 0.0
    %475 = vmatprep.subr.mxu0 0.0
    %476 = vmatpush1.msra.mxu0 0.0
    %477 = vmatprep.subr.mxu0 0.0
    %478 = vmatpush1.msra.mxu0 0.0
    %479 = vmatprep.subr.mxu0 0.0
    %480 = vmatpush1.msra.mxu0 0.0
    %481 = vmatprep.subr.mxu0 0.0
    %482 = vmatpush1.msra.mxu0 0.0
    %483 = vmatprep.subr.mxu0 0.0
    %484 = vmatpush1.msra.mxu0 0.0
    %485 = vmatprep.subr.mxu0 0.0
    %486 = vmatpush1.msra.mxu0 0.0
    %487 = vmatprep.subr.mxu0 0.0
    %488 = vmatpush1.msra.mxu0 0.0
    %489 = vmatprep.subr.mxu0 0.0
    %490 = vmatpush1.msra.mxu0 0.0
    %491 = vmatprep.subr.mxu0 0.0
    %492 = vmatpush1.msra.mxu0 0.0
    %493 = vmatprep.subr.mxu0 0.0
    %494 = vmatpush1.msra.mxu0 0.0
    %495 = vmatprep.subr.mxu0 0.0
    %496 = vmatpush1.msra.mxu0 0.0
    %497 = vmatprep.subr.mxu0 0.0
    %498 = vmatpush1.msra.mxu0 0.0
    %499 = vmatprep.subr.mxu0 0.0
    %500 = vmatpush1.msra.mxu0 0.0
    %501 = vmatprep.subr.mxu0 0.0
    %502 = vmatpush1.msra.mxu0 0.0
    %503 = vmatprep.subr.mxu0 0.0
    %504 = vmatpush1.msra.mxu0 0.0
    %505 = vmatprep.subr.mxu0 0.0
    %506 = vmatpush1.msra.mxu0 0.0
    %507 = vmatprep.subr.mxu0 0.0
    %508 = vmatpush1.msra.mxu0 0.0
    %509 = vmatprep.mubr.f32.mxu0 0.0
    %510 = vmatmul.mubr.f32.gmra.mrb[0].mxu0 %v209
    %v511 = vpop.f32.mrb[0].mxu0
    %v512 = vadd.f32 0.0, %v511
    %v513 = vpop.f32.mrb[0].mxu0
    %514 = vdwg.mxu0
    %516 = vrot.lane.b32.xlu0 %v512, 96
    %v517 = vpop.permute.xlu0 %516
    %v519 = vadd.f32 %v182, %v517
    %v520 = vxor.u32 %v519, 2147483648
    %v521 = vmul.f32 %v520, 1.442695
    %v522 = vpow.pop %v521
    %v523 = vadd.f32 %v522, 1.0
    %v524 = vrcp.pop %v523
    %v525 = vmul.f32 1.0, %v524
    %v526 = vmul.f32 %v368, 0.0
    %528 = vrot.lane.b32.xlu0 %v444, 64
    %v529 = vpop.permute.xlu0 %528
    %v531 = vmul.f32 %v287, %v529
    %533 = vrot.lane.b32.xlu0 %v531, 32
    %v534 = vpop.permute.xlu0 %533
    %v536 = vadd.f32 %v526, %v534
    %v537 = vtanh.pop %v536
    %539 = vrot.lane.b32.xlu0 %v537, 64
    %v540 = vpop.permute.xlu0 %539
    %v542 = vmul.f32 %v525, %v540
    %v544 = vlaneseq
    %v545 = vshrl.u32 %v544, 7
    %v546 = vsub.s32 0, %v545
    %v547 = vrot.slane %v206, %v546
    %548 = vrot.lane.b32.xlu0 %v547, 96
    %v549 = vpop.permute.xlu0 %548
    %v551 = vmul.f32 %v542, %v549
    %553 = vrot.lane.b32.xlu0 %v551, 32
    %v554 = vpop.permute.xlu0 %553
    %vm556 = vcmask 254976
    %v557 = vsel %vm556, %v554, 0.0
    %558 = vadd.xlane.f32.xlu0 %v557
    %v559 = vpop.xlane.xlu0 %558
    %561 = vrot.lane.b32.xlu0 %v542, 32
    %v562 = vpop.permute.xlu0 %561
    %v563 = vsel %vm207, %v562, 0
    %565 = vmatprep.subr.mxu0 0.0
    %566 = vmatpush1.msra.mxu0 %v190
    %567 = vmatprep.subr.mxu0 0.0
    %568 = vmatpush1.msra.mxu0 %v191
    %569 = vmatprep.subr.mxu0 0.0
    %570 = vmatpush1.msra.mxu0 %v192
    %571 = vmatprep.subr.mxu0 0.0
    %572 = vmatpush1.msra.mxu0 %v193
    %573 = vmatprep.subr.mxu0 0.0
    %574 = vmatpush1.msra.mxu0 0.0
    %575 = vmatprep.subr.mxu0 0.0
    %576 = vmatpush1.msra.mxu0 0.0
    %577 = vmatprep.subr.mxu0 0.0
    %578 = vmatpush1.msra.mxu0 0.0
    %579 = vmatprep.subr.mxu0 0.0
    %580 = vmatpush1.msra.mxu0 0.0
    %581 = vmatprep.subr.mxu0 0.0
    %582 = vmatpush1.msra.mxu0 0.0
    %583 = vmatprep.subr.mxu0 0.0
    %584 = vmatpush1.msra.mxu0 0.0
    %585 = vmatprep.subr.mxu0 0.0
    %586 = vmatpush1.msra.mxu0 0.0
    %587 = vmatprep.subr.mxu0 0.0
    %588 = vmatpush1.msra.mxu0 0.0
    %589 = vmatprep.subr.mxu0 0.0
    %590 = vmatpush1.msra.mxu0 0.0
    %591 = vmatprep.subr.mxu0 0.0
    %592 = vmatpush1.msra.mxu0 0.0
    %593 = vmatprep.subr.mxu0 0.0
    %594 = vmatpush1.msra.mxu0 0.0
    %595 = vmatprep.subr.mxu0 0.0
    %596 = vmatpush1.msra.mxu0 0.0
    %597 = vmatprep.subr.mxu0 0.0
    %598 = vmatpush1.msra.mxu0 0.0
    %599 = vmatprep.subr.mxu0 0.0
    %600 = vmatpush1.msra.mxu0 0.0
    %601 = vmatprep.subr.mxu0 0.0
    %602 = vmatpush1.msra.mxu0 0.0
    %603 = vmatprep.subr.mxu0 0.0
    %604 = vmatpush1.msra.mxu0 0.0
    %605 = vmatprep.subr.mxu0 0.0
    %606 = vmatpush1.msra.mxu0 0.0
    %607 = vmatprep.subr.mxu0 0.0
    %608 = vmatpush1.msra.mxu0 0.0
    %609 = vmatprep.subr.mxu0 0.0
    %610 = vmatpush1.msra.mxu0 0.0
    %611 = vmatprep.subr.mxu0 0.0
    %612 = vmatpush1.msra.mxu0 0.0
    %613 = vmatprep.subr.mxu0 0.0
    %614 = vmatpush1.msra.mxu0 0.0
    %615 = vmatprep.subr.mxu0 0.0
    %616 = vmatpush1.msra.mxu0 0.0
    %617 = vmatprep.subr.mxu0 0.0
    %618 = vmatpush1.msra.mxu0 0.0
    %619 = vmatprep.subr.mxu0 0.0
    %620 = vmatpush1.msra.mxu0 0.0
    %621 = vmatprep.subr.mxu0 0.0
    %622 = vmatpush1.msra.mxu0 0.0
    %623 = vmatprep.subr.mxu0 0.0
    %624 = vmatpush1.msra.mxu0 0.0
    %625 = vmatprep.subr.mxu0 0.0
    %626 = vmatpush1.msra.mxu0 0.0
    %627 = vmatprep.subr.mxu0 0.0
    %628 = vmatpush1.msra.mxu0 0.0
    %629 = vmatprep.mubr.f32.mxu0 0.0
    %630 = vmatmul.mubr.f32.gmra.mrb[0].mxu0 %v563
    %v631 = vpop.f32.mrb[0].mxu0
    %v632 = vadd.f32 0.0, %v631
    %v633 = vpop.f32.mrb[0].mxu0
    %634 = vdwg.mxu0
    %v636 = vrot.slane %v632, 6
    %v638 = vadd.f32 %v182, %v636
    %v639 = vxor.u32 %v638, 2147483648
    %v640 = vmul.f32 %v639, 1.442695
    %v641 = vpow.pop %v640
    %v642 = vadd.f32 %v641, 1.0
    %v643 = vrcp.pop %v642
    %v644 = vmul.f32 1.0, %v643
    %645 = vmatprep.subr.mxu0 0.0
    %646 = vmatpush1.msra.mxu0 %v194
    %647 = vmatprep.subr.mxu0 0.0
    %648 = vmatpush1.msra.mxu0 %v195
    %649 = vmatprep.subr.mxu0 0.0
    %650 = vmatpush1.msra.mxu0 %v196
    %651 = vmatprep.subr.mxu0 0.0
    %652 = vmatpush1.msra.mxu0 %v197
    %653 = vmatprep.subr.mxu0 0.0
    %654 = vmatpush1.msra.mxu0 0.0
    %655 = vmatprep.subr.mxu0 0.0
    %656 = vmatpush1.msra.mxu0 0.0
    %657 = vmatprep.subr.mxu0 0.0
    %658 = vmatpush1.msra.mxu0 0.0
    %659 = vmatprep.subr.mxu0 0.0
    %660 = vmatpush1.msra.mxu0 0.0
    %661 = vmatprep.subr.mxu0 0.0
    %662 = vmatpush1.msra.mxu0 0.0
    %663 = vmatprep.subr.mxu0 0.0
    %664 = vmatpush1.msra.mxu0 0.0
    %665 = vmatprep.subr.mxu0 0.0
    %666 = vmatpush1.msra.mxu0 0.0
    %667 = vmatprep.subr.mxu0 0.0
    %668 = vmatpush1.msra.mxu0 0.0
    %669 = vmatprep.subr.mxu0 0.0
    %670 = vmatpush1.msra.mxu0 0.0
    %671 = vmatprep.subr.mxu0 0.0
    %672 = vmatpush1.msra.mxu0 0.0
    %673 = vmatprep.subr.mxu0 0.0
    %674 = vmatpush1.msra.mxu0 0.0
    %675 = vmatprep.subr.mxu0 0.0
    %676 = vmatpush1.msra.mxu0 0.0
    %677 = vmatprep.subr.mxu0 0.0
    %678 = vmatpush1.msra.mxu0 0.0
    %679 = vmatprep.subr.mxu0 0.0
    %680 = vmatpush1.msra.mxu0 0.0
    %681 = vmatprep.subr.mxu0 0.0
    %682 = vmatpush1.msra.mxu0 0.0
    %683 = vmatprep.subr.mxu0 0.0
    %684 = vmatpush1.msra.mxu0 0.0
    %685 = vmatprep.subr.mxu0 0.0
    %686 = vmatpush1.msra.mxu0 0.0
    %687 = vmatprep.subr.mxu0 0.0
    %688 = vmatpush1.msra.mxu0 0.0
    %689 = vmatprep.subr.mxu0 0.0
    %690 = vmatpush1.msra.mxu0 0.0
    %691 = vmatprep.subr.mxu0 0.0
    %692 = vmatpush1.msra.mxu0 0.0
    %693 = vmatprep.subr.mxu0 0.0
    %694 = vmatpush1.msra.mxu0 0.0
    %695 = vmatprep.subr.mxu0 0.0
    %696 = vmatpush1.msra.mxu0 0.0
    %697 = vmatprep.subr.mxu0 0.0
    %698 = vmatpush1.msra.mxu0 0.0
    %699 = vmatprep.subr.mxu0 0.0
    %700 = vmatpush1.msra.mxu0 0.0
    %701 = vmatprep.subr.mxu0 0.0
    %702 = vmatpush1.msra.mxu0 0.0
    %703 = vmatprep.subr.mxu0 0.0
    %704 = vmatpush1.msra.mxu0 0.0
    %705 = vmatprep.subr.mxu0 0.0
    %706 = vmatpush1.msra.mxu0 0.0
    %707 = vmatprep.subr.mxu0 0.0
    %708 = vmatpush1.msra.mxu0 0.0
    %709 = vmatprep.mubr.f32.mxu0 0.0
    %710 = vmatmul.mubr.f32.gmra.mrb[0].mxu0 %v563
    %v711 = vpop.f32.mrb[0].mxu0
    %v712 = vadd.f32 0.0, %v711
    %v713 = vpop.f32.mrb[0].mxu0
    %714 = vdwg.mxu0
    %v716 = vrot.slane %v712, 6
    %717 = vrot.lane.b32.xlu0 %v716, 32
    %v718 = vpop.permute.xlu0 %717
    %v720 = vadd.f32 %v182, %v718
    %v721 = vxor.u32 %v720, 2147483648
    %v722 = vmul.f32 %v721, 1.442695
    %v723 = vpow.pop %v722
    %v724 = vadd.f32 %v723, 1.0
    %v725 = vrcp.pop %v724
    %v726 = vmul.f32 1.0, %v725
    %727 = vmatprep.subr.mxu0 0.0
    %728 = vmatpush1.msra.mxu0 %v198
    %729 = vmatprep.subr.mxu0 0.0
    %730 = vmatpush1.msra.mxu0 %v199
    %731 = vmatprep.subr.mxu0 0.0
    %732 = vmatpush1.msra.mxu0 %v200
    %733 = vmatprep.subr.mxu0 0.0
    %734 = vmatpush1.msra.mxu0 %v201
    %735 = vmatprep.subr.mxu0 0.0
    %736 = vmatpush1.msra.mxu0 0.0
    %737 = vmatprep.subr.mxu0 0.0
    %738 = vmatpush1.msra.mxu0 0.0
    %739 = vmatprep.subr.mxu0 0.0
    %740 = vmatpush1.msra.mxu0 0.0
    %741 = vmatprep.subr.mxu0 0.0
    %742 = vmatpush1.msra.mxu0 0.0
    %743 = vmatprep.subr.mxu0 0.0
    %744 = vmatpush1.msra.mxu0 0.0
    %745 = vmatprep.subr.mxu0 0.0
    %746 = vmatpush1.msra.mxu0 0.0
    %747 = vmatprep.subr.mxu0 0.0
    %748 = vmatpush1.msra.mxu0 0.0
    %749 = vmatprep.subr.mxu0 0.0
    %750 = vmatpush1.msra.mxu0 0.0
    %751 = vmatprep.subr.mxu0 0.0
    %752 = vmatpush1.msra.mxu0 0.0
    %753 = vmatprep.subr.mxu0 0.0
    %754 = vmatpush1.msra.mxu0 0.0
    %755 = vmatprep.subr.mxu0 0.0
    %756 = vmatpush1.msra.mxu0 0.0
    %757 = vmatprep.subr.mxu0 0.0
    %758 = vmatpush1.msra.mxu0 0.0
    %759 = vmatprep.subr.mxu0 0.0
    %760 = vmatpush1.msra.mxu0 0.0
    %761 = vmatprep.subr.mxu0 0.0
    %762 = vmatpush1.msra.mxu0 0.0
    %763 = vmatprep.subr.mxu0 0.0
    %764 = vmatpush1.msra.mxu0 0.0
    %765 = vmatprep.subr.mxu0 0.0
    %766 = vmatpush1.msra.mxu0 0.0
    %767 = vmatprep.subr.mxu0 0.0
    %768 = vmatpush1.msra.mxu0 0.0
    %769 = vmatprep.subr.mxu0 0.0
    %770 = vmatpush1.msra.mxu0 0.0
    %771 = vmatprep.subr.mxu0 0.0
    %772 = vmatpush1.msra.mxu0 0.0
    %773 = vmatprep.subr.mxu0 0.0
    %774 = vmatpush1.msra.mxu0 0.0
    %775 = vmatprep.subr.mxu0 0.0
    %776 = vmatpush1.msra.mxu0 0.0
    %777 = vmatprep.subr.mxu0 0.0
    %778 = vmatpush1.msra.mxu0 0.0
    %779 = vmatprep.subr.mxu0 0.0
    %780 = vmatpush1.msra.mxu0 0.0
    %781 = vmatprep.subr.mxu0 0.0
    %782 = vmatpush1.msra.mxu0 0.0
    %783 = vmatprep.subr.mxu0 0.0
    %784 = vmatpush1.msra.mxu0 0.0
    %785 = vmatprep.subr.mxu0 0.0
    %786 = vmatpush1.msra.mxu0 0.0
    %787 = vmatprep.subr.mxu0 0.0
    %788 = vmatpush1.msra.mxu0 0.0
    %789 = vmatprep.subr.mxu0 0.0
    %790 = vmatpush1.msra.mxu0 0.0
    %791 = vmatprep.mubr.f32.mxu0 0.0
    %792 = vmatmul.mubr.f32.gmra.mrb[0].mxu0 %v563
    %v793 = vpop.f32.mrb[0].mxu0
    %v794 = vadd.f32 0.0, %v793
    %v795 = vpop.f32.mrb[0].mxu0
    %796 = vdwg.mxu0
    %v798 = vrot.slane %v794, 6
    %799 = vrot.lane.b32.xlu0 %v798, 64
    %v800 = vpop.permute.xlu0 %799
    %v802 = vadd.f32 %v182, %v800
    %v803 = vtanh.pop %v802
    %804 = vmatprep.subr.mxu0 0.0
    %805 = vmatpush1.msra.mxu0 %v202
    %806 = vmatprep.subr.mxu0 0.0
    %807 = vmatpush1.msra.mxu0 %v203
    %808 = vmatprep.subr.mxu0 0.0
    %809 = vmatpush1.msra.mxu0 %v204
    %810 = vmatprep.subr.mxu0 0.0
    %811 = vmatpush1.msra.mxu0 %v205
    %812 = vmatprep.subr.mxu0 0.0
    %813 = vmatpush1.msra.mxu0 0.0
    %814 = vmatprep.subr.mxu0 0.0
    %815 = vmatpush1.msra.mxu0 0.0
    %816 = vmatprep.subr.mxu0 0.0
    %817 = vmatpush1.msra.mxu0 0.0
    %818 = vmatprep.subr.mxu0 0.0
    %819 = vmatpush1.msra.mxu0 0.0
    %820 = vmatprep.subr.mxu0 0.0
    %821 = vmatpush1.msra.mxu0 0.0
    %822 = vmatprep.subr.mxu0 0.0
    %823 = vmatpush1.msra.mxu0 0.0
    %824 = vmatprep.subr.mxu0 0.0
    %825 = vmatpush1.msra.mxu0 0.0
    %826 = vmatprep.subr.mxu0 0.0
    %827 = vmatpush1.msra.mxu0 0.0
    %828 = vmatprep.subr.mxu0 0.0
    %829 = vmatpush1.msra.mxu0 0.0
    %830 = vmatprep.subr.mxu0 0.0
    %831 = vmatpush1.msra.mxu0 0.0
    %832 = vmatprep.subr.mxu0 0.0
    %833 = vmatpush1.msra.mxu0 0.0
    %834 = vmatprep.subr.mxu0 0.0
    %835 = vmatpush1.msra.mxu0 0.0
    %836 = vmatprep.subr.mxu0 0.0
    %837 = vmatpush1.msra.mxu0 0.0
    %838 = vmatprep.subr.mxu0 0.0
    %839 = vmatpush1.msra.mxu0 0.0
    %840 = vmatprep.subr.mxu0 0.0
    %841 = vmatpush1.msra.mxu0 0.0
    %842 = vmatprep.subr.mxu0 0.0
    %843 = vmatpush1.msra.mxu0 0.0
    %844 = vmatprep.subr.mxu0 0.0
    %845 = vmatpush1.msra.mxu0 0.0
    %846 = vmatprep.subr.mxu0 0.0
    %847 = vmatpush1.msra.mxu0 0.0
    %848 = vmatprep.subr.mxu0 0.0
    %849 = vmatpush1.msra.mxu0 0.0
    %850 = vmatprep.subr.mxu0 0.0
    %851 = vmatpush1.msra.mxu0 0.0
    %852 = vmatprep.subr.mxu0 0.0
    %853 = vmatpush1.msra.mxu0 0.0
    %854 = vmatprep.subr.mxu0 0.0
    %855 = vmatpush1.msra.mxu0 0.0
    %856 = vmatprep.subr.mxu0 0.0
    %857 = vmatpush1.msra.mxu0 0.0
    %858 = vmatprep.subr.mxu0 0.0
    %859 = vmatpush1.msra.mxu0 0.0
    %860 = vmatprep.subr.mxu0 0.0
    %861 = vmatpush1.msra.mxu0 0.0
    %862 = vmatprep.subr.mxu0 0.0
    %863 = vmatpush1.msra.mxu0 0.0
    %864 = vmatprep.subr.mxu0 0.0
    %865 = vmatpush1.msra.mxu0 0.0
    %866 = vmatprep.subr.mxu0 0.0
    %867 = vmatpush1.msra.mxu0 0.0
    %868 = vmatprep.mubr.f32.mxu0 0.0
    %869 = vmatmul.mubr.f32.gmra.mrb[0].mxu0 %v563
    %v870 = vpop.f32.mrb[0].mxu0
    %v871 = vadd.f32 0.0, %v870
    %v872 = vpop.f32.mrb[0].mxu0
    %873 = vdwg.mxu0
    %v875 = vrot.slane %v871, 6
    %876 = vrot.lane.b32.xlu0 %v875, 96
    %v877 = vpop.permute.xlu0 %876
    %v879 = vadd.f32 %v182, %v877
    %v880 = vxor.u32 %v879, 2147483648
    %v881 = vmul.f32 %v880, 1.442695
    %v882 = vpow.pop %v881
    %v883 = vadd.f32 %v882, 1.0
    %v884 = vrcp.pop %v883
    %v885 = vmul.f32 1.0, %v884
    %v887 = vrot.slane %v536, 6
    %v889 = vmul.f32 %v726, %v887
    %891 = vrot.lane.b32.xlu0 %v803, 64
    %v892 = vpop.permute.xlu0 %891
    %v894 = vmul.f32 %v644, %v892
    %896 = vrot.lane.b32.xlu0 %v894, 32
    %v897 = vpop.permute.xlu0 %896
    %v899 = vadd.f32 %v889, %v897
    %v900 = vtanh.pop %v899
    %902 = vrot.lane.b32.xlu0 %v900, 64
    %v903 = vpop.permute.xlu0 %902
    %v905 = vmul.f32 %v885, %v903
    %v906 = vmul.f32 %v905, %v549
    %908 = vrot.lane.b32.xlu0 %v906, 32
    %v909 = vpop.permute.xlu0 %908
    %vm911 = vcmask 257026
    %v912 = vsel %vm911, %v909, 0.0
    %913 = vadd.xlane.f32.xlu0 %v912
    %v914 = vpop.xlane.xlu0 %913
    %v916 = vrot.slane %v905, 2
    %917 = vrot.lane.b32.xlu0 %v916, 32
    %v918 = vpop.permute.xlu0 %917
    %v919 = vsel %vm207, %v918, 0
    %921 = vmatprep.subr.mxu0 0.0
    %922 = vmatpush1.msra.mxu0 %v190
    %923 = vmatprep.subr.mxu0 0.0
    %924 = vmatpush1.msra.mxu0 %v191
    %925 = vmatprep.subr.mxu0 0.0
    %926 = vmatpush1.msra.mxu0 %v192
    %927 = vmatprep.subr.mxu0 0.0
    %928 = vmatpush1.msra.mxu0 %v193
    %929 = vmatprep.subr.mxu0 0.0
    %930 = vmatpush1.msra.mxu0 0.0
    %931 = vmatprep.subr.mxu0 0.0
    %932 = vmatpush1.msra.mxu0 0.0
    %933 = vmatprep.subr.mxu0 0.0
    %934 = vmatpush1.msra.mxu0 0.0
    %935 = vmatprep.subr.mxu0 0.0
    %936 = vmatpush1.msra.mxu0 0.0
    %937 = vmatprep.subr.mxu0 0.0
    %938 = vmatpush1.msra.mxu0 0.0
    %939 = vmatprep.subr.mxu0 0.0
    %940 = vmatpush1.msra.mxu0 0.0
    %941 = vmatprep.subr.mxu0 0.0
    %942 = vmatpush1.msra.mxu0 0.0
    %943 = vmatprep.subr.mxu0 0.0
    %944 = vmatpush1.msra.mxu0 0.0
    %945 = vmatprep.subr.mxu0 0.0
    %946 = vmatpush1.msra.mxu0 0.0
    %947 = vmatprep.subr.mxu0 0.0
    %948 = vmatpush1.msra.mxu0 0.0
    %949 = vmatprep.subr.mxu0 0.0
    %950 = vmatpush1.msra.mxu0 0.0
    %951 = vmatprep.subr.mxu0 0.0
    %952 = vmatpush1.msra.mxu0 0.0
    %953 = vmatprep.subr.mxu0 0.0
    %954 = vmatpush1.msra.mxu0 0.0
    %955 = vmatprep.subr.mxu0 0.0
    %956 = vmatpush1.msra.mxu0 0.0
    %957 = vmatprep.subr.mxu0 0.0
    %958 = vmatpush1.msra.mxu0 0.0
    %959 = vmatprep.subr.mxu0 0.0
    %960 = vmatpush1.msra.mxu0 0.0
    %961 = vmatprep.subr.mxu0 0.0
    %962 = vmatpush1.msra.mxu0 0.0
    %963 = vmatprep.subr.mxu0 0.0
    %964 = vmatpush1.msra.mxu0 0.0
    %965 = vmatprep.subr.mxu0 0.0
    %966 = vmatpush1.msra.mxu0 0.0
    %967 = vmatprep.subr.mxu0 0.0
    %968 = vmatpush1.msra.mxu0 0.0
    %969 = vmatprep.subr.mxu0 0.0
    %970 = vmatpush1.msra.mxu0 0.0
    %971 = vmatprep.subr.mxu0 0.0
    %972 = vmatpush1.msra.mxu0 0.0
    %973 = vmatprep.subr.mxu0 0.0
    %974 = vmatpush1.msra.mxu0 0.0
    %975 = vmatprep.subr.mxu0 0.0
    %976 = vmatpush1.msra.mxu0 0.0
    %977 = vmatprep.subr.mxu0 0.0
    %978 = vmatpush1.msra.mxu0 0.0
    %979 = vmatprep.subr.mxu0 0.0
    %980 = vmatpush1.msra.mxu0 0.0
    %981 = vmatprep.subr.mxu0 0.0
    %982 = vmatpush1.msra.mxu0 0.0
    %983 = vmatprep.subr.mxu0 0.0
    %984 = vmatpush1.msra.mxu0 0.0
    %985 = vmatprep.mubr.f32.mxu0 0.0
    %986 = vmatmul.mubr.f32.gmra.mrb[0].mxu0 %v919
    %v987 = vpop.f32.mrb[0].mxu0
    %v988 = vadd.f32 0.0, %v987
    %v989 = vpop.f32.mrb[0].mxu0
    %990 = vdwg.mxu0
    %v992 = vrot.slane %v988, 4
    %v994 = vadd.f32 %v182, %v992
    %v995 = vxor.u32 %v994, 2147483648
    %v996 = vmul.f32 %v995, 1.442695
    %v997 = vpow.pop %v996
    %v998 = vadd.f32 %v997, 1.0
    %v999 = vrcp.pop %v998
    %v1000 = vmul.f32 1.0, %v999
    %1001 = vmatprep.subr.mxu0 0.0
    %1002 = vmatpush1.msra.mxu0 %v194
    %1003 = vmatprep.subr.mxu0 0.0
    %1004 = vmatpush1.msra.mxu0 %v195
    %1005 = vmatprep.subr.mxu0 0.0
    %1006 = vmatpush1.msra.mxu0 %v196
    %1007 = vmatprep.subr.mxu0 0.0
    %1008 = vmatpush1.msra.mxu0 %v197
    %1009 = vmatprep.subr.mxu0 0.0
    %1010 = vmatpush1.msra.mxu0 0.0
    %1011 = vmatprep.subr.mxu0 0.0
    %1012 = vmatpush1.msra.mxu0 0.0
    %1013 = vmatprep.subr.mxu0 0.0
    %1014 = vmatpush1.msra.mxu0 0.0
    %1015 = vmatprep.subr.mxu0 0.0
    %1016 = vmatpush1.msra.mxu0 0.0
    %1017 = vmatprep.subr.mxu0 0.0
    %1018 = vmatpush1.msra.mxu0 0.0
    %1019 = vmatprep.subr.mxu0 0.0
    %1020 = vmatpush1.msra.mxu0 0.0
    %1021 = vmatprep.subr.mxu0 0.0
    %1022 = vmatpush1.msra.mxu0 0.0
    %1023 = vmatprep.subr.mxu0 0.0
    %1024 = vmatpush1.msra.mxu0 0.0
    %1025 = vmatprep.subr.mxu0 0.0
    %1026 = vmatpush1.msra.mxu0 0.0
    %1027 = vmatprep.subr.mxu0 0.0
    %1028 = vmatpush1.msra.mxu0 0.0
    %1029 = vmatprep.subr.mxu0 0.0
    %1030 = vmatpush1.msra.mxu0 0.0
    %1031 = vmatprep.subr.mxu0 0.0
    %1032 = vmatpush1.msra.mxu0 0.0
    %1033 = vmatprep.subr.mxu0 0.0
    %1034 = vmatpush1.msra.mxu0 0.0
    %1035 = vmatprep.subr.mxu0 0.0
    %1036 = vmatpush1.msra.mxu0 0.0
    %1037 = vmatprep.subr.mxu0 0.0
    %1038 = vmatpush1.msra.mxu0 0.0
    %1039 = vmatprep.subr.mxu0 0.0
    %1040 = vmatpush1.msra.mxu0 0.0
    %1041 = vmatprep.subr.mxu0 0.0
    %1042 = vmatpush1.msra.mxu0 0.0
    %1043 = vmatprep.subr.mxu0 0.0
    %1044 = vmatpush1.msra.mxu0 0.0
    %1045 = vmatprep.subr.mxu0 0.0
    %1046 = vmatpush1.msra.mxu0 0.0
    %1047 = vmatprep.subr.mxu0 0.0
    %1048 = vmatpush1.msra.mxu0 0.0
    %1049 = vmatprep.subr.mxu0 0.0
    %1050 = vmatpush1.msra.mxu0 0.0
    %1051 = vmatprep.subr.mxu0 0.0
    %1052 = vmatpush1.msra.mxu0 0.0
    %1053 = vmatprep.subr.mxu0 0.0
    %1054 = vmatpush1.msra.mxu0 0.0
    %1055 = vmatprep.subr.mxu0 0.0
    %1056 = vmatpush1.msra.mxu0 0.0
    %1057 = vmatprep.subr.mxu0 0.0
    %1058 = vmatpush1.msra.mxu0 0.0
    %1059 = vmatprep.subr.mxu0 0.0
    %1060 = vmatpush1.msra.mxu0 0.0
    %1061 = vmatprep.subr.mxu0 0.0
    %1062 = vmatpush1.msra.mxu0 0.0
    %1063 = vmatprep.subr.mxu0 0.0
    %1064 = vmatpush1.msra.mxu0 0.0
    %1065 = vmatprep.mubr.f32.mxu0 0.0
    %1066 = vmatmul.mubr.f32.gmra.mrb[0].mxu0 %v919
    %v1067 = vpop.f32.mrb[0].mxu0
    %v1068 = vadd.f32 0.0, %v1067
    %v1069 = vpop.f32.mrb[0].mxu0
    %1070 = vdwg.mxu0
    %v1072 = vrot.slane %v1068, 4
    %1073 = vrot.lane.b32.xlu0 %v1072, 32
    %v1074 = vpop.permute.xlu0 %1073
    %v1076 = vadd.f32 %v182, %v1074
    %v1077 = vxor.u32 %v1076, 2147483648
    %v1078 = vmul.f32 %v1077, 1.442695
    %v1079 = vpow.pop %v1078
    %v1080 = vadd.f32 %v1079, 1.0
    %v1081 = vrcp.pop %v1080
    %v1082 = vmul.f32 1.0, %v1081
    %1083 = vmatprep.subr.mxu0 0.0
    %1084 = vmatpush1.msra.mxu0 %v198
    %1085 = vmatprep.subr.mxu0 0.0
    %1086 = vmatpush1.msra.mxu0 %v199
    %1087 = vmatprep.subr.mxu0 0.0
    %1088 = vmatpush1.msra.mxu0 %v200
    %1089 = vmatprep.subr.mxu0 0.0
    %1090 = vmatpush1.msra.mxu0 %v201
    %1091 = vmatprep.subr.mxu0 0.0
    %1092 = vmatpush1.msra.mxu0 0.0
    %1093 = vmatprep.subr.mxu0 0.0
    %1094 = vmatpush1.msra.mxu0 0.0
    %1095 = vmatprep.subr.mxu0 0.0
    %1096 = vmatpush1.msra.mxu0 0.0
    %1097 = vmatprep.subr.mxu0 0.0
    %1098 = vmatpush1.msra.mxu0 0.0
    %1099 = vmatprep.subr.mxu0 0.0
    %1100 = vmatpush1.msra.mxu0 0.0
    %1101 = vmatprep.subr.mxu0 0.0
    %1102 = vmatpush1.msra.mxu0 0.0
    %1103 = vmatprep.subr.mxu0 0.0
    %1104 = vmatpush1.msra.mxu0 0.0
    %1105 = vmatprep.subr.mxu0 0.0
    %1106 = vmatpush1.msra.mxu0 0.0
    %1107 = vmatprep.subr.mxu0 0.0
    %1108 = vmatpush1.msra.mxu0 0.0
    %1109 = vmatprep.subr.mxu0 0.0
    %1110 = vmatpush1.msra.mxu0 0.0
    %1111 = vmatprep.subr.mxu0 0.0
    %1112 = vmatpush1.msra.mxu0 0.0
    %1113 = vmatprep.subr.mxu0 0.0
    %1114 = vmatpush1.msra.mxu0 0.0
    %1115 = vmatprep.subr.mxu0 0.0
    %1116 = vmatpush1.msra.mxu0 0.0
    %1117 = vmatprep.subr.mxu0 0.0
    %1118 = vmatpush1.msra.mxu0 0.0
    %1119 = vmatprep.subr.mxu0 0.0
    %1120 = vmatpush1.msra.mxu0 0.0
    %1121 = vmatprep.subr.mxu0 0.0
    %1122 = vmatpush1.msra.mxu0 0.0
    %1123 = vmatprep.subr.mxu0 0.0
    %1124 = vmatpush1.msra.mxu0 0.0
    %1125 = vmatprep.subr.mxu0 0.0
    %1126 = vmatpush1.msra.mxu0 0.0
    %1127 = vmatprep.subr.mxu0 0.0
    %1128 = vmatpush1.msra.mxu0 0.0
    %1129 = vmatprep.subr.mxu0 0.0
    %1130 = vmatpush1.msra.mxu0 0.0
    %1131 = vmatprep.subr.mxu0 0.0
    %1132 = vmatpush1.msra.mxu0 0.0
    %1133 = vmatprep.subr.mxu0 0.0
    %1134 = vmatpush1.msra.mxu0 0.0
    %1135 = vmatprep.subr.mxu0 0.0
    %1136 = vmatpush1.msra.mxu0 0.0
    %1137 = vmatprep.subr.mxu0 0.0
    %1138 = vmatpush1.msra.mxu0 0.0
    %1139 = vmatprep.subr.mxu0 0.0
    %1140 = vmatpush1.msra.mxu0 0.0
    %1141 = vmatprep.subr.mxu0 0.0
    %1142 = vmatpush1.msra.mxu0 0.0
    %1143 = vmatprep.subr.mxu0 0.0
    %1144 = vmatpush1.msra.mxu0 0.0
    %1145 = vmatprep.subr.mxu0 0.0
    %1146 = vmatpush1.msra.mxu0 0.0
    %1147 = vmatprep.mubr.f32.mxu0 0.0
    %1148 = vmatmul.mubr.f32.gmra.mrb[0].mxu0 %v919
    %v1149 = vpop.f32.mrb[0].mxu0
    %v1150 = vadd.f32 0.0, %v1149
    %v1151 = vpop.f32.mrb[0].mxu0
    %1152 = vdwg.mxu0
    %v1154 = vrot.slane %v1150, 4
    %1155 = vrot.lane.b32.xlu0 %v1154, 64
    %v1156 = vpop.permute.xlu0 %1155
    %v1158 = vadd.f32 %v182, %v1156
    %v1159 = vtanh.pop %v1158
    %1160 = vmatprep.subr.mxu0 0.0
    %1161 = vmatpush1.msra.mxu0 %v202
    %1162 = vmatprep.subr.mxu0 0.0
    %1163 = vmatpush1.msra.mxu0 %v203
    %1164 = vmatprep.subr.mxu0 0.0
    %1165 = vmatpush1.msra.mxu0 %v204
    %1166 = vmatprep.subr.mxu0 0.0
    %1167 = vmatpush1.msra.mxu0 %v205
    %1168 = vmatprep.subr.mxu0 0.0
    %1169 = vmatpush1.msra.mxu0 0.0
    %1170 = vmatprep.subr.mxu0 0.0
    %1171 = vmatpush1.msra.mxu0 0.0
    %1172 = vmatprep.subr.mxu0 0.0
    %1173 = vmatpush1.msra.mxu0 0.0
    %1174 = vmatprep.subr.mxu0 0.0
    %1175 = vmatpush1.msra.mxu0 0.0
    %1176 = vmatprep.subr.mxu0 0.0
    %1177 = vmatpush1.msra.mxu0 0.0
    %1178 = vmatprep.subr.mxu0 0.0
    %1179 = vmatpush1.msra.mxu0 0.0
    %1180 = vmatprep.subr.mxu0 0.0
    %1181 = vmatpush1.msra.mxu0 0.0
    %1182 = vmatprep.subr.mxu0 0.0
    %1183 = vmatpush1.msra.mxu0 0.0
    %1184 = vmatprep.subr.mxu0 0.0
    %1185 = vmatpush1.msra.mxu0 0.0
    %1186 = vmatprep.subr.mxu0 0.0
    %1187 = vmatpush1.msra.mxu0 0.0
    %1188 = vmatprep.subr.mxu0 0.0
    %1189 = vmatpush1.msra.mxu0 0.0
    %1190 = vmatprep.subr.mxu0 0.0
    %1191 = vmatpush1.msra.mxu0 0.0
    %1192 = vmatprep.subr.mxu0 0.0
    %1193 = vmatpush1.msra.mxu0 0.0
    %1194 = vmatprep.subr.mxu0 0.0
    %1195 = vmatpush1.msra.mxu0 0.0
    %1196 = vmatprep.subr.mxu0 0.0
    %1197 = vmatpush1.msra.mxu0 0.0
    %1198 = vmatprep.subr.mxu0 0.0
    %1199 = vmatpush1.msra.mxu0 0.0
    %1200 = vmatprep.subr.mxu0 0.0
    %1201 = vmatpush1.msra.mxu0 0.0
    %1202 = vmatprep.subr.mxu0 0.0
    %1203 = vmatpush1.msra.mxu0 0.0
    %1204 = vmatprep.subr.mxu0 0.0
    %1205 = vmatpush1.msra.mxu0 0.0
    %1206 = vmatprep.subr.mxu0 0.0
    %1207 = vmatpush1.msra.mxu0 0.0
    %1208 = vmatprep.subr.mxu0 0.0
    %1209 = vmatpush1.msra.mxu0 0.0
    %1210 = vmatprep.subr.mxu0 0.0
    %1211 = vmatpush1.msra.mxu0 0.0
    %1212 = vmatprep.subr.mxu0 0.0
    %1213 = vmatpush1.msra.mxu0 0.0
    %1214 = vmatprep.subr.mxu0 0.0
    %1215 = vmatpush1.msra.mxu0 0.0
    %1216 = vmatprep.subr.mxu0 0.0
    %1217 = vmatpush1.msra.mxu0 0.0
    %1218 = vmatprep.subr.mxu0 0.0
    %1219 = vmatpush1.msra.mxu0 0.0
    %1220 = vmatprep.subr.mxu0 0.0
    %1221 = vmatpush1.msra.mxu0 0.0
    %1222 = vmatprep.subr.mxu0 0.0
    %1223 = vmatpush1.msra.mxu0 0.0
    %1224 = vmatprep.mubr.f32.mxu0 0.0
    %1225 = vmatmul.mubr.f32.gmra.mrb[0].mxu0 %v919
    %v1226 = vpop.f32.mrb[0].mxu0
    %v1227 = vadd.f32 0.0, %v1226
    %v1228 = vpop.f32.mrb[0].mxu0
    %1229 = vdwg.mxu0
    %v1231 = vrot.slane %v1227, 4
    %1232 = vrot.lane.b32.xlu0 %v1231, 96
    %v1233 = vpop.permute.xlu0 %1232
    %v1235 = vadd.f32 %v182, %v1233
    %v1236 = vxor.u32 %v1235, 2147483648
    %v1237 = vmul.f32 %v1236, 1.442695
    %v1238 = vpow.pop %v1237
    %v1239 = vadd.f32 %v1238, 1.0
    %v1240 = vrcp.pop %v1239
    %v1241 = vmul.f32 1.0, %v1240
    %v1243 = vrot.slane %v899, 6
    %v1245 = vmul.f32 %v1082, %v1243
    %1247 = vrot.lane.b32.xlu0 %v1159, 64
    %v1248 = vpop.permute.xlu0 %1247
    %v1250 = vmul.f32 %v1000, %v1248
    %1252 = vrot.lane.b32.xlu0 %v1250, 32
    %v1253 = vpop.permute.xlu0 %1252
    %v1255 = vadd.f32 %v1245, %v1253
    %v1256 = vtanh.pop %v1255
    %1258 = vrot.lane.b32.xlu0 %v1256, 64
    %v1259 = vpop.permute.xlu0 %1258
    %v1261 = vmul.f32 %v1241, %v1259
    %v1262 = vmul.f32 %v1261, %v549
    %1264 = vrot.lane.b32.xlu0 %v1262, 32
    %v1265 = vpop.permute.xlu0 %1264
    %vm1267 = vcmask 259076
    %v1268 = vsel %vm1267, %v1265, 0.0
    %1269 = vadd.xlane.f32.xlu0 %v1268
    %v1270 = vpop.xlane.xlu0 %1269
    %v1272 = vrot.slane %v1261, 4
    %1273 = vrot.lane.b32.xlu0 %v1272, 32
    %v1274 = vpop.permute.xlu0 %1273
    %v1275 = vsel %vm207, %v1274, 0
    %1277 = vmatprep.subr.mxu0 0.0
    %1278 = vmatpush1.msra.mxu0 %v190
    %1279 = vmatprep.subr.mxu0 0.0
    %1280 = vmatpush1.msra.mxu0 %v191
    %1281 = vmatprep.subr.mxu0 0.0
    %1282 = vmatpush1.msra.mxu0 %v192
    %1283 = vmatprep.subr.mxu0 0.0
    %1284 = vmatpush1.msra.mxu0 %v193
    %1285 = vmatprep.subr.mxu0 0.0
    %1286 = vmatpush1.msra.mxu0 0.0
    %1287 = vmatprep.subr.mxu0 0.0
    %1288 = vmatpush1.msra.mxu0 0.0
    %1289 = vmatprep.subr.mxu0 0.0
    %1290 = vmatpush1.msra.mxu0 0.0
    %1291 = vmatprep.subr.mxu0 0.0
    %1292 = vmatpush1.msra.mxu0 0.0
    %1293 = vmatprep.subr.mxu0 0.0
    %1294 = vmatpush1.msra.mxu0 0.0
    %1295 = vmatprep.subr.mxu0 0.0
    %1296 = vmatpush1.msra.mxu0 0.0
    %1297 = vmatprep.subr.mxu0 0.0
    %1298 = vmatpush1.msra.mxu0 0.0
    %1299 = vmatprep.subr.mxu0 0.0
    %1300 = vmatpush1.msra.mxu0 0.0
    %1301 = vmatprep.subr.mxu0 0.0
    %1302 = vmatpush1.msra.mxu0 0.0
    %1303 = vmatprep.subr.mxu0 0.0
    %1304 = vmatpush1.msra.mxu0 0.0
    %1305 = vmatprep.subr.mxu0 0.0
    %1306 = vmatpush1.msra.mxu0 0.0
    %1307 = vmatprep.subr.mxu0 0.0
    %1308 = vmatpush1.msra.mxu0 0.0
    %1309 = vmatprep.subr.mxu0 0.0
    %1310 = vmatpush1.msra.mxu0 0.0
    %1311 = vmatprep.subr.mxu0 0.0
    %1312 = vmatpush1.msra.mxu0 0.0
    %1313 = vmatprep.subr.mxu0 0.0
    %1314 = vmatpush1.msra.mxu0 0.0
    %1315 = vmatprep.subr.mxu0 0.0
    %1316 = vmatpush1.msra.mxu0 0.0
    %1317 = vmatprep.subr.mxu0 0.0
    %1318 = vmatpush1.msra.mxu0 0.0
    %1319 = vmatprep.subr.mxu0 0.0
    %1320 = vmatpush1.msra.mxu0 0.0
    %1321 = vmatprep.subr.mxu0 0.0
    %1322 = vmatpush1.msra.mxu0 0.0
    %1323 = vmatprep.subr.mxu0 0.0
    %1324 = vmatpush1.msra.mxu0 0.0
    %1325 = vmatprep.subr.mxu0 0.0
    %1326 = vmatpush1.msra.mxu0 0.0
    %1327 = vmatprep.subr.mxu0 0.0
    %1328 = vmatpush1.msra.mxu0 0.0
    %1329 = vmatprep.subr.mxu0 0.0
    %1330 = vmatpush1.msra.mxu0 0.0
    %1331 = vmatprep.subr.mxu0 0.0
    %1332 = vmatpush1.msra.mxu0 0.0
    %1333 = vmatprep.subr.mxu0 0.0
    %1334 = vmatpush1.msra.mxu0 0.0
    %1335 = vmatprep.subr.mxu0 0.0
    %1336 = vmatpush1.msra.mxu0 0.0
    %1337 = vmatprep.subr.mxu0 0.0
    %1338 = vmatpush1.msra.mxu0 0.0
    %1339 = vmatprep.subr.mxu0 0.0
    %1340 = vmatpush1.msra.mxu0 0.0
    %1341 = vmatprep.mubr.f32.mxu0 0.0
    %1342 = vmatmul.mubr.f32.gmra.mrb[0].mxu0 %v1275
    %v1343 = vpop.f32.mrb[0].mxu0
    %v1344 = vadd.f32 0.0, %v1343
    %v1345 = vpop.f32.mrb[0].mxu0
    %1346 = vdwg.mxu0
    %v1348 = vrot.slane %v1344, 2
    %v1350 = vadd.f32 %v182, %v1348
    %v1351 = vxor.u32 %v1350, 2147483648
    %v1352 = vmul.f32 %v1351, 1.442695
    %v1353 = vpow.pop %v1352
    %v1354 = vadd.f32 %v1353, 1.0
    %v1355 = vrcp.pop %v1354
    %v1356 = vmul.f32 1.0, %v1355
    %1357 = vmatprep.subr.mxu0 0.0
    %1358 = vmatpush1.msra.mxu0 %v194
    %1359 = vmatprep.subr.mxu0 0.0
    %1360 = vmatpush1.msra.mxu0 %v195
    %1361 = vmatprep.subr.mxu0 0.0
    %1362 = vmatpush1.msra.mxu0 %v196
    %1363 = vmatprep.subr.mxu0 0.0
    %1364 = vmatpush1.msra.mxu0 %v197
    %1365 = vmatprep.subr.mxu0 0.0
    %1366 = vmatpush1.msra.mxu0 0.0
    %1367 = vmatprep.subr.mxu0 0.0
    %1368 = vmatpush1.msra.mxu0 0.0
    %1369 = vmatprep.subr.mxu0 0.0
    %1370 = vmatpush1.msra.mxu0 0.0
    %1371 = vmatprep.subr.mxu0 0.0
    %1372 = vmatpush1.msra.mxu0 0.0
    %1373 = vmatprep.subr.mxu0 0.0
    %1374 = vmatpush1.msra.mxu0 0.0
    %1375 = vmatprep.subr.mxu0 0.0
    %1376 = vmatpush1.msra.mxu0 0.0
    %1377 = vmatprep.subr.mxu0 0.0
    %1378 = vmatpush1.msra.mxu0 0.0
    %1379 = vmatprep.subr.mxu0 0.0
    %1380 = vmatpush1.msra.mxu0 0.0
    %1381 = vmatprep.subr.mxu0 0.0
    %1382 = vmatpush1.msra.mxu0 0.0
    %1383 = vmatprep.subr.mxu0 0.0
    %1384 = vmatpush1.msra.mxu0 0.0
    %1385 = vmatprep.subr.mxu0 0.0
    %1386 = vmatpush1.msra.mxu0 0.0
    %1387 = vmatprep.subr.mxu0 0.0
    %1388 = vmatpush1.msra.mxu0 0.0
    %1389 = vmatprep.subr.mxu0 0.0
    %1390 = vmatpush1.msra.mxu0 0.0
    %1391 = vmatprep.subr.mxu0 0.0
    %1392 = vmatpush1.msra.mxu0 0.0
    %1393 = vmatprep.subr.mxu0 0.0
    %1394 = vmatpush1.msra.mxu0 0.0
    %1395 = vmatprep.subr.mxu0 0.0
    %1396 = vmatpush1.msra.mxu0 0.0
    %1397 = vmatprep.subr.mxu0 0.0
    %1398 = vmatpush1.msra.mxu0 0.0
    %1399 = vmatprep.subr.mxu0 0.0
    %1400 = vmatpush1.msra.mxu0 0.0
    %1401 = vmatprep.subr.mxu0 0.0
    %1402 = vmatpush1.msra.mxu0 0.0
    %1403 = vmatprep.subr.mxu0 0.0
    %1404 = vmatpush1.msra.mxu0 0.0
    %1405 = vmatprep.subr.mxu0 0.0
    %1406 = vmatpush1.msra.mxu0 0.0
    %1407 = vmatprep.subr.mxu0 0.0
    %1408 = vmatpush1.msra.mxu0 0.0
    %1409 = vmatprep.subr.mxu0 0.0
    %1410 = vmatpush1.msra.mxu0 0.0
    %1411 = vmatprep.subr.mxu0 0.0
    %1412 = vmatpush1.msra.mxu0 0.0
    %1413 = vmatprep.subr.mxu0 0.0
    %1414 = vmatpush1.msra.mxu0 0.0
    %1415 = vmatprep.subr.mxu0 0.0
    %1416 = vmatpush1.msra.mxu0 0.0
    %1417 = vmatprep.subr.mxu0 0.0
    %1418 = vmatpush1.msra.mxu0 0.0
    %1419 = vmatprep.subr.mxu0 0.0
    %1420 = vmatpush1.msra.mxu0 0.0
    %1421 = vmatprep.mubr.f32.mxu0 0.0
    %1422 = vmatmul.mubr.f32.gmra.mrb[0].mxu0 %v1275
    %v1423 = vpop.f32.mrb[0].mxu0
    %v1424 = vadd.f32 0.0, %v1423
    %v1425 = vpop.f32.mrb[0].mxu0
    %1426 = vdwg.mxu0
    %v1428 = vrot.slane %v1424, 2
    %1429 = vrot.lane.b32.xlu0 %v1428, 32
    %v1430 = vpop.permute.xlu0 %1429
    %v1432 = vadd.f32 %v182, %v1430
    %v1433 = vxor.u32 %v1432, 2147483648
    %v1434 = vmul.f32 %v1433, 1.442695
    %v1435 = vpow.pop %v1434
    %v1436 = vadd.f32 %v1435, 1.0
    %v1437 = vrcp.pop %v1436
    %v1438 = vmul.f32 1.0, %v1437
    %1439 = vmatprep.subr.mxu0 0.0
    %1440 = vmatpush1.msra.mxu0 %v198
    %1441 = vmatprep.subr.mxu0 0.0
    %1442 = vmatpush1.msra.mxu0 %v199
    %1443 = vmatprep.subr.mxu0 0.0
    %1444 = vmatpush1.msra.mxu0 %v200
    %1445 = vmatprep.subr.mxu0 0.0
    %1446 = vmatpush1.msra.mxu0 %v201
    %1447 = vmatprep.subr.mxu0 0.0
    %1448 = vmatpush1.msra.mxu0 0.0
    %1449 = vmatprep.subr.mxu0 0.0
    %1450 = vmatpush1.msra.mxu0 0.0
    %1451 = vmatprep.subr.mxu0 0.0
    %1452 = vmatpush1.msra.mxu0 0.0
    %1453 = vmatprep.subr.mxu0 0.0
    %1454 = vmatpush1.msra.mxu0 0.0
    %1455 = vmatprep.subr.mxu0 0.0
    %1456 = vmatpush1.msra.mxu0 0.0
    %1457 = vmatprep.subr.mxu0 0.0
    %1458 = vmatpush1.msra.mxu0 0.0
    %1459 = vmatprep.subr.mxu0 0.0
    %1460 = vmatpush1.msra.mxu0 0.0
    %1461 = vmatprep.subr.mxu0 0.0
    %1462 = vmatpush1.msra.mxu0 0.0
    %1463 = vmatprep.subr.mxu0 0.0
    %1464 = vmatpush1.msra.mxu0 0.0
    %1465 = vmatprep.subr.mxu0 0.0
    %1466 = vmatpush1.msra.mxu0 0.0
    %1467 = vmatprep.subr.mxu0 0.0
    %1468 = vmatpush1.msra.mxu0 0.0
    %1469 = vmatprep.subr.mxu0 0.0
    %1470 = vmatpush1.msra.mxu0 0.0
    %1471 = vmatprep.subr.mxu0 0.0
    %1472 = vmatpush1.msra.mxu0 0.0
    %1473 = vmatprep.subr.mxu0 0.0
    %1474 = vmatpush1.msra.mxu0 0.0
    %1475 = vmatprep.subr.mxu0 0.0
    %1476 = vmatpush1.msra.mxu0 0.0
    %1477 = vmatprep.subr.mxu0 0.0
    %1478 = vmatpush1.msra.mxu0 0.0
    %1479 = vmatprep.subr.mxu0 0.0
    %1480 = vmatpush1.msra.mxu0 0.0
    %1481 = vmatprep.subr.mxu0 0.0
    %1482 = vmatpush1.msra.mxu0 0.0
    %1483 = vmatprep.subr.mxu0 0.0
    %1484 = vmatpush1.msra.mxu0 0.0
    %1485 = vmatprep.subr.mxu0 0.0
    %1486 = vmatpush1.msra.mxu0 0.0
    %1487 = vmatprep.subr.mxu0 0.0
    %1488 = vmatpush1.msra.mxu0 0.0
    %1489 = vmatprep.subr.mxu0 0.0
    %1490 = vmatpush1.msra.mxu0 0.0
    %1491 = vmatprep.subr.mxu0 0.0
    %1492 = vmatpush1.msra.mxu0 0.0
    %1493 = vmatprep.subr.mxu0 0.0
    %1494 = vmatpush1.msra.mxu0 0.0
    %1495 = vmatprep.subr.mxu0 0.0
    %1496 = vmatpush1.msra.mxu0 0.0
    %1497 = vmatprep.subr.mxu0 0.0
    %1498 = vmatpush1.msra.mxu0 0.0
    %1499 = vmatprep.subr.mxu0 0.0
    %1500 = vmatpush1.msra.mxu0 0.0
    %1501 = vmatprep.subr.mxu0 0.0
    %1502 = vmatpush1.msra.mxu0 0.0
    %1503 = vmatprep.mubr.f32.mxu0 0.0
    %1504 = vmatmul.mubr.f32.gmra.mrb[0].mxu0 %v1275
    %v1505 = vpop.f32.mrb[0].mxu0
    %v1506 = vadd.f32 0.0, %v1505
    %v1507 = vpop.f32.mrb[0].mxu0
    %1508 = vdwg.mxu0
    %v1510 = vrot.slane %v1506, 2
    %1511 = vrot.lane.b32.xlu0 %v1510, 64
    %v1512 = vpop.permute.xlu0 %1511
    %v1514 = vadd.f32 %v182, %v1512
    %v1515 = vtanh.pop %v1514
    %1516 = vmatprep.subr.mxu0 0.0
    %1517 = vmatpush1.msra.mxu0 %v202
    %1518 = vmatprep.subr.mxu0 0.0
    %1519 = vmatpush1.msra.mxu0 %v203
    %1520 = vmatprep.subr.mxu0 0.0
    %1521 = vmatpush1.msra.mxu0 %v204
    %1522 = vmatprep.subr.mxu0 0.0
    %1523 = vmatpush1.msra.mxu0 %v205
    %1524 = vmatprep.subr.mxu0 0.0
    %1525 = vmatpush1.msra.mxu0 0.0
    %1526 = vmatprep.subr.mxu0 0.0
    %1527 = vmatpush1.msra.mxu0 0.0
    %1528 = vmatprep.subr.mxu0 0.0
    %1529 = vmatpush1.msra.mxu0 0.0
    %1530 = vmatprep.subr.mxu0 0.0
    %1531 = vmatpush1.msra.mxu0 0.0
    %1532 = vmatprep.subr.mxu0 0.0
    %1533 = vmatpush1.msra.mxu0 0.0
    %1534 = vmatprep.subr.mxu0 0.0
    %1535 = vmatpush1.msra.mxu0 0.0
    %1536 = vmatprep.subr.mxu0 0.0
    %1537 = vmatpush1.msra.mxu0 0.0
    %1538 = vmatprep.subr.mxu0 0.0
    %1539 = vmatpush1.msra.mxu0 0.0
    %1540 = vmatprep.subr.mxu0 0.0
    %1541 = vmatpush1.msra.mxu0 0.0
    %1542 = vmatprep.subr.mxu0 0.0
    %1543 = vmatpush1.msra.mxu0 0.0
    %1544 = vmatprep.subr.mxu0 0.0
    %1545 = vmatpush1.msra.mxu0 0.0
    %1546 = vmatprep.subr.mxu0 0.0
    %1547 = vmatpush1.msra.mxu0 0.0
    %1548 = vmatprep.subr.mxu0 0.0
    %1549 = vmatpush1.msra.mxu0 0.0
    %1550 = vmatprep.subr.mxu0 0.0
    %1551 = vmatpush1.msra.mxu0 0.0
    %1552 = vmatprep.subr.mxu0 0.0
    %1553 = vmatpush1.msra.mxu0 0.0
    %1554 = vmatprep.subr.mxu0 0.0
    %1555 = vmatpush1.msra.mxu0 0.0
    %1556 = vmatprep.subr.mxu0 0.0
    %1557 = vmatpush1.msra.mxu0 0.0
    %1558 = vmatprep.subr.mxu0 0.0
    %1559 = vmatpush1.msra.mxu0 0.0
    %1560 = vmatprep.subr.mxu0 0.0
    %1561 = vmatpush1.msra.mxu0 0.0
    %1562 = vmatprep.subr.mxu0 0.0
    %1563 = vmatpush1.msra.mxu0 0.0
    %1564 = vmatprep.subr.mxu0 0.0
    %1565 = vmatpush1.msra.mxu0 0.0
    %1566 = vmatprep.subr.mxu0 0.0
    %1567 = vmatpush1.msra.mxu0 0.0
    %1568 = vmatprep.subr.mxu0 0.0
    %1569 = vmatpush1.msra.mxu0 0.0
    %1570 = vmatprep.subr.mxu0 0.0
    %1571 = vmatpush1.msra.mxu0 0.0
    %1572 = vmatprep.subr.mxu0 0.0
    %1573 = vmatpush1.msra.mxu0 0.0
    %1574 = vmatprep.subr.mxu0 0.0
    %1575 = vmatpush1.msra.mxu0 0.0
    %1576 = vmatprep.subr.mxu0 0.0
    %1577 = vmatpush1.msra.mxu0 0.0
    %1578 = vmatprep.subr.mxu0 0.0
    %1579 = vmatpush1.msra.mxu0 0.0
    %1580 = vmatprep.mubr.f32.mxu0 0.0
    %1581 = vmatmul.mubr.f32.gmra.mrb[0].mxu0 %v1275
    %v1582 = vpop.f32.mrb[0].mxu0
    %v1583 = vadd.f32 0.0, %v1582
    %v1584 = vpop.f32.mrb[0].mxu0
    %1585 = vdwg.mxu0
    %v1587 = vrot.slane %v1583, 2
    %1588 = vrot.lane.b32.xlu0 %v1587, 96
    %v1589 = vpop.permute.xlu0 %1588
    %v1591 = vadd.f32 %v182, %v1589
    %v1592 = vxor.u32 %v1591, 2147483648
    %v1593 = vmul.f32 %v1592, 1.442695
    %v1594 = vpow.pop %v1593
    %v1595 = vadd.f32 %v1594, 1.0
    %v1596 = vrcp.pop %v1595
    %v1597 = vmul.f32 1.0, %v1596
    %v1599 = vrot.slane %v1255, 6
    %v1601 = vmul.f32 %v1438, %v1599
    %1603 = vrot.lane.b32.xlu0 %v1515, 64
    %v1604 = vpop.permute.xlu0 %1603
    %v1606 = vmul.f32 %v1356, %v1604
    %1608 = vrot.lane.b32.xlu0 %v1606, 32
    %v1609 = vpop.permute.xlu0 %1608
    %v1611 = vadd.f32 %v1601, %v1609
    %v1612 = vtanh.pop %v1611
    %1614 = vrot.lane.b32.xlu0 %v1612, 64
    %v1615 = vpop.permute.xlu0 %1614
    %v1617 = vmul.f32 %v1597, %v1615
    %v1618 = vmul.f32 %v1617, %v549
    %1620 = vrot.lane.b32.xlu0 %v1618, 32
    %v1621 = vpop.permute.xlu0 %1620
    %vm1623 = vcmask 261126
    %v1624 = vsel %vm1623, %v1621, 0.0
    %1625 = vadd.xlane.f32.xlu0 %v1624
    %v1626 = vpop.xlane.xlu0 %1625
    %v1628 = vrot.slane %v1617, 6
    %1629 = vrot.lane.b32.xlu0 %v1628, 32
    %v1630 = vpop.permute.xlu0 %1629
    %v1631 = vsel %vm207, %v1630, 0
    %1633 = vmatprep.subr.mxu0 0.0
    %1634 = vmatpush1.msra.mxu0 %v190
    %1635 = vmatprep.subr.mxu0 0.0
    %1636 = vmatpush1.msra.mxu0 %v191
    %1637 = vmatprep.subr.mxu0 0.0
    %1638 = vmatpush1.msra.mxu0 %v192
    %1639 = vmatprep.subr.mxu0 0.0
    %1640 = vmatpush1.msra.mxu0 %v193
    %1641 = vmatprep.subr.mxu0 0.0
    %1642 = vmatpush1.msra.mxu0 0.0
    %1643 = vmatprep.subr.mxu0 0.0
    %1644 = vmatpush1.msra.mxu0 0.0
    %1645 = vmatprep.subr.mxu0 0.0
    %1646 = vmatpush1.msra.mxu0 0.0
    %1647 = vmatprep.subr.mxu0 0.0
    %1648 = vmatpush1.msra.mxu0 0.0
    %1649 = vmatprep.subr.mxu0 0.0
    %1650 = vmatpush1.msra.mxu0 0.0
    %1651 = vmatprep.subr.mxu0 0.0
    %1652 = vmatpush1.msra.mxu0 0.0
    %1653 = vmatprep.subr.mxu0 0.0
    %1654 = vmatpush1.msra.mxu0 0.0
    %1655 = vmatprep.subr.mxu0 0.0
    %1656 = vmatpush1.msra.mxu0 0.0
    %1657 = vmatprep.subr.mxu0 0.0
    %1658 = vmatpush1.msra.mxu0 0.0
    %1659 = vmatprep.subr.mxu0 0.0
    %1660 = vmatpush1.msra.mxu0 0.0
    %1661 = vmatprep.subr.mxu0 0.0
    %1662 = vmatpush1.msra.mxu0 0.0
    %1663 = vmatprep.subr.mxu0 0.0
    %1664 = vmatpush1.msra.mxu0 0.0
    %1665 = vmatprep.subr.mxu0 0.0
    %1666 = vmatpush1.msra.mxu0 0.0
    %1667 = vmatprep.subr.mxu0 0.0
    %1668 = vmatpush1.msra.mxu0 0.0
    %1669 = vmatprep.subr.mxu0 0.0
    %1670 = vmatpush1.msra.mxu0 0.0
    %1671 = vmatprep.subr.mxu0 0.0
    %1672 = vmatpush1.msra.mxu0 0.0
    %1673 = vmatprep.subr.mxu0 0.0
    %1674 = vmatpush1.msra.mxu0 0.0
    %1675 = vmatprep.subr.mxu0 0.0
    %1676 = vmatpush1.msra.mxu0 0.0
    %1677 = vmatprep.subr.mxu0 0.0
    %1678 = vmatpush1.msra.mxu0 0.0
    %1679 = vmatprep.subr.mxu0 0.0
    %1680 = vmatpush1.msra.mxu0 0.0
    %1681 = vmatprep.subr.mxu0 0.0
    %1682 = vmatpush1.msra.mxu0 0.0
    %1683 = vmatprep.subr.mxu0 0.0
    %1684 = vmatpush1.msra.mxu0 0.0
    %1685 = vmatprep.subr.mxu0 0.0
    %1686 = vmatpush1.msra.mxu0 0.0
    %1687 = vmatprep.subr.mxu0 0.0
    %1688 = vmatpush1.msra.mxu0 0.0
    %1689 = vmatprep.subr.mxu0 0.0
    %1690 = vmatpush1.msra.mxu0 0.0
    %1691 = vmatprep.subr.mxu0 0.0
    %1692 = vmatpush1.msra.mxu0 0.0
    %1693 = vmatprep.subr.mxu0 0.0
    %1694 = vmatpush1.msra.mxu0 0.0
    %1695 = vmatprep.subr.mxu0 0.0
    %1696 = vmatpush1.msra.mxu0 0.0
    %1697 = vmatprep.mubr.f32.mxu0 0.0
    %1698 = vmatmul.mubr.f32.gmra.mrb[0].mxu0 %v1631
    %v1699 = vpop.f32.mrb[0].mxu0
    %v1700 = vadd.f32 0.0, %v1699
    %v1701 = vpop.f32.mrb[0].mxu0
    %1702 = vdwg.mxu0
    %v1703 = vadd.f32 %v187, %v1700
    %v1704 = vxor.u32 %v1703, 2147483648
    %v1705 = vmul.f32 %v1704, 1.442695
    %v1706 = vpow.pop %v1705
    %v1707 = vadd.f32 %v1706, 1.0
    %v1708 = vrcp.pop %v1707
    %v1709 = vmul.f32 1.0, %v1708
    %1710 = vmatprep.subr.mxu0 0.0
    %1711 = vmatpush1.msra.mxu0 %v194
    %1712 = vmatprep.subr.mxu0 0.0
    %1713 = vmatpush1.msra.mxu0 %v195
    %1714 = vmatprep.subr.mxu0 0.0
    %1715 = vmatpush1.msra.mxu0 %v196
    %1716 = vmatprep.subr.mxu0 0.0
    %1717 = vmatpush1.msra.mxu0 %v197
    %1718 = vmatprep.subr.mxu0 0.0
    %1719 = vmatpush1.msra.mxu0 0.0
    %1720 = vmatprep.subr.mxu0 0.0
    %1721 = vmatpush1.msra.mxu0 0.0
    %1722 = vmatprep.subr.mxu0 0.0
    %1723 = vmatpush1.msra.mxu0 0.0
    %1724 = vmatprep.subr.mxu0 0.0
    %1725 = vmatpush1.msra.mxu0 0.0
    %1726 = vmatprep.subr.mxu0 0.0
    %1727 = vmatpush1.msra.mxu0 0.0
    %1728 = vmatprep.subr.mxu0 0.0
    %1729 = vmatpush1.msra.mxu0 0.0
    %1730 = vmatprep.subr.mxu0 0.0
    %1731 = vmatpush1.msra.mxu0 0.0
    %1732 = vmatprep.subr.mxu0 0.0
    %1733 = vmatpush1.msra.mxu0 0.0
    %1734 = vmatprep.subr.mxu0 0.0
    %1735 = vmatpush1.msra.mxu0 0.0
    %1736 = vmatprep.subr.mxu0 0.0
    %1737 = vmatpush1.msra.mxu0 0.0
    %1738 = vmatprep.subr.mxu0 0.0
    %1739 = vmatpush1.msra.mxu0 0.0
    %1740 = vmatprep.subr.mxu0 0.0
    %1741 = vmatpush1.msra.mxu0 0.0
    %1742 = vmatprep.subr.mxu0 0.0
    %1743 = vmatpush1.msra.mxu0 0.0
    %1744 = vmatprep.subr.mxu0 0.0
    %1745 = vmatpush1.msra.mxu0 0.0
    %1746 = vmatprep.subr.mxu0 0.0
    %1747 = vmatpush1.msra.mxu0 0.0
    %1748 = vmatprep.subr.mxu0 0.0
    %1749 = vmatpush1.msra.mxu0 0.0
    %1750 = vmatprep.subr.mxu0 0.0
    %1751 = vmatpush1.msra.mxu0 0.0
    %1752 = vmatprep.subr.mxu0 0.0
    %1753 = vmatpush1.msra.mxu0 0.0
    %1754 = vmatprep.subr.mxu0 0.0
    %1755 = vmatpush1.msra.mxu0 0.0
    %1756 = vmatprep.subr.mxu0 0.0
    %1757 = vmatpush1.msra.mxu0 0.0
    %1758 = vmatprep.subr.mxu0 0.0
    %1759 = vmatpush1.msra.mxu0 0.0
    %1760 = vmatprep.subr.mxu0 0.0
    %1761 = vmatpush1.msra.mxu0 0.0
    %1762 = vmatprep.subr.mxu0 0.0
    %1763 = vmatpush1.msra.mxu0 0.0
    %1764 = vmatprep.subr.mxu0 0.0
    %1765 = vmatpush1.msra.mxu0 0.0
    %1766 = vmatprep.subr.mxu0 0.0
    %1767 = vmatpush1.msra.mxu0 0.0
    %1768 = vmatprep.subr.mxu0 0.0
    %1769 = vmatpush1.msra.mxu0 0.0
    %1770 = vmatprep.subr.mxu0 0.0
    %1771 = vmatpush1.msra.mxu0 0.0
    %1772 = vmatprep.subr.mxu0 0.0
    %1773 = vmatpush1.msra.mxu0 0.0
    %1774 = vmatprep.mubr.f32.mxu0 0.0
    %1775 = vmatmul.mubr.f32.gmra.mrb[0].mxu0 %v1631
    %v1776 = vpop.f32.mrb[0].mxu0
    %v1777 = vadd.f32 0.0, %v1776
    %v1778 = vpop.f32.mrb[0].mxu0
    %1779 = vdwg.mxu0
    %1781 = vrot.lane.b32.xlu0 %v1777, 32
    %v1782 = vpop.permute.xlu0 %1781
    %v1784 = vadd.f32 %v187, %v1782
    %v1785 = vxor.u32 %v1784, 2147483648
    %v1786 = vmul.f32 %v1785, 1.442695
    %v1787 = vpow.pop %v1786
    %v1788 = vadd.f32 %v1787, 1.0
    %v1789 = vrcp.pop %v1788
    %v1790 = vmul.f32 1.0, %v1789
    %1791 = vmatprep.subr.mxu0 0.0
    %1792 = vmatpush1.msra.mxu0 %v198
    %1793 = vmatprep.subr.mxu0 0.0
    %1794 = vmatpush1.msra.mxu0 %v199
    %1795 = vmatprep.subr.mxu0 0.0
    %1796 = vmatpush1.msra.mxu0 %v200
    %1797 = vmatprep.subr.mxu0 0.0
    %1798 = vmatpush1.msra.mxu0 %v201
    %1799 = vmatprep.subr.mxu0 0.0
    %1800 = vmatpush1.msra.mxu0 0.0
    %1801 = vmatprep.subr.mxu0 0.0
    %1802 = vmatpush1.msra.mxu0 0.0
    %1803 = vmatprep.subr.mxu0 0.0
    %1804 = vmatpush1.msra.mxu0 0.0
    %1805 = vmatprep.subr.mxu0 0.0
    %1806 = vmatpush1.msra.mxu0 0.0
    %1807 = vmatprep.subr.mxu0 0.0
    %1808 = vmatpush1.msra.mxu0 0.0
    %1809 = vmatprep.subr.mxu0 0.0
    %1810 = vmatpush1.msra.mxu0 0.0
    %1811 = vmatprep.subr.mxu0 0.0
    %1812 = vmatpush1.msra.mxu0 0.0
    %1813 = vmatprep.subr.mxu0 0.0
    %1814 = vmatpush1.msra.mxu0 0.0
    %1815 = vmatprep.subr.mxu0 0.0
    %1816 = vmatpush1.msra.mxu0 0.0
    %1817 = vmatprep.subr.mxu0 0.0
    %1818 = vmatpush1.msra.mxu0 0.0
    %1819 = vmatprep.subr.mxu0 0.0
    %1820 = vmatpush1.msra.mxu0 0.0
    %1821 = vmatprep.subr.mxu0 0.0
    %1822 = vmatpush1.msra.mxu0 0.0
    %1823 = vmatprep.subr.mxu0 0.0
    %1824 = vmatpush1.msra.mxu0 0.0
    %1825 = vmatprep.subr.mxu0 0.0
    %1826 = vmatpush1.msra.mxu0 0.0
    %1827 = vmatprep.subr.mxu0 0.0
    %1828 = vmatpush1.msra.mxu0 0.0
    %1829 = vmatprep.subr.mxu0 0.0
    %1830 = vmatpush1.msra.mxu0 0.0
    %1831 = vmatprep.subr.mxu0 0.0
    %1832 = vmatpush1.msra.mxu0 0.0
    %1833 = vmatprep.subr.mxu0 0.0
    %1834 = vmatpush1.msra.mxu0 0.0
    %1835 = vmatprep.subr.mxu0 0.0
    %1836 = vmatpush1.msra.mxu0 0.0
    %1837 = vmatprep.subr.mxu0 0.0
    %1838 = vmatpush1.msra.mxu0 0.0
    %1839 = vmatprep.subr.mxu0 0.0
    %1840 = vmatpush1.msra.mxu0 0.0
    %1841 = vmatprep.subr.mxu0 0.0
    %1842 = vmatpush1.msra.mxu0 0.0
    %1843 = vmatprep.subr.mxu0 0.0
    %1844 = vmatpush1.msra.mxu0 0.0
    %1845 = vmatprep.subr.mxu0 0.0
    %1846 = vmatpush1.msra.mxu0 0.0
    %1847 = vmatprep.subr.mxu0 0.0
    %1848 = vmatpush1.msra.mxu0 0.0
    %1849 = vmatprep.subr.mxu0 0.0
    %1850 = vmatpush1.msra.mxu0 0.0
    %1851 = vmatprep.subr.mxu0 0.0
    %1852 = vmatpush1.msra.mxu0 0.0
    %1853 = vmatprep.subr.mxu0 0.0
    %1854 = vmatpush1.msra.mxu0 0.0
    %1855 = vmatprep.mubr.f32.mxu0 0.0
    %1856 = vmatmul.mubr.f32.gmra.mrb[0].mxu0 %v1631
    %v1857 = vpop.f32.mrb[0].mxu0
    %v1858 = vadd.f32 0.0, %v1857
    %v1859 = vpop.f32.mrb[0].mxu0
    %1860 = vdwg.mxu0
    %1862 = vrot.lane.b32.xlu0 %v1858, 64
    %v1863 = vpop.permute.xlu0 %1862
    %v1865 = vadd.f32 %v187, %v1863
    %v1866 = vtanh.pop %v1865
    %1867 = vmatprep.subr.mxu0 0.0
    %1868 = vmatpush1.msra.mxu0 %v202
    %1869 = vmatprep.subr.mxu0 0.0
    %1870 = vmatpush1.msra.mxu0 %v203
    %1871 = vmatprep.subr.mxu0 0.0
    %1872 = vmatpush1.msra.mxu0 %v204
    %1873 = vmatprep.subr.mxu0 0.0
    %1874 = vmatpush1.msra.mxu0 %v205
    %1875 = vmatprep.subr.mxu0 0.0
    %1876 = vmatpush1.msra.mxu0 0.0
    %1877 = vmatprep.subr.mxu0 0.0
    %1878 = vmatpush1.msra.mxu0 0.0
    %1879 = vmatprep.subr.mxu0 0.0
    %1880 = vmatpush1.msra.mxu0 0.0
    %1881 = vmatprep.subr.mxu0 0.0
    %1882 = vmatpush1.msra.mxu0 0.0
    %1883 = vmatprep.subr.mxu0 0.0
    %1884 = vmatpush1.msra.mxu0 0.0
    %1885 = vmatprep.subr.mxu0 0.0
    %1886 = vmatpush1.msra.mxu0 0.0
    %1887 = vmatprep.subr.mxu0 0.0
    %1888 = vmatpush1.msra.mxu0 0.0
    %1889 = vmatprep.subr.mxu0 0.0
    %1890 = vmatpush1.msra.mxu0 0.0
    %1891 = vmatprep.subr.mxu0 0.0
    %1892 = vmatpush1.msra.mxu0 0.0
    %1893 = vmatprep.subr.mxu0 0.0
    %1894 = vmatpush1.msra.mxu0 0.0
    %1895 = vmatprep.subr.mxu0 0.0
    %1896 = vmatpush1.msra.mxu0 0.0
    %1897 = vmatprep.subr.mxu0 0.0
    %1898 = vmatpush1.msra.mxu0 0.0
    %1899 = vmatprep.subr.mxu0 0.0
    %1900 = vmatpush1.msra.mxu0 0.0
    %1901 = vmatprep.subr.mxu0 0.0
    %1902 = vmatpush1.msra.mxu0 0.0
    %1903 = vmatprep.subr.mxu0 0.0
    %1904 = vmatpush1.msra.mxu0 0.0
    %1905 = vmatprep.subr.mxu0 0.0
    %1906 = vmatpush1.msra.mxu0 0.0
    %1907 = vmatprep.subr.mxu0 0.0
    %1908 = vmatpush1.msra.mxu0 0.0
    %1909 = vmatprep.subr.mxu0 0.0
    %1910 = vmatpush1.msra.mxu0 0.0
    %1911 = vmatprep.subr.mxu0 0.0
    %1912 = vmatpush1.msra.mxu0 0.0
    %1913 = vmatprep.subr.mxu0 0.0
    %1914 = vmatpush1.msra.mxu0 0.0
    %1915 = vmatprep.subr.mxu0 0.0
    %1916 = vmatpush1.msra.mxu0 0.0
    %1917 = vmatprep.subr.mxu0 0.0
    %1918 = vmatpush1.msra.mxu0 0.0
    %1919 = vmatprep.subr.mxu0 0.0
    %1920 = vmatpush1.msra.mxu0 0.0
    %1921 = vmatprep.subr.mxu0 0.0
    %1922 = vmatpush1.msra.mxu0 0.0
    %1923 = vmatprep.subr.mxu0 0.0
    %1924 = vmatpush1.msra.mxu0 0.0
    %1925 = vmatprep.subr.mxu0 0.0
    %1926 = vmatpush1.msra.mxu0 0.0
    %1927 = vmatprep.subr.mxu0 0.0
    %1928 = vmatpush1.msra.mxu0 0.0
    %1929 = vmatprep.subr.mxu0 0.0
    %1930 = vmatpush1.msra.mxu0 0.0
    %1931 = vmatprep.mubr.f32.mxu0 0.0
    %1932 = vmatmul.mubr.f32.gmra.mrb[0].mxu0 %v1631
    %v1933 = vpop.f32.mrb[0].mxu0
    %v1934 = vadd.f32 0.0, %v1933
    %v1935 = vpop.f32.mrb[0].mxu0
    %1936 = vdwg.mxu0
    %1938 = vrot.lane.b32.xlu0 %v1934, 96
    %v1939 = vpop.permute.xlu0 %1938
    %v1941 = vadd.f32 %v187, %v1939
    %v1942 = vxor.u32 %v1941, 2147483648
    %v1943 = vmul.f32 %v1942, 1.442695
    %v1944 = vpow.pop %v1943
    %v1945 = vadd.f32 %v1944, 1.0
    %v1946 = vrcp.pop %v1945
    %v1947 = vmul.f32 1.0, %v1946
    %v1949 = vrot.slane %v1611, 6
    %v1951 = vmul.f32 %v1790, %v1949
    %1953 = vrot.lane.b32.xlu0 %v1866, 64
    %v1954 = vpop.permute.xlu0 %1953
    %v1956 = vmul.f32 %v1709, %v1954
    %1958 = vrot.lane.b32.xlu0 %v1956, 32
    %v1959 = vpop.permute.xlu0 %1958
    %v1961 = vadd.f32 %v1951, %v1959
    %v1962 = vtanh.pop %v1961
    %1964 = vrot.lane.b32.xlu0 %v1962, 64
    %v1965 = vpop.permute.xlu0 %1964
    %v1967 = vmul.f32 %v1947, %v1965
    %v1968 = vmul.f32 %v1967, %v549
    %1970 = vrot.lane.b32.xlu0 %v1968, 32
    %v1971 = vpop.permute.xlu0 %1970
    %v1973 = vsel %vm556, %v1971, 0.0
    %1974 = vadd.xlane.f32.xlu0 %v1973
    %v1975 = vpop.xlane.xlu0 %1974
    %1977 = vrot.lane.b32.xlu0 %v1967, 32
    %v1978 = vpop.permute.xlu0 %1977
    %v1979 = vsel %vm207, %v1978, 0
    %1981 = vmatprep.subr.mxu0 0.0
    %1982 = vmatpush1.msra.mxu0 %v190
    %1983 = vmatprep.subr.mxu0 0.0
    %1984 = vmatpush1.msra.mxu0 %v191
    %1985 = vmatprep.subr.mxu0 0.0
    %1986 = vmatpush1.msra.mxu0 %v192
    %1987 = vmatprep.subr.mxu0 0.0
    %1988 = vmatpush1.msra.mxu0 %v193
    %1989 = vmatprep.subr.mxu0 0.0
    %1990 = vmatpush1.msra.mxu0 0.0
    %1991 = vmatprep.subr.mxu0 0.0
    %1992 = vmatpush1.msra.mxu0 0.0
    %1993 = vmatprep.subr.mxu0 0.0
    %1994 = vmatpush1.msra.mxu0 0.0
    %1995 = vmatprep.subr.mxu0 0.0
    %1996 = vmatpush1.msra.mxu0 0.0
    %1997 = vmatprep.subr.mxu0 0.0
    %1998 = vmatpush1.msra.mxu0 0.0
    %1999 = vmatprep.subr.mxu0 0.0
    %2000 = vmatpush1.msra.mxu0 0.0
    %2001 = vmatprep.subr.mxu0 0.0
    %2002 = vmatpush1.msra.mxu0 0.0
    %2003 = vmatprep.subr.mxu0 0.0
    %2004 = vmatpush1.msra.mxu0 0.0
    %2005 = vmatprep.subr.mxu0 0.0
    %2006 = vmatpush1.msra.mxu0 0.0
    %2007 = vmatprep.subr.mxu0 0.0
    %2008 = vmatpush1.msra.mxu0 0.0
    %2009 = vmatprep.subr.mxu0 0.0
    %2010 = vmatpush1.msra.mxu0 0.0
    %2011 = vmatprep.subr.mxu0 0.0
    %2012 = vmatpush1.msra.mxu0 0.0
    %2013 = vmatprep.subr.mxu0 0.0
    %2014 = vmatpush1.msra.mxu0 0.0
    %2015 = vmatprep.subr.mxu0 0.0
    %2016 = vmatpush1.msra.mxu0 0.0
    %2017 = vmatprep.subr.mxu0 0.0
    %2018 = vmatpush1.msra.mxu0 0.0
    %2019 = vmatprep.subr.mxu0 0.0
    %2020 = vmatpush1.msra.mxu0 0.0
    %2021 = vmatprep.subr.mxu0 0.0
    %2022 = vmatpush1.msra.mxu0 0.0
    %2023 = vmatprep.subr.mxu0 0.0
    %2024 = vmatpush1.msra.mxu0 0.0
    %2025 = vmatprep.subr.mxu0 0.0
    %2026 = vmatpush1.msra.mxu0 0.0
    %2027 = vmatprep.subr.mxu0 0.0
    %2028 = vmatpush1.msra.mxu0 0.0
    %2029 = vmatprep.subr.mxu0 0.0
    %2030 = vmatpush1.msra.mxu0 0.0
    %2031 = vmatprep.subr.mxu0 0.0
    %2032 = vmatpush1.msra.mxu0 0.0
    %2033 = vmatprep.subr.mxu0 0.0
    %2034 = vmatpush1.msra.mxu0 0.0
    %2035 = vmatprep.subr.mxu0 0.0
    %2036 = vmatpush1.msra.mxu0 0.0
    %2037 = vmatprep.subr.mxu0 0.0
    %2038 = vmatpush1.msra.mxu0 0.0
    %2039 = vmatprep.subr.mxu0 0.0
    %2040 = vmatpush1.msra.mxu0 0.0
    %2041 = vmatprep.subr.mxu0 0.0
    %2042 = vmatpush1.msra.mxu0 0.0
    %2043 = vmatprep.subr.mxu0 0.0
    %2044 = vmatpush1.msra.mxu0 0.0
    %2045 = vmatprep.mubr.f32.mxu0 0.0
    %2046 = vmatmul.mubr.f32.gmra.mrb[0].mxu0 %v1979
    %v2047 = vpop.f32.mrb[0].mxu0
    %v2048 = vadd.f32 0.0, %v2047
    %v2049 = vpop.f32.mrb[0].mxu0
    %2050 = vdwg.mxu0
    %v2052 = vrot.slane %v2048, 6
    %v2054 = vadd.f32 %v187, %v2052
    %v2055 = vxor.u32 %v2054, 2147483648
    %v2056 = vmul.f32 %v2055, 1.442695
    %v2057 = vpow.pop %v2056
    %v2058 = vadd.f32 %v2057, 1.0
    %v2059 = vrcp.pop %v2058
    %v2060 = vmul.f32 1.0, %v2059
    %2061 = vmatprep.subr.mxu0 0.0
    %2062 = vmatpush1.msra.mxu0 %v194
    %2063 = vmatprep.subr.mxu0 0.0
    %2064 = vmatpush1.msra.mxu0 %v195
    %2065 = vmatprep.subr.mxu0 0.0
    %2066 = vmatpush1.msra.mxu0 %v196
    %2067 = vmatprep.subr.mxu0 0.0
    %2068 = vmatpush1.msra.mxu0 %v197
    %2069 = vmatprep.subr.mxu0 0.0
    %2070 = vmatpush1.msra.mxu0 0.0
    %2071 = vmatprep.subr.mxu0 0.0
    %2072 = vmatpush1.msra.mxu0 0.0
    %2073 = vmatprep.subr.mxu0 0.0
    %2074 = vmatpush1.msra.mxu0 0.0
    %2075 = vmatprep.subr.mxu0 0.0
    %2076 = vmatpush1.msra.mxu0 0.0
    %2077 = vmatprep.subr.mxu0 0.0
    %2078 = vmatpush1.msra.mxu0 0.0
    %2079 = vmatprep.subr.mxu0 0.0
    %2080 = vmatpush1.msra.mxu0 0.0
    %2081 = vmatprep.subr.mxu0 0.0
    %2082 = vmatpush1.msra.mxu0 0.0
    %2083 = vmatprep.subr.mxu0 0.0
    %2084 = vmatpush1.msra.mxu0 0.0
    %2085 = vmatprep.subr.mxu0 0.0
    %2086 = vmatpush1.msra.mxu0 0.0
    %2087 = vmatprep.subr.mxu0 0.0
    %2088 = vmatpush1.msra.mxu0 0.0
    %2089 = vmatprep.subr.mxu0 0.0
    %2090 = vmatpush1.msra.mxu0 0.0
    %2091 = vmatprep.subr.mxu0 0.0
    %2092 = vmatpush1.msra.mxu0 0.0
    %2093 = vmatprep.subr.mxu0 0.0
    %2094 = vmatpush1.msra.mxu0 0.0
    %2095 = vmatprep.subr.mxu0 0.0
    %2096 = vmatpush1.msra.mxu0 0.0
    %2097 = vmatprep.subr.mxu0 0.0
    %2098 = vmatpush1.msra.mxu0 0.0
    %2099 = vmatprep.subr.mxu0 0.0
    %2100 = vmatpush1.msra.mxu0 0.0
    %2101 = vmatprep.subr.mxu0 0.0
    %2102 = vmatpush1.msra.mxu0 0.0
    %2103 = vmatprep.subr.mxu0 0.0
    %2104 = vmatpush1.msra.mxu0 0.0
    %2105 = vmatprep.subr.mxu0 0.0
    %2106 = vmatpush1.msra.mxu0 0.0
    %2107 = vmatprep.subr.mxu0 0.0
    %2108 = vmatpush1.msra.mxu0 0.0
    %2109 = vmatprep.subr.mxu0 0.0
    %2110 = vmatpush1.msra.mxu0 0.0
    %2111 = vmatprep.subr.mxu0 0.0
    %2112 = vmatpush1.msra.mxu0 0.0
    %2113 = vmatprep.subr.mxu0 0.0
    %2114 = vmatpush1.msra.mxu0 0.0
    %2115 = vmatprep.subr.mxu0 0.0
    %2116 = vmatpush1.msra.mxu0 0.0
    %2117 = vmatprep.subr.mxu0 0.0
    %2118 = vmatpush1.msra.mxu0 0.0
    %2119 = vmatprep.subr.mxu0 0.0
    %2120 = vmatpush1.msra.mxu0 0.0
    %2121 = vmatprep.subr.mxu0 0.0
    %2122 = vmatpush1.msra.mxu0 0.0
    %2123 = vmatprep.subr.mxu0 0.0
    %2124 = vmatpush1.msra.mxu0 0.0
    %2125 = vmatprep.mubr.f32.mxu0 0.0
    %2126 = vmatmul.mubr.f32.gmra.mrb[0].mxu0 %v1979
    %v2127 = vpop.f32.mrb[0].mxu0
    %v2128 = vadd.f32 0.0, %v2127
    %v2129 = vpop.f32.mrb[0].mxu0
    %2130 = vdwg.mxu0
    %v2132 = vrot.slane %v2128, 6
    %2133 = vrot.lane.b32.xlu0 %v2132, 32
    %v2134 = vpop.permute.xlu0 %2133
    %v2136 = vadd.f32 %v187, %v2134
    %v2137 = vxor.u32 %v2136, 2147483648
    %v2138 = vmul.f32 %v2137, 1.442695
    %v2139 = vpow.pop %v2138
    %v2140 = vadd.f32 %v2139, 1.0
    %v2141 = vrcp.pop %v2140
    %v2142 = vmul.f32 1.0, %v2141
    %2143 = vmatprep.subr.mxu0 0.0
    %2144 = vmatpush1.msra.mxu0 %v198
    %2145 = vmatprep.subr.mxu0 0.0
    %2146 = vmatpush1.msra.mxu0 %v199
    %2147 = vmatprep.subr.mxu0 0.0
    %2148 = vmatpush1.msra.mxu0 %v200
    %2149 = vmatprep.subr.mxu0 0.0
    %2150 = vmatpush1.msra.mxu0 %v201
    %2151 = vmatprep.subr.mxu0 0.0
    %2152 = vmatpush1.msra.mxu0 0.0
    %2153 = vmatprep.subr.mxu0 0.0
    %2154 = vmatpush1.msra.mxu0 0.0
    %2155 = vmatprep.subr.mxu0 0.0
    %2156 = vmatpush1.msra.mxu0 0.0
    %2157 = vmatprep.subr.mxu0 0.0
    %2158 = vmatpush1.msra.mxu0 0.0
    %2159 = vmatprep.subr.mxu0 0.0
    %2160 = vmatpush1.msra.mxu0 0.0
    %2161 = vmatprep.subr.mxu0 0.0
    %2162 = vmatpush1.msra.mxu0 0.0
    %2163 = vmatprep.subr.mxu0 0.0
    %2164 = vmatpush1.msra.mxu0 0.0
    %2165 = vmatprep.subr.mxu0 0.0
    %2166 = vmatpush1.msra.mxu0 0.0
    %2167 = vmatprep.subr.mxu0 0.0
    %2168 = vmatpush1.msra.mxu0 0.0
    %2169 = vmatprep.subr.mxu0 0.0
    %2170 = vmatpush1.msra.mxu0 0.0
    %2171 = vmatprep.subr.mxu0 0.0
    %2172 = vmatpush1.msra.mxu0 0.0
    %2173 = vmatprep.subr.mxu0 0.0
    %2174 = vmatpush1.msra.mxu0 0.0
    %2175 = vmatprep.subr.mxu0 0.0
    %2176 = vmatpush1.msra.mxu0 0.0
    %2177 = vmatprep.subr.mxu0 0.0
    %2178 = vmatpush1.msra.mxu0 0.0
    %2179 = vmatprep.subr.mxu0 0.0
    %2180 = vmatpush1.msra.mxu0 0.0
    %2181 = vmatprep.subr.mxu0 0.0
    %2182 = vmatpush1.msra.mxu0 0.0
    %2183 = vmatprep.subr.mxu0 0.0
    %2184 = vmatpush1.msra.mxu0 0.0
    %2185 = vmatprep.subr.mxu0 0.0
    %2186 = vmatpush1.msra.mxu0 0.0
    %2187 = vmatprep.subr.mxu0 0.0
    %2188 = vmatpush1.msra.mxu0 0.0
    %2189 = vmatprep.subr.mxu0 0.0
    %2190 = vmatpush1.msra.mxu0 0.0
    %2191 = vmatprep.subr.mxu0 0.0
    %2192 = vmatpush1.msra.mxu0 0.0
    %2193 = vmatprep.subr.mxu0 0.0
    %2194 = vmatpush1.msra.mxu0 0.0
    %2195 = vmatprep.subr.mxu0 0.0
    %2196 = vmatpush1.msra.mxu0 0.0
    %2197 = vmatprep.subr.mxu0 0.0
    %2198 = vmatpush1.msra.mxu0 0.0
    %2199 = vmatprep.subr.mxu0 0.0
    %2200 = vmatpush1.msra.mxu0 0.0
    %2201 = vmatprep.subr.mxu0 0.0
    %2202 = vmatpush1.msra.mxu0 0.0
    %2203 = vmatprep.subr.mxu0 0.0
    %2204 = vmatpush1.msra.mxu0 0.0
    %2205 = vmatprep.subr.mxu0 0.0
    %2206 = vmatpush1.msra.mxu0 0.0
    %2207 = vmatprep.mubr.f32.mxu0 0.0
    %2208 = vmatmul.mubr.f32.gmra.mrb[0].mxu0 %v1979
    %v2209 = vpop.f32.mrb[0].mxu0
    %v2210 = vadd.f32 0.0, %v2209
    %v2211 = vpop.f32.mrb[0].mxu0
    %2212 = vdwg.mxu0
    %v2214 = vrot.slane %v2210, 6
    %2215 = vrot.lane.b32.xlu0 %v2214, 64
    %v2216 = vpop.permute.xlu0 %2215
    %v2218 = vadd.f32 %v187, %v2216
    %v2219 = vtanh.pop %v2218
    %2220 = vmatprep.subr.mxu0 0.0
    %2221 = vmatpush1.msra.mxu0 %v202
    %2222 = vmatprep.subr.mxu0 0.0
    %2223 = vmatpush1.msra.mxu0 %v203
    %2224 = vmatprep.subr.mxu0 0.0
    %2225 = vmatpush1.msra.mxu0 %v204
    %2226 = vmatprep.subr.mxu0 0.0
    %2227 = vmatpush1.msra.mxu0 %v205
    %2228 = vmatprep.subr.mxu0 0.0
    %2229 = vmatpush1.msra.mxu0 0.0
    %2230 = vmatprep.subr.mxu0 0.0
    %2231 = vmatpush1.msra.mxu0 0.0
    %2232 = vmatprep.subr.mxu0 0.0
    %2233 = vmatpush1.msra.mxu0 0.0
    %2234 = vmatprep.subr.mxu0 0.0
    %2235 = vmatpush1.msra.mxu0 0.0
    %2236 = vmatprep.subr.mxu0 0.0
    %2237 = vmatpush1.msra.mxu0 0.0
    %2238 = vmatprep.subr.mxu0 0.0
    %2239 = vmatpush1.msra.mxu0 0.0
    %2240 = vmatprep.subr.mxu0 0.0
    %2241 = vmatpush1.msra.mxu0 0.0
    %2242 = vmatprep.subr.mxu0 0.0
    %2243 = vmatpush1.msra.mxu0 0.0
    %2244 = vmatprep.subr.mxu0 0.0
    %2245 = vmatpush1.msra.mxu0 0.0
    %2246 = vmatprep.subr.mxu0 0.0
    %2247 = vmatpush1.msra.mxu0 0.0
    %2248 = vmatprep.subr.mxu0 0.0
    %2249 = vmatpush1.msra.mxu0 0.0
    %2250 = vmatprep.subr.mxu0 0.0
    %2251 = vmatpush1.msra.mxu0 0.0
    %2252 = vmatprep.subr.mxu0 0.0
    %2253 = vmatpush1.msra.mxu0 0.0
    %2254 = vmatprep.subr.mxu0 0.0
    %2255 = vmatpush1.msra.mxu0 0.0
    %2256 = vmatprep.subr.mxu0 0.0
    %2257 = vmatpush1.msra.mxu0 0.0
    %2258 = vmatprep.subr.mxu0 0.0
    %2259 = vmatpush1.msra.mxu0 0.0
    %2260 = vmatprep.subr.mxu0 0.0
    %2261 = vmatpush1.msra.mxu0 0.0
    %2262 = vmatprep.subr.mxu0 0.0
    %2263 = vmatpush1.msra.mxu0 0.0
    %2264 = vmatprep.subr.mxu0 0.0
    %2265 = vmatpush1.msra.mxu0 0.0
    %2266 = vmatprep.subr.mxu0 0.0
    %2267 = vmatpush1.msra.mxu0 0.0
    %2268 = vmatprep.subr.mxu0 0.0
    %2269 = vmatpush1.msra.mxu0 0.0
    %2270 = vmatprep.subr.mxu0 0.0
    %2271 = vmatpush1.msra.mxu0 0.0
    %2272 = vmatprep.subr.mxu0 0.0
    %2273 = vmatpush1.msra.mxu0 0.0
    %2274 = vmatprep.subr.mxu0 0.0
    %2275 = vmatpush1.msra.mxu0 0.0
    %2276 = vmatprep.subr.mxu0 0.0
    %2277 = vmatpush1.msra.mxu0 0.0
    %2278 = vmatprep.subr.mxu0 0.0
    %2279 = vmatpush1.msra.mxu0 0.0
    %2280 = vmatprep.subr.mxu0 0.0
    %2281 = vmatpush1.msra.mxu0 0.0
    %2282 = vmatprep.subr.mxu0 0.0
    %2283 = vmatpush1.msra.mxu0 0.0
    %2284 = vmatprep.mubr.f32.mxu0 0.0
    %2285 = vmatmul.mubr.f32.gmra.mrb[0].mxu0 %v1979
    %v2286 = vpop.f32.mrb[0].mxu0
    %v2287 = vadd.f32 0.0, %v2286
    %v2288 = vpop.f32.mrb[0].mxu0
    %2289 = vdwg.mxu0
    %v2291 = vrot.slane %v2287, 6
    %2292 = vrot.lane.b32.xlu0 %v2291, 96
    %v2293 = vpop.permute.xlu0 %2292
    %v2295 = vadd.f32 %v187, %v2293
    %v2296 = vxor.u32 %v2295, 2147483648
    %v2297 = vmul.f32 %v2296, 1.442695
    %v2298 = vpow.pop %v2297
    %v2299 = vadd.f32 %v2298, 1.0
    %v2300 = vrcp.pop %v2299
    %v2301 = vmul.f32 1.0, %v2300
    %v2303 = vrot.slane %v1961, 6
    %v2305 = vmul.f32 %v2142, %v2303
    %2307 = vrot.lane.b32.xlu0 %v2219, 64
    %v2308 = vpop.permute.xlu0 %2307
    %v2310 = vmul.f32 %v2060, %v2308
    %2312 = vrot.lane.b32.xlu0 %v2310, 32
    %v2313 = vpop.permute.xlu0 %2312
    %v2315 = vadd.f32 %v2305, %v2313
    %v2316 = vtanh.pop %v2315
    %2318 = vrot.lane.b32.xlu0 %v2316, 64
    %v2319 = vpop.permute.xlu0 %2318
    %v2321 = vmul.f32 %v2301, %v2319
    %v2322 = vmul.f32 %v2321, %v549
    %2324 = vrot.lane.b32.xlu0 %v2322, 32
    %v2325 = vpop.permute.xlu0 %2324
    %v2327 = vsel %vm911, %v2325, 0.0
    %2328 = vadd.xlane.f32.xlu0 %v2327
    %v2329 = vpop.xlane.xlu0 %2328
    %v2331 = vrot.slane %v2321, 2
    %2332 = vrot.lane.b32.xlu0 %v2331, 32
    %v2333 = vpop.permute.xlu0 %2332
    %v2334 = vsel %vm207, %v2333, 0
    %2336 = vmatprep.subr.mxu0 0.0
    %2337 = vmatpush1.msra.mxu0 %v190
    %2338 = vmatprep.subr.mxu0 0.0
    %2339 = vmatpush1.msra.mxu0 %v191
    %2340 = vmatprep.subr.mxu0 0.0
    %2341 = vmatpush1.msra.mxu0 %v192
    %2342 = vmatprep.subr.mxu0 0.0
    %2343 = vmatpush1.msra.mxu0 %v193
    %2344 = vmatprep.subr.mxu0 0.0
    %2345 = vmatpush1.msra.mxu0 0.0
    %2346 = vmatprep.subr.mxu0 0.0
    %2347 = vmatpush1.msra.mxu0 0.0
    %2348 = vmatprep.subr.mxu0 0.0
    %2349 = vmatpush1.msra.mxu0 0.0
    %2350 = vmatprep.subr.mxu0 0.0
    %2351 = vmatpush1.msra.mxu0 0.0
    %2352 = vmatprep.subr.mxu0 0.0
    %2353 = vmatpush1.msra.mxu0 0.0
    %2354 = vmatprep.subr.mxu0 0.0
    %2355 = vmatpush1.msra.mxu0 0.0
    %2356 = vmatprep.subr.mxu0 0.0
    %2357 = vmatpush1.msra.mxu0 0.0
    %2358 = vmatprep.subr.mxu0 0.0
    %2359 = vmatpush1.msra.mxu0 0.0
    %2360 = vmatprep.subr.mxu0 0.0
    %2361 = vmatpush1.msra.mxu0 0.0
    %2362 = vmatprep.subr.mxu0 0.0
    %2363 = vmatpush1.msra.mxu0 0.0
    %2364 = vmatprep.subr.mxu0 0.0
    %2365 = vmatpush1.msra.mxu0 0.0
    %2366 = vmatprep.subr.mxu0 0.0
    %2367 = vmatpush1.msra.mxu0 0.0
    %2368 = vmatprep.subr.mxu0 0.0
    %2369 = vmatpush1.msra.mxu0 0.0
    %2370 = vmatprep.subr.mxu0 0.0
    %2371 = vmatpush1.msra.mxu0 0.0
    %2372 = vmatprep.subr.mxu0 0.0
    %2373 = vmatpush1.msra.mxu0 0.0
    %2374 = vmatprep.subr.mxu0 0.0
    %2375 = vmatpush1.msra.mxu0 0.0
    %2376 = vmatprep.subr.mxu0 0.0
    %2377 = vmatpush1.msra.mxu0 0.0
    %2378 = vmatprep.subr.mxu0 0.0
    %2379 = vmatpush1.msra.mxu0 0.0
    %2380 = vmatprep.subr.mxu0 0.0
    %2381 = vmatpush1.msra.mxu0 0.0
    %2382 = vmatprep.subr.mxu0 0.0
    %2383 = vmatpush1.msra.mxu0 0.0
    %2384 = vmatprep.subr.mxu0 0.0
    %2385 = vmatpush1.msra.mxu0 0.0
    %2386 = vmatprep.subr.mxu0 0.0
    %2387 = vmatpush1.msra.mxu0 0.0
    %2388 = vmatprep.subr.mxu0 0.0
    %2389 = vmatpush1.msra.mxu0 0.0
    %2390 = vmatprep.subr.mxu0 0.0
    %2391 = vmatpush1.msra.mxu0 0.0
    %2392 = vmatprep.subr.mxu0 0.0
    %2393 = vmatpush1.msra.mxu0 0.0
    %2394 = vmatprep.subr.mxu0 0.0
    %2395 = vmatpush1.msra.mxu0 0.0
    %2396 = vmatprep.subr.mxu0 0.0
    %2397 = vmatpush1.msra.mxu0 0.0
    %2398 = vmatprep.subr.mxu0 0.0
    %2399 = vmatpush1.msra.mxu0 0.0
    %2400 = vmatprep.mubr.f32.mxu0 0.0
    %2401 = vmatmul.mubr.f32.gmra.mrb[0].mxu0 %v2334
    %v2402 = vpop.f32.mrb[0].mxu0
    %v2403 = vadd.f32 0.0, %v2402
    %v2404 = vpop.f32.mrb[0].mxu0
    %2405 = vdwg.mxu0
    %v2407 = vrot.slane %v2403, 4
    %v2409 = vadd.f32 %v187, %v2407
    %v2410 = vxor.u32 %v2409, 2147483648
    %v2411 = vmul.f32 %v2410, 1.442695
    %v2412 = vpow.pop %v2411
    %v2413 = vadd.f32 %v2412, 1.0
    %v2414 = vrcp.pop %v2413
    %v2415 = vmul.f32 1.0, %v2414
    %2416 = vmatprep.subr.mxu0 0.0
    %2417 = vmatpush1.msra.mxu0 %v194
    %2418 = vmatprep.subr.mxu0 0.0
    %2419 = vmatpush1.msra.mxu0 %v195
    %2420 = vmatprep.subr.mxu0 0.0
    %2421 = vmatpush1.msra.mxu0 %v196
    %2422 = vmatprep.subr.mxu0 0.0
    %2423 = vmatpush1.msra.mxu0 %v197
    %2424 = vmatprep.subr.mxu0 0.0
    %2425 = vmatpush1.msra.mxu0 0.0
    %2426 = vmatprep.subr.mxu0 0.0
    %2427 = vmatpush1.msra.mxu0 0.0
    %2428 = vmatprep.subr.mxu0 0.0
    %2429 = vmatpush1.msra.mxu0 0.0
    %2430 = vmatprep.subr.mxu0 0.0
    %2431 = vmatpush1.msra.mxu0 0.0
    %2432 = vmatprep.subr.mxu0 0.0
    %2433 = vmatpush1.msra.mxu0 0.0
    %2434 = vmatprep.subr.mxu0 0.0
    %2435 = vmatpush1.msra.mxu0 0.0
    %2436 = vmatprep.subr.mxu0 0.0
    %2437 = vmatpush1.msra.mxu0 0.0
    %2438 = vmatprep.subr.mxu0 0.0
    %2439 = vmatpush1.msra.mxu0 0.0
    %2440 = vmatprep.subr.mxu0 0.0
    %2441 = vmatpush1.msra.mxu0 0.0
    %2442 = vmatprep.subr.mxu0 0.0
    %2443 = vmatpush1.msra.mxu0 0.0
    %2444 = vmatprep.subr.mxu0 0.0
    %2445 = vmatpush1.msra.mxu0 0.0
    %2446 = vmatprep.subr.mxu0 0.0
    %2447 = vmatpush1.msra.mxu0 0.0
    %2448 = vmatprep.subr.mxu0 0.0
    %2449 = vmatpush1.msra.mxu0 0.0
    %2450 = vmatprep.subr.mxu0 0.0
    %2451 = vmatpush1.msra.mxu0 0.0
    %2452 = vmatprep.subr.mxu0 0.0
    %2453 = vmatpush1.msra.mxu0 0.0
    %2454 = vmatprep.subr.mxu0 0.0
    %2455 = vmatpush1.msra.mxu0 0.0
    %2456 = vmatprep.subr.mxu0 0.0
    %2457 = vmatpush1.msra.mxu0 0.0
    %2458 = vmatprep.subr.mxu0 0.0
    %2459 = vmatpush1.msra.mxu0 0.0
    %2460 = vmatprep.subr.mxu0 0.0
    %2461 = vmatpush1.msra.mxu0 0.0
    %2462 = vmatprep.subr.mxu0 0.0
    %2463 = vmatpush1.msra.mxu0 0.0
    %2464 = vmatprep.subr.mxu0 0.0
    %2465 = vmatpush1.msra.mxu0 0.0
    %2466 = vmatprep.subr.mxu0 0.0
    %2467 = vmatpush1.msra.mxu0 0.0
    %2468 = vmatprep.subr.mxu0 0.0
    %2469 = vmatpush1.msra.mxu0 0.0
    %2470 = vmatprep.subr.mxu0 0.0
    %2471 = vmatpush1.msra.mxu0 0.0
    %2472 = vmatprep.subr.mxu0 0.0
    %2473 = vmatpush1.msra.mxu0 0.0
    %2474 = vmatprep.subr.mxu0 0.0
    %2475 = vmatpush1.msra.mxu0 0.0
    %2476 = vmatprep.subr.mxu0 0.0
    %2477 = vmatpush1.msra.mxu0 0.0
    %2478 = vmatprep.subr.mxu0 0.0
    %2479 = vmatpush1.msra.mxu0 0.0
    %2480 = vmatprep.mubr.f32.mxu0 0.0
    %2481 = vmatmul.mubr.f32.gmra.mrb[0].mxu0 %v2334
    %v2482 = vpop.f32.mrb[0].mxu0
    %v2483 = vadd.f32 0.0, %v2482
    %v2484 = vpop.f32.mrb[0].mxu0
    %2485 = vdwg.mxu0
    %v2487 = vrot.slane %v2483, 4
    %2488 = vrot.lane.b32.xlu0 %v2487, 32
    %v2489 = vpop.permute.xlu0 %2488
    %v2491 = vadd.f32 %v187, %v2489
    %v2492 = vxor.u32 %v2491, 2147483648
    %v2493 = vmul.f32 %v2492, 1.442695
    %v2494 = vpow.pop %v2493
    %v2495 = vadd.f32 %v2494, 1.0
    %v2496 = vrcp.pop %v2495
    %v2497 = vmul.f32 1.0, %v2496
    %2498 = vmatprep.subr.mxu0 0.0
    %2499 = vmatpush1.msra.mxu0 %v198
    %2500 = vmatprep.subr.mxu0 0.0
    %2501 = vmatpush1.msra.mxu0 %v199
    %2502 = vmatprep.subr.mxu0 0.0
    %2503 = vmatpush1.msra.mxu0 %v200
    %2504 = vmatprep.subr.mxu0 0.0
    %2505 = vmatpush1.msra.mxu0 %v201
    %2506 = vmatprep.subr.mxu0 0.0
    %2507 = vmatpush1.msra.mxu0 0.0
    %2508 = vmatprep.subr.mxu0 0.0
    %2509 = vmatpush1.msra.mxu0 0.0
    %2510 = vmatprep.subr.mxu0 0.0
    %2511 = vmatpush1.msra.mxu0 0.0
    %2512 = vmatprep.subr.mxu0 0.0
    %2513 = vmatpush1.msra.mxu0 0.0
    %2514 = vmatprep.subr.mxu0 0.0
    %2515 = vmatpush1.msra.mxu0 0.0
    %2516 = vmatprep.subr.mxu0 0.0
    %2517 = vmatpush1.msra.mxu0 0.0
    %2518 = vmatprep.subr.mxu0 0.0
    %2519 = vmatpush1.msra.mxu0 0.0
    %2520 = vmatprep.subr.mxu0 0.0
    %2521 = vmatpush1.msra.mxu0 0.0
    %2522 = vmatprep.subr.mxu0 0.0
    %2523 = vmatpush1.msra.mxu0 0.0
    %2524 = vmatprep.subr.mxu0 0.0
    %2525 = vmatpush1.msra.mxu0 0.0
    %2526 = vmatprep.subr.mxu0 0.0
    %2527 = vmatpush1.msra.mxu0 0.0
    %2528 = vmatprep.subr.mxu0 0.0
    %2529 = vmatpush1.msra.mxu0 0.0
    %2530 = vmatprep.subr.mxu0 0.0
    %2531 = vmatpush1.msra.mxu0 0.0
    %2532 = vmatprep.subr.mxu0 0.0
    %2533 = vmatpush1.msra.mxu0 0.0
    %2534 = vmatprep.subr.mxu0 0.0
    %2535 = vmatpush1.msra.mxu0 0.0
    %2536 = vmatprep.subr.mxu0 0.0
    %2537 = vmatpush1.msra.mxu0 0.0
    %2538 = vmatprep.subr.mxu0 0.0
    %2539 = vmatpush1.msra.mxu0 0.0
    %2540 = vmatprep.subr.mxu0 0.0
    %2541 = vmatpush1.msra.mxu0 0.0
    %2542 = vmatprep.subr.mxu0 0.0
    %2543 = vmatpush1.msra.mxu0 0.0
    %2544 = vmatprep.subr.mxu0 0.0
    %2545 = vmatpush1.msra.mxu0 0.0
    %2546 = vmatprep.subr.mxu0 0.0
    %2547 = vmatpush1.msra.mxu0 0.0
    %2548 = vmatprep.subr.mxu0 0.0
    %2549 = vmatpush1.msra.mxu0 0.0
    %2550 = vmatprep.subr.mxu0 0.0
    %2551 = vmatpush1.msra.mxu0 0.0
    %2552 = vmatprep.subr.mxu0 0.0
    %2553 = vmatpush1.msra.mxu0 0.0
    %2554 = vmatprep.subr.mxu0 0.0
    %2555 = vmatpush1.msra.mxu0 0.0
    %2556 = vmatprep.subr.mxu0 0.0
    %2557 = vmatpush1.msra.mxu0 0.0
    %2558 = vmatprep.subr.mxu0 0.0
    %2559 = vmatpush1.msra.mxu0 0.0
    %2560 = vmatprep.subr.mxu0 0.0
    %2561 = vmatpush1.msra.mxu0 0.0
    %2562 = vmatprep.mubr.f32.mxu0 0.0
    %2563 = vmatmul.mubr.f32.gmra.mrb[0].mxu0 %v2334
    %v2564 = vpop.f32.mrb[0].mxu0
    %v2565 = vadd.f32 0.0, %v2564
    %v2566 = vpop.f32.mrb[0].mxu0
    %2567 = vdwg.mxu0
    %v2569 = vrot.slane %v2565, 4
    %2570 = vrot.lane.b32.xlu0 %v2569, 64
    %v2571 = vpop.permute.xlu0 %2570
    %v2573 = vadd.f32 %v187, %v2571
    %v2574 = vtanh.pop %v2573
    %2575 = vmatprep.subr.mxu0 0.0
    %2576 = vmatpush1.msra.mxu0 %v202
    %2577 = vmatprep.subr.mxu0 0.0
    %2578 = vmatpush1.msra.mxu0 %v203
    %2579 = vmatprep.subr.mxu0 0.0
    %2580 = vmatpush1.msra.mxu0 %v204
    %2581 = vmatprep.subr.mxu0 0.0
    %2582 = vmatpush1.msra.mxu0 %v205
    %2583 = vmatprep.subr.mxu0 0.0
    %2584 = vmatpush1.msra.mxu0 0.0
    %2585 = vmatprep.subr.mxu0 0.0
    %2586 = vmatpush1.msra.mxu0 0.0
    %2587 = vmatprep.subr.mxu0 0.0
    %2588 = vmatpush1.msra.mxu0 0.0
    %2589 = vmatprep.subr.mxu0 0.0
    %2590 = vmatpush1.msra.mxu0 0.0
    %2591 = vmatprep.subr.mxu0 0.0
    %2592 = vmatpush1.msra.mxu0 0.0
    %2593 = vmatprep.subr.mxu0 0.0
    %2594 = vmatpush1.msra.mxu0 0.0
    %2595 = vmatprep.subr.mxu0 0.0
    %2596 = vmatpush1.msra.mxu0 0.0
    %2597 = vmatprep.subr.mxu0 0.0
    %2598 = vmatpush1.msra.mxu0 0.0
    %2599 = vmatprep.subr.mxu0 0.0
    %2600 = vmatpush1.msra.mxu0 0.0
    %2601 = vmatprep.subr.mxu0 0.0
    %2602 = vmatpush1.msra.mxu0 0.0
    %2603 = vmatprep.subr.mxu0 0.0
    %2604 = vmatpush1.msra.mxu0 0.0
    %2605 = vmatprep.subr.mxu0 0.0
    %2606 = vmatpush1.msra.mxu0 0.0
    %2607 = vmatprep.subr.mxu0 0.0
    %2608 = vmatpush1.msra.mxu0 0.0
    %2609 = vmatprep.subr.mxu0 0.0
    %2610 = vmatpush1.msra.mxu0 0.0
    %2611 = vmatprep.subr.mxu0 0.0
    %2612 = vmatpush1.msra.mxu0 0.0
    %2613 = vmatprep.subr.mxu0 0.0
    %2614 = vmatpush1.msra.mxu0 0.0
    %2615 = vmatprep.subr.mxu0 0.0
    %2616 = vmatpush1.msra.mxu0 0.0
    %2617 = vmatprep.subr.mxu0 0.0
    %2618 = vmatpush1.msra.mxu0 0.0
    %2619 = vmatprep.subr.mxu0 0.0
    %2620 = vmatpush1.msra.mxu0 0.0
    %2621 = vmatprep.subr.mxu0 0.0
    %2622 = vmatpush1.msra.mxu0 0.0
    %2623 = vmatprep.subr.mxu0 0.0
    %2624 = vmatpush1.msra.mxu0 0.0
    %2625 = vmatprep.subr.mxu0 0.0
    %2626 = vmatpush1.msra.mxu0 0.0
    %2627 = vmatprep.subr.mxu0 0.0
    %2628 = vmatpush1.msra.mxu0 0.0
    %2629 = vmatprep.subr.mxu0 0.0
    %2630 = vmatpush1.msra.mxu0 0.0
    %2631 = vmatprep.subr.mxu0 0.0
    %2632 = vmatpush1.msra.mxu0 0.0
    %2633 = vmatprep.subr.mxu0 0.0
    %2634 = vmatpush1.msra.mxu0 0.0
    %2635 = vmatprep.subr.mxu0 0.0
    %2636 = vmatpush1.msra.mxu0 0.0
    %2637 = vmatprep.subr.mxu0 0.0
    %2638 = vmatpush1.msra.mxu0 0.0
    %2639 = vmatprep.mubr.f32.mxu0 0.0
    %2640 = vmatmul.mubr.f32.gmra.mrb[0].mxu0 %v2334
    %v2641 = vpop.f32.mrb[0].mxu0
    %v2642 = vadd.f32 0.0, %v2641
    %v2643 = vpop.f32.mrb[0].mxu0
    %2644 = vdwg.mxu0
    %v2646 = vrot.slane %v2642, 4
    %2647 = vrot.lane.b32.xlu0 %v2646, 96
    %v2648 = vpop.permute.xlu0 %2647
    %v2650 = vadd.f32 %v187, %v2648
    %v2651 = vxor.u32 %v2650, 2147483648
    %v2652 = vmul.f32 %v2651, 1.442695
    %v2653 = vpow.pop %v2652
    %v2654 = vadd.f32 %v2653, 1.0
    %v2655 = vrcp.pop %v2654
    %v2656 = vmul.f32 1.0, %v2655
    %v2658 = vrot.slane %v2315, 6
    %v2660 = vmul.f32 %v2497, %v2658
    %2662 = vrot.lane.b32.xlu0 %v2574, 64
    %v2663 = vpop.permute.xlu0 %2662
    %v2665 = vmul.f32 %v2415, %v2663
    %2667 = vrot.lane.b32.xlu0 %v2665, 32
    %v2668 = vpop.permute.xlu0 %2667
    %v2670 = vadd.f32 %v2660, %v2668
    %v2671 = vtanh.pop %v2670
    %2673 = vrot.lane.b32.xlu0 %v2671, 64
    %v2674 = vpop.permute.xlu0 %2673
    %v2676 = vmul.f32 %v2656, %v2674
    %v2677 = vmul.f32 %v2676, %v549
    %2679 = vrot.lane.b32.xlu0 %v2677, 32
    %v2680 = vpop.permute.xlu0 %2679
    %v2682 = vsel %vm1267, %v2680, 0.0
    %2683 = vadd.xlane.f32.xlu0 %v2682
    %v2684 = vpop.xlane.xlu0 %2683
    %v2686 = vrot.slane %v2676, 4
    %2687 = vrot.lane.b32.xlu0 %v2686, 32
    %v2688 = vpop.permute.xlu0 %2687
    %v2689 = vsel %vm207, %v2688, 0
    %2691 = vmatprep.subr.mxu0 0.0
    %2692 = vmatpush1.msra.mxu0 %v190
    %2693 = vmatprep.subr.mxu0 0.0
    %2694 = vmatpush1.msra.mxu0 %v191
    %2695 = vmatprep.subr.mxu0 0.0
    %2696 = vmatpush1.msra.mxu0 %v192
    %2697 = vmatprep.subr.mxu0 0.0
    %2698 = vmatpush1.msra.mxu0 %v193
    %2699 = vmatprep.subr.mxu0 0.0
    %2700 = vmatpush1.msra.mxu0 0.0
    %2701 = vmatprep.subr.mxu0 0.0
    %2702 = vmatpush1.msra.mxu0 0.0
    %2703 = vmatprep.subr.mxu0 0.0
    %2704 = vmatpush1.msra.mxu0 0.0
    %2705 = vmatprep.subr.mxu0 0.0
    %2706 = vmatpush1.msra.mxu0 0.0
    %2707 = vmatprep.subr.mxu0 0.0
    %2708 = vmatpush1.msra.mxu0 0.0
    %2709 = vmatprep.subr.mxu0 0.0
    %2710 = vmatpush1.msra.mxu0 0.0
    %2711 = vmatprep.subr.mxu0 0.0
    %2712 = vmatpush1.msra.mxu0 0.0
    %2713 = vmatprep.subr.mxu0 0.0
    %2714 = vmatpush1.msra.mxu0 0.0
    %2715 = vmatprep.subr.mxu0 0.0
    %2716 = vmatpush1.msra.mxu0 0.0
    %2717 = vmatprep.subr.mxu0 0.0
    %2718 = vmatpush1.msra.mxu0 0.0
    %2719 = vmatprep.subr.mxu0 0.0
    %2720 = vmatpush1.msra.mxu0 0.0
    %2721 = vmatprep.subr.mxu0 0.0
    %2722 = vmatpush1.msra.mxu0 0.0
    %2723 = vmatprep.subr.mxu0 0.0
    %2724 = vmatpush1.msra.mxu0 0.0
    %2725 = vmatprep.subr.mxu0 0.0
    %2726 = vmatpush1.msra.mxu0 0.0
    %2727 = vmatprep.subr.mxu0 0.0
    %2728 = vmatpush1.msra.mxu0 0.0
    %2729 = vmatprep.subr.mxu0 0.0
    %2730 = vmatpush1.msra.mxu0 0.0
    %2731 = vmatprep.subr.mxu0 0.0
    %2732 = vmatpush1.msra.mxu0 0.0
    %2733 = vmatprep.subr.mxu0 0.0
    %2734 = vmatpush1.msra.mxu0 0.0
    %2735 = vmatprep.subr.mxu0 0.0
    %2736 = vmatpush1.msra.mxu0 0.0
    %2737 = vmatprep.subr.mxu0 0.0
    %2738 = vmatpush1.msra.mxu0 0.0
    %2739 = vmatprep.subr.mxu0 0.0
    %2740 = vmatpush1.msra.mxu0 0.0
    %2741 = vmatprep.subr.mxu0 0.0
    %2742 = vmatpush1.msra.mxu0 0.0
    %2743 = vmatprep.subr.mxu0 0.0
    %2744 = vmatpush1.msra.mxu0 0.0
    %2745 = vmatprep.subr.mxu0 0.0
    %2746 = vmatpush1.msra.mxu0 0.0
    %2747 = vmatprep.subr.mxu0 0.0
    %2748 = vmatpush1.msra.mxu0 0.0
    %2749 = vmatprep.subr.mxu0 0.0
    %2750 = vmatpush1.msra.mxu0 0.0
    %2751 = vmatprep.subr.mxu0 0.0
    %2752 = vmatpush1.msra.mxu0 0.0
    %2753 = vmatprep.subr.mxu0 0.0
    %2754 = vmatpush1.msra.mxu0 0.0
    %2755 = vmatprep.mubr.f32.mxu0 0.0
    %2756 = vmatmul.mubr.f32.gmra.mrb[0].mxu0 %v2689
    %v2757 = vpop.f32.mrb[0].mxu0
    %v2758 = vadd.f32 0.0, %v2757
    %v2759 = vpop.f32.mrb[0].mxu0
    %2760 = vdwg.mxu0
    %v2762 = vrot.slane %v2758, 2
    %v2764 = vadd.f32 %v187, %v2762
    %v2765 = vxor.u32 %v2764, 2147483648
    %v2766 = vmul.f32 %v2765, 1.442695
    %v2767 = vpow.pop %v2766
    %v2768 = vadd.f32 %v2767, 1.0
    %v2769 = vrcp.pop %v2768
    %v2770 = vmul.f32 1.0, %v2769
    %2771 = vmatprep.subr.mxu0 0.0
    %2772 = vmatpush1.msra.mxu0 %v194
    %2773 = vmatprep.subr.mxu0 0.0
    %2774 = vmatpush1.msra.mxu0 %v195
    %2775 = vmatprep.subr.mxu0 0.0
    %2776 = vmatpush1.msra.mxu0 %v196
    %2777 = vmatprep.subr.mxu0 0.0
    %2778 = vmatpush1.msra.mxu0 %v197
    %2779 = vmatprep.subr.mxu0 0.0
    %2780 = vmatpush1.msra.mxu0 0.0
    %2781 = vmatprep.subr.mxu0 0.0
    %2782 = vmatpush1.msra.mxu0 0.0
    %2783 = vmatprep.subr.mxu0 0.0
    %2784 = vmatpush1.msra.mxu0 0.0
    %2785 = vmatprep.subr.mxu0 0.0
    %2786 = vmatpush1.msra.mxu0 0.0
    %2787 = vmatprep.subr.mxu0 0.0
    %2788 = vmatpush1.msra.mxu0 0.0
    %2789 = vmatprep.subr.mxu0 0.0
    %2790 = vmatpush1.msra.mxu0 0.0
    %2791 = vmatprep.subr.mxu0 0.0
    %2792 = vmatpush1.msra.mxu0 0.0
    %2793 = vmatprep.subr.mxu0 0.0
    %2794 = vmatpush1.msra.mxu0 0.0
    %2795 = vmatprep.subr.mxu0 0.0
    %2796 = vmatpush1.msra.mxu0 0.0
    %2797 = vmatprep.subr.mxu0 0.0
    %2798 = vmatpush1.msra.mxu0 0.0
    %2799 = vmatprep.subr.mxu0 0.0
    %2800 = vmatpush1.msra.mxu0 0.0
    %2801 = vmatprep.subr.mxu0 0.0
    %2802 = vmatpush1.msra.mxu0 0.0
    %2803 = vmatprep.subr.mxu0 0.0
    %2804 = vmatpush1.msra.mxu0 0.0
    %2805 = vmatprep.subr.mxu0 0.0
    %2806 = vmatpush1.msra.mxu0 0.0
    %2807 = vmatprep.subr.mxu0 0.0
    %2808 = vmatpush1.msra.mxu0 0.0
    %2809 = vmatprep.subr.mxu0 0.0
    %2810 = vmatpush1.msra.mxu0 0.0
    %2811 = vmatprep.subr.mxu0 0.0
    %2812 = vmatpush1.msra.mxu0 0.0
    %2813 = vmatprep.subr.mxu0 0.0
    %2814 = vmatpush1.msra.mxu0 0.0
    %2815 = vmatprep.subr.mxu0 0.0
    %2816 = vmatpush1.msra.mxu0 0.0
    %2817 = vmatprep.subr.mxu0 0.0
    %2818 = vmatpush1.msra.mxu0 0.0
    %2819 = vmatprep.subr.mxu0 0.0
    %2820 = vmatpush1.msra.mxu0 0.0
    %2821 = vmatprep.subr.mxu0 0.0
    %2822 = vmatpush1.msra.mxu0 0.0
    %2823 = vmatprep.subr.mxu0 0.0
    %2824 = vmatpush1.msra.mxu0 0.0
    %2825 = vmatprep.subr.mxu0 0.0
    %2826 = vmatpush1.msra.mxu0 0.0
    %2827 = vmatprep.subr.mxu0 0.0
    %2828 = vmatpush1.msra.mxu0 0.0
    %2829 = vmatprep.subr.mxu0 0.0
    %2830 = vmatpush1.msra.mxu0 0.0
    %2831 = vmatprep.subr.mxu0 0.0
    %2832 = vmatpush1.msra.mxu0 0.0
    %2833 = vmatprep.subr.mxu0 0.0
    %2834 = vmatpush1.msra.mxu0 0.0
    %2835 = vmatprep.mubr.f32.mxu0 0.0
    %2836 = vmatmul.mubr.f32.gmra.mrb[0].mxu0 %v2689
    %v2837 = vpop.f32.mrb[0].mxu0
    %v2838 = vadd.f32 0.0, %v2837
    %v2839 = vpop.f32.mrb[0].mxu0
    %2840 = vdwg.mxu0
    %v2842 = vrot.slane %v2838, 2
    %2843 = vrot.lane.b32.xlu0 %v2842, 32
    %v2844 = vpop.permute.xlu0 %2843
    %v2846 = vadd.f32 %v187, %v2844
    %v2847 = vxor.u32 %v2846, 2147483648
    %v2848 = vmul.f32 %v2847, 1.442695
    %v2849 = vpow.pop %v2848
    %v2850 = vadd.f32 %v2849, 1.0
    %v2851 = vrcp.pop %v2850
    %v2852 = vmul.f32 1.0, %v2851
    %2853 = vmatprep.subr.mxu0 0.0
    %2854 = vmatpush1.msra.mxu0 %v198
    %2855 = vmatprep.subr.mxu0 0.0
    %2856 = vmatpush1.msra.mxu0 %v199
    %2857 = vmatprep.subr.mxu0 0.0
    %2858 = vmatpush1.msra.mxu0 %v200
    %2859 = vmatprep.subr.mxu0 0.0
    %2860 = vmatpush1.msra.mxu0 %v201
    %2861 = vmatprep.subr.mxu0 0.0
    %2862 = vmatpush1.msra.mxu0 0.0
    %2863 = vmatprep.subr.mxu0 0.0
    %2864 = vmatpush1.msra.mxu0 0.0
    %2865 = vmatprep.subr.mxu0 0.0
    %2866 = vmatpush1.msra.mxu0 0.0
    %2867 = vmatprep.subr.mxu0 0.0
    %2868 = vmatpush1.msra.mxu0 0.0
    %2869 = vmatprep.subr.mxu0 0.0
    %2870 = vmatpush1.msra.mxu0 0.0
    %2871 = vmatprep.subr.mxu0 0.0
    %2872 = vmatpush1.msra.mxu0 0.0
    %2873 = vmatprep.subr.mxu0 0.0
    %2874 = vmatpush1.msra.mxu0 0.0
    %2875 = vmatprep.subr.mxu0 0.0
    %2876 = vmatpush1.msra.mxu0 0.0
    %2877 = vmatprep.subr.mxu0 0.0
    %2878 = vmatpush1.msra.mxu0 0.0
    %2879 = vmatprep.subr.mxu0 0.0
    %2880 = vmatpush1.msra.mxu0 0.0
    %2881 = vmatprep.subr.mxu0 0.0
    %2882 = vmatpush1.msra.mxu0 0.0
    %2883 = vmatprep.subr.mxu0 0.0
    %2884 = vmatpush1.msra.mxu0 0.0
    %2885 = vmatprep.subr.mxu0 0.0
    %2886 = vmatpush1.msra.mxu0 0.0
    %2887 = vmatprep.subr.mxu0 0.0
    %2888 = vmatpush1.msra.mxu0 0.0
    %2889 = vmatprep.subr.mxu0 0.0
    %2890 = vmatpush1.msra.mxu0 0.0
    %2891 = vmatprep.subr.mxu0 0.0
    %2892 = vmatpush1.msra.mxu0 0.0
    %2893 = vmatprep.subr.mxu0 0.0
    %2894 = vmatpush1.msra.mxu0 0.0
    %2895 = vmatprep.subr.mxu0 0.0
    %2896 = vmatpush1.msra.mxu0 0.0
    %2897 = vmatprep.subr.mxu0 0.0
    %2898 = vmatpush1.msra.mxu0 0.0
    %2899 = vmatprep.subr.mxu0 0.0
    %2900 = vmatpush1.msra.mxu0 0.0
    %2901 = vmatprep.subr.mxu0 0.0
    %2902 = vmatpush1.msra.mxu0 0.0
    %2903 = vmatprep.subr.mxu0 0.0
    %2904 = vmatpush1.msra.mxu0 0.0
    %2905 = vmatprep.subr.mxu0 0.0
    %2906 = vmatpush1.msra.mxu0 0.0
    %2907 = vmatprep.subr.mxu0 0.0
    %2908 = vmatpush1.msra.mxu0 0.0
    %2909 = vmatprep.subr.mxu0 0.0
    %2910 = vmatpush1.msra.mxu0 0.0
    %2911 = vmatprep.subr.mxu0 0.0
    %2912 = vmatpush1.msra.mxu0 0.0
    %2913 = vmatprep.subr.mxu0 0.0
    %2914 = vmatpush1.msra.mxu0 0.0
    %2915 = vmatprep.subr.mxu0 0.0
    %2916 = vmatpush1.msra.mxu0 0.0
    %2917 = vmatprep.mubr.f32.mxu0 0.0
    %2918 = vmatmul.mubr.f32.gmra.mrb[0].mxu0 %v2689
    %v2919 = vpop.f32.mrb[0].mxu0
    %v2920 = vadd.f32 0.0, %v2919
    %v2921 = vpop.f32.mrb[0].mxu0
    %2922 = vdwg.mxu0
    %v2924 = vrot.slane %v2920, 2
    %2925 = vrot.lane.b32.xlu0 %v2924, 64
    %v2926 = vpop.permute.xlu0 %2925
    %v2928 = vadd.f32 %v187, %v2926
    %v2929 = vtanh.pop %v2928
    %2930 = vmatprep.subr.mxu0 0.0
    %2931 = vmatpush1.msra.mxu0 %v202
    %2932 = vmatprep.subr.mxu0 0.0
    %2933 = vmatpush1.msra.mxu0 %v203
    %2934 = vmatprep.subr.mxu0 0.0
    %2935 = vmatpush1.msra.mxu0 %v204
    %2936 = vmatprep.subr.mxu0 0.0
    %2937 = vmatpush1.msra.mxu0 %v205
    %2938 = vmatprep.subr.mxu0 0.0
    %2939 = vmatpush1.msra.mxu0 0.0
    %2940 = vmatprep.subr.mxu0 0.0
    %2941 = vmatpush1.msra.mxu0 0.0
    %2942 = vmatprep.subr.mxu0 0.0
    %2943 = vmatpush1.msra.mxu0 0.0
    %2944 = vmatprep.subr.mxu0 0.0
    %2945 = vmatpush1.msra.mxu0 0.0
    %2946 = vmatprep.subr.mxu0 0.0
    %2947 = vmatpush1.msra.mxu0 0.0
    %2948 = vmatprep.subr.mxu0 0.0
    %2949 = vmatpush1.msra.mxu0 0.0
    %2950 = vmatprep.subr.mxu0 0.0
    %2951 = vmatpush1.msra.mxu0 0.0
    %2952 = vmatprep.subr.mxu0 0.0
    %2953 = vmatpush1.msra.mxu0 0.0
    %2954 = vmatprep.subr.mxu0 0.0
    %2955 = vmatpush1.msra.mxu0 0.0
    %2956 = vmatprep.subr.mxu0 0.0
    %2957 = vmatpush1.msra.mxu0 0.0
    %2958 = vmatprep.subr.mxu0 0.0
    %2959 = vmatpush1.msra.mxu0 0.0
    %2960 = vmatprep.subr.mxu0 0.0
    %2961 = vmatpush1.msra.mxu0 0.0
    %2962 = vmatprep.subr.mxu0 0.0
    %2963 = vmatpush1.msra.mxu0 0.0
    %2964 = vmatprep.subr.mxu0 0.0
    %2965 = vmatpush1.msra.mxu0 0.0
    %2966 = vmatprep.subr.mxu0 0.0
    %2967 = vmatpush1.msra.mxu0 0.0
    %2968 = vmatprep.subr.mxu0 0.0
    %2969 = vmatpush1.msra.mxu0 0.0
    %2970 = vmatprep.subr.mxu0 0.0
    %2971 = vmatpush1.msra.mxu0 0.0
    %2972 = vmatprep.subr.mxu0 0.0
    %2973 = vmatpush1.msra.mxu0 0.0
    %2974 = vmatprep.subr.mxu0 0.0
    %2975 = vmatpush1.msra.mxu0 0.0
    %2976 = vmatprep.subr.mxu0 0.0
    %2977 = vmatpush1.msra.mxu0 0.0
    %2978 = vmatprep.subr.mxu0 0.0
    %2979 = vmatpush1.msra.mxu0 0.0
    %2980 = vmatprep.subr.mxu0 0.0
    %2981 = vmatpush1.msra.mxu0 0.0
    %2982 = vmatprep.subr.mxu0 0.0
    %2983 = vmatpush1.msra.mxu0 0.0
    %2984 = vmatprep.subr.mxu0 0.0
    %2985 = vmatpush1.msra.mxu0 0.0
    %2986 = vmatprep.subr.mxu0 0.0
    %2987 = vmatpush1.msra.mxu0 0.0
    %2988 = vmatprep.subr.mxu0 0.0
    %2989 = vmatpush1.msra.mxu0 0.0
    %2990 = vmatprep.subr.mxu0 0.0
    %2991 = vmatpush1.msra.mxu0 0.0
    %2992 = vmatprep.subr.mxu0 0.0
    %2993 = vmatpush1.msra.mxu0 0.0
    %2994 = vmatprep.mubr.f32.mxu0 0.0
    %2995 = vmatmul.mubr.f32.gmra.mrb[0].mxu0 %v2689
    %v2996 = vpop.f32.mrb[0].mxu0
    %v2997 = vadd.f32 0.0, %v2996
    %v2998 = vpop.f32.mrb[0].mxu0
    %2999 = vdwg.mxu0
    %v3001 = vrot.slane %v2997, 2
    %3002 = vrot.lane.b32.xlu0 %v3001, 96
    %v3003 = vpop.permute.xlu0 %3002
    %v3005 = vadd.f32 %v187, %v3003
    %v3006 = vxor.u32 %v3005, 2147483648
    %v3007 = vmul.f32 %v3006, 1.442695
    %v3008 = vpow.pop %v3007
    %v3009 = vadd.f32 %v3008, 1.0
    %v3010 = vrcp.pop %v3009
    %v3011 = vmul.f32 1.0, %v3010
    %v3013 = vrot.slane %v2670, 6
    %v3015 = vmul.f32 %v2852, %v3013
    %3017 = vrot.lane.b32.xlu0 %v2929, 64
    %v3018 = vpop.permute.xlu0 %3017
    %v3020 = vmul.f32 %v2770, %v3018
    %3022 = vrot.lane.b32.xlu0 %v3020, 32
    %v3023 = vpop.permute.xlu0 %3022
    %v3025 = vadd.f32 %v3015, %v3023
    %v3026 = vtanh.pop %v3025
    %3028 = vrot.lane.b32.xlu0 %v3026, 64
    %v3029 = vpop.permute.xlu0 %3028
    %v3031 = vmul.f32 %v3011, %v3029
    %v3032 = vmul.f32 %v3031, %v549
    %3034 = vrot.lane.b32.xlu0 %v3032, 32
    %v3035 = vpop.permute.xlu0 %3034
    %v3037 = vsel %vm1623, %v3035, 0.0
    %3038 = vadd.xlane.f32.xlu0 %v3037
    %v3039 = vpop.xlane.xlu0 %3038
    %v3041 = vrot.slane %v914, 2
    %v3043 = vmax.f32 %v559, %v3041
    %v3045 = vrot.slane %v1270, 4
    %v3047 = vmax.f32 %v3043, %v3045
    %v3049 = vrot.slane %v1626, 6
    %v3051 = vmax.f32 %v3047, %v3049
    %v3052 = vmax.f32 %v3051, %v1975
    %v3054 = vrot.slane %v2329, 2
    %v3056 = vmax.f32 %v3052, %v3054
    %v3058 = vrot.slane %v2684, 4
    %v3060 = vmax.f32 %v3056, %v3058
    %v3062 = vrot.slane %v3039, 6
    %v3064 = vmax.f32 %v3060, %v3062
    %v3065 = vsub.f32 %v559, %v3064
    %v3066 = vmul.f32 %v3065, 1.442695
    %v3067 = vpow.pop %v3066
    %v3068 = vadd.f32 %v3067, 0.0
    %3070 = vset.pattern.permute.xlu0 0
    %3071 = vperm.xlu0 %3070, %v3067
    %v3072 = vpop.permute.xlu0 %3071
    %v3074 = vmul.f32 %v3072, %v542
    %v3075 = vadd.f32 %v3074, 0.0
    %v3077 = vrot.slane %v3064, 6
    %v3079 = vsub.f32 %v914, %v3077
    %v3080 = vmul.f32 %v3079, 1.442695
    %v3081 = vpow.pop %v3080
    %v3083 = vrot.slane %v3081, 2
    %v3085 = vadd.f32 %v3068, %v3083
    %3086 = vset.pattern.permute.xlu0 0
    %3087 = vperm.xlu0 %3086, %v3081
    %v3088 = vpop.permute.xlu0 %3087
    %v3090 = vmul.f32 %v3088, %v905
    %v3092 = vrot.slane %v3090, 2
    %v3094 = vadd.f32 %v3075, %v3092
    %v3095 = vrot.slane %v3064, 4
    %v3097 = vsub.f32 %v1270, %v3095
    %v3098 = vmul.f32 %v3097, 1.442695
    %v3099 = vpow.pop %v3098
    %v3101 = vrot.slane %v3099, 4
    %v3103 = vadd.f32 %v3085, %v3101
    %3104 = vset.pattern.permute.xlu0 0
    %3105 = vperm.xlu0 %3104, %v3099
    %v3106 = vpop.permute.xlu0 %3105
    %v3108 = vmul.f32 %v3106, %v1261
    %v3110 = vrot.slane %v3108, 4
    %v3112 = vadd.f32 %v3094, %v3110
    %v3113 = vrot.slane %v3064, 2
    %v3115 = vsub.f32 %v1626, %v3113
    %v3116 = vmul.f32 %v3115, 1.442695
    %v3117 = vpow.pop %v3116
    %v3119 = vrot.slane %v3117, 6
    %v3121 = vadd.f32 %v3103, %v3119
    %3122 = vset.pattern.permute.xlu0 0
    %3123 = vperm.xlu0 %3122, %v3117
    %v3124 = vpop.permute.xlu0 %3123
    %v3126 = vmul.f32 %v3124, %v1617
    %v3128 = vrot.slane %v3126, 6
    %v3130 = vadd.f32 %v3112, %v3128
    %v3131 = vsub.f32 %v1975, %v3064
    %v3132 = vmul.f32 %v3131, 1.442695
    %v3133 = vpow.pop %v3132
    %v3134 = vadd.f32 %v3121, %v3133
    %3136 = vset.pattern.permute.xlu0 0
    %3137 = vperm.xlu0 %3136, %v3133
    %v3138 = vpop.permute.xlu0 %3137
    %v3140 = vmul.f32 %v3138, %v1967
    %v3141 = vadd.f32 %v3130, %v3140
    %v3142 = vsub.f32 %v2329, %v3077
    %v3143 = vmul.f32 %v3142, 1.442695
    %v3144 = vpow.pop %v3143
    %v3146 = vrot.slane %v3144, 2
    %v3148 = vadd.f32 %v3134, %v3146
    %3149 = vset.pattern.permute.xlu0 0
    %3150 = vperm.xlu0 %3149, %v3144
    %v3151 = vpop.permute.xlu0 %3150
    %v3153 = vmul.f32 %v3151, %v2321
    %v3155 = vrot.slane %v3153, 2
    %v3157 = vadd.f32 %v3141, %v3155
    %v3158 = vsub.f32 %v2684, %v3095
    %v3159 = vmul.f32 %v3158, 1.442695
    %v3160 = vpow.pop %v3159
    %v3162 = vrot.slane %v3160, 4
    %v3164 = vadd.f32 %v3148, %v3162
    %3165 = vset.pattern.permute.xlu0 0
    %3166 = vperm.xlu0 %3165, %v3160
    %v3167 = vpop.permute.xlu0 %3166
    %v3169 = vmul.f32 %v3167, %v2676
    %v3171 = vrot.slane %v3169, 4
    %v3173 = vadd.f32 %v3157, %v3171
    %v3174 = vsub.f32 %v3039, %v3113
    %v3175 = vmul.f32 %v3174, 1.442695
    %v3176 = vpow.pop %v3175
    %v3178 = vrot.slane %v3176, 6
    %v3180 = vadd.f32 %v3164, %v3178
    %3181 = vset.pattern.permute.xlu0 0
    %3182 = vperm.xlu0 %3181, %v3176
    %v3183 = vpop.permute.xlu0 %3182
    %v3185 = vmul.f32 %v3183, %v3031
    %v3187 = vrot.slane %v3185, 6
    %v3189 = vadd.f32 %v3173, %v3187
    %3191 = vset.pattern.permute.xlu0 0
    %3192 = vperm.xlu0 %3191, %v3180
    %v3193 = vpop.permute.xlu0 %3192
    %v3195 = vrcp.pop %v3193
    %v3196 = vmul.f32 %v3189, %v3195
    %v3197 = vld [vmem:[%s8] sm:$0xff]
    %v3198 = vld [vmem:[%s8 + $0x8] sm:$0xff]
    %v3199 = vld [vmem:[%s8 + $0x10] sm:$0xff]
    %v3200 = vld [vmem:[%s8 + $0x18] sm:$0xff]
    %v3201 = vld [vmem:[%s9] sm:$0x1]
    %v3203 = vlaneseq
    %v3204 = vshrl.u32 %v3203, 7
    %v3205 = vsub.s32 0, %v3204
    %v3206 = vrot.slane %v3201, %v3205
    %3209 = vrot.lane.b32.xlu0 %v3196, 32
    %v3210 = vpop.permute.xlu0 %3209
    %v3211 = vsel %vm207, %v3210, 0
    %3213 = vmatprep.subr.mxu0 0.0
    %3214 = vmatpush1.msra.mxu0 %v3197
    %3215 = vmatprep.subr.mxu0 0.0
    %3216 = vmatpush1.msra.mxu0 %v3198
    %3217 = vmatprep.subr.mxu0 0.0
    %3218 = vmatpush1.msra.mxu0 %v3199
    %3219 = vmatprep.subr.mxu0 0.0
    %3220 = vmatpush1.msra.mxu0 %v3200
    %3221 = vmatprep.subr.mxu0 0.0
    %3222 = vmatpush1.msra.mxu0 0.0
    %3223 = vmatprep.subr.mxu0 0.0
    %3224 = vmatpush1.msra.mxu0 0.0
    %3225 = vmatprep.subr.mxu0 0.0
    %3226 = vmatpush1.msra.mxu0 0.0
    %3227 = vmatprep.subr.mxu0 0.0
    %3228 = vmatpush1.msra.mxu0 0.0
    %3229 = vmatprep.subr.mxu0 0.0
    %3230 = vmatpush1.msra.mxu0 0.0
    %3231 = vmatprep.subr.mxu0 0.0
    %3232 = vmatpush1.msra.mxu0 0.0
    %3233 = vmatprep.subr.mxu0 0.0
    %3234 = vmatpush1.msra.mxu0 0.0
    %3235 = vmatprep.subr.mxu0 0.0
    %3236 = vmatpush1.msra.mxu0 0.0
    %3237 = vmatprep.subr.mxu0 0.0
    %3238 = vmatpush1.msra.mxu0 0.0
    %3239 = vmatprep.subr.mxu0 0.0
    %3240 = vmatpush1.msra.mxu0 0.0
    %3241 = vmatprep.subr.mxu0 0.0
    %3242 = vmatpush1.msra.mxu0 0.0
    %3243 = vmatprep.subr.mxu0 0.0
    %3244 = vmatpush1.msra.mxu0 0.0
    %3245 = vmatprep.subr.mxu0 0.0
    %3246 = vmatpush1.msra.mxu0 0.0
    %3247 = vmatprep.subr.mxu0 0.0
    %3248 = vmatpush1.msra.mxu0 0.0
    %3249 = vmatprep.subr.mxu0 0.0
    %3250 = vmatpush1.msra.mxu0 0.0
    %3251 = vmatprep.subr.mxu0 0.0
    %3252 = vmatpush1.msra.mxu0 0.0
    %3253 = vmatprep.subr.mxu0 0.0
    %3254 = vmatpush1.msra.mxu0 0.0
    %3255 = vmatprep.subr.mxu0 0.0
    %3256 = vmatpush1.msra.mxu0 0.0
    %3257 = vmatprep.subr.mxu0 0.0
    %3258 = vmatpush1.msra.mxu0 0.0
    %3259 = vmatprep.subr.mxu0 0.0
    %3260 = vmatpush1.msra.mxu0 0.0
    %3261 = vmatprep.subr.mxu0 0.0
    %3262 = vmatpush1.msra.mxu0 0.0
    %3263 = vmatprep.subr.mxu0 0.0
    %3264 = vmatpush1.msra.mxu0 0.0
    %3265 = vmatprep.subr.mxu0 0.0
    %3266 = vmatpush1.msra.mxu0 0.0
    %3267 = vmatprep.subr.mxu0 0.0
    %3268 = vmatpush1.msra.mxu0 0.0
    %3269 = vmatprep.subr.mxu0 0.0
    %3270 = vmatpush1.msra.mxu0 0.0
    %3271 = vmatprep.subr.mxu0 0.0
    %3272 = vmatpush1.msra.mxu0 0.0
    %3273 = vmatprep.subr.mxu0 0.0
    %3274 = vmatpush1.msra.mxu0 0.0
    %3275 = vmatprep.subr.mxu0 0.0
    %3276 = vmatpush1.msra.mxu0 0.0
    %3277 = vmatprep.mubr.f32.mxu0 0.0
    %3278 = vmatmul.mubr.f32.gmra.mrb[0].mxu0 %v3211
    %v3279 = vpop.f32.mrb[0].mxu0
    %v3280 = vadd.f32 %v3206, %v3279
    %v3281 = vpop.f32.mrb[0].mxu0
    %3282 = vdwg.mxu0
    %v3283 = vmax.f32 %v3280, 0.0
    %v3284 = vld [vmem:[%s10] sm:$0xff]
    %v3285 = vld [vmem:[%s10 + $0x8] sm:$0xff]
    %v3286 = vld [vmem:[%s10 + $0x10] sm:$0xff]
    %v3287 = vld [vmem:[%s10 + $0x18] sm:$0xff]
    %v3288 = vld [vmem:[%s10 + $0x20] sm:$0xff]
    %v3289 = vld [vmem:[%s10 + $0x28] sm:$0xff]
    %v3290 = vld [vmem:[%s10 + $0x30] sm:$0xff]
    %v3291 = vld [vmem:[%s10 + $0x38] sm:$0xff]
    %v3292 = vld [vmem:[%s11] sm:$0x1]
    %v3294 = vlaneseq
    %v3295 = vshrl.u32 %v3294, 7
    %v3296 = vsub.s32 0, %v3295
    %v3297 = vrot.slane %v3292, %v3296
    %vm3299 = vcmask 523264
    %v3301 = vsel %vm3299, %v3283, 0
    %3303 = vmatprep.subr.mxu0 0.0
    %3304 = vmatpush1.msra.mxu0 %v3284
    %3305 = vmatprep.subr.mxu0 0.0
    %3306 = vmatpush1.msra.mxu0 %v3285
    %3307 = vmatprep.subr.mxu0 0.0
    %3308 = vmatpush1.msra.mxu0 %v3286
    %3309 = vmatprep.subr.mxu0 0.0
    %3310 = vmatpush1.msra.mxu0 %v3287
    %3311 = vmatprep.subr.mxu0 0.0
    %3312 = vmatpush1.msra.mxu0 %v3288
    %3313 = vmatprep.subr.mxu0 0.0
    %3314 = vmatpush1.msra.mxu0 %v3289
    %3315 = vmatprep.subr.mxu0 0.0
    %3316 = vmatpush1.msra.mxu0 %v3290
    %3317 = vmatprep.subr.mxu0 0.0
    %3318 = vmatpush1.msra.mxu0 %v3291
    %3319 = vmatprep.subr.mxu0 0.0
    %3320 = vmatpush1.msra.mxu0 0.0
    %3321 = vmatprep.subr.mxu0 0.0
    %3322 = vmatpush1.msra.mxu0 0.0
    %3323 = vmatprep.subr.mxu0 0.0
    %3324 = vmatpush1.msra.mxu0 0.0
    %3325 = vmatprep.subr.mxu0 0.0
    %3326 = vmatpush1.msra.mxu0 0.0
    %3327 = vmatprep.subr.mxu0 0.0
    %3328 = vmatpush1.msra.mxu0 0.0
    %3329 = vmatprep.subr.mxu0 0.0
    %3330 = vmatpush1.msra.mxu0 0.0
    %3331 = vmatprep.subr.mxu0 0.0
    %3332 = vmatpush1.msra.mxu0 0.0
    %3333 = vmatprep.subr.mxu0 0.0
    %3334 = vmatpush1.msra.mxu0 0.0
    %3335 = vmatprep.subr.mxu0 0.0
    %3336 = vmatpush1.msra.mxu0 0.0
    %3337 = vmatprep.subr.mxu0 0.0
    %3338 = vmatpush1.msra.mxu0 0.0
    %3339 = vmatprep.subr.mxu0 0.0
    %3340 = vmatpush1.msra.mxu0 0.0
    %3341 = vmatprep.subr.mxu0 0.0
    %3342 = vmatpush1.msra.mxu0 0.0
    %3343 = vmatprep.subr.mxu0 0.0
    %3344 = vmatpush1.msra.mxu0 0.0
    %3345 = vmatprep.subr.mxu0 0.0
    %3346 = vmatpush1.msra.mxu0 0.0
    %3347 = vmatprep.subr.mxu0 0.0
    %3348 = vmatpush1.msra.mxu0 0.0
    %3349 = vmatprep.subr.mxu0 0.0
    %3350 = vmatpush1.msra.mxu0 0.0
    %3351 = vmatprep.subr.mxu0 0.0
    %3352 = vmatpush1.msra.mxu0 0.0
    %3353 = vmatprep.subr.mxu0 0.0
    %3354 = vmatpush1.msra.mxu0 0.0
    %3355 = vmatprep.subr.mxu0 0.0
    %3356 = vmatpush1.msra.mxu0 0.0
    %3357 = vmatprep.subr.mxu0 0.0
    %3358 = vmatpush1.msra.mxu0 0.0
    %3359 = vmatprep.subr.mxu0 0.0
    %3360 = vmatpush1.msra.mxu0 0.0
    %3361 = vmatprep.subr.mxu0 0.0
    %3362 = vmatpush1.msra.mxu0 0.0
    %3363 = vmatprep.subr.mxu0 0.0
    %3364 = vmatpush1.msra.mxu0 0.0
    %3365 = vmatprep.subr.mxu0 0.0
    %3366 = vmatpush1.msra.mxu0 0.0
    %3367 = vmatprep.mubr.f32.mxu0 0.0
    %3368 = vmatmul.mubr.f32.gmra.mrb[0].mxu0 %v3301
    %v3369 = vpop.f32.mrb[0].mxu0
    %v3370 = vadd.f32 %v3297, %v3369
    %v3371 = vpop.f32.mrb[0].mxu0
    %3372 = vdwg.mxu0
    %v3373 = vmax.f32 %v3370, 0.0
    %v3374 = vld [vmem:[%s12] sm:$0xff]
    %v3375 = vld [vmem:[%s12 + $0x8] sm:$0xff]
    %v3376 = vld [vmem:[%s12 + $0x10] sm:$0xff]
    %v3377 = vld [vmem:[%s12 + $0x18] sm:$0xff]
    %v3378 = vld [vmem:[%s13] sm:$0x1]
    %v3380 = vlaneseq
    %v3381 = vshrl.u32 %v3380, 7
    %v3382 = vsub.s32 0, %v3381
    %v3383 = vrot.slane %v3378, %v3382
    %v3386 = vsel %vm207, %v3373, 0
    %3388 = vmatprep.subr.mxu0 0.0
    %3389 = vmatpush1.msra.mxu0 %v3374
    %3390 = vmatprep.subr.mxu0 0.0
    %3391 = vmatpush1.msra.mxu0 %v3375
    %3392 = vmatprep.subr.mxu0 0.0
    %3393 = vmatpush1.msra.mxu0 %v3376
    %3394 = vmatprep.subr.mxu0 0.0
    %3395 = vmatpush1.msra.mxu0 %v3377
    %3396 = vmatprep.subr.mxu0 0.0
    %3397 = vmatpush1.msra.mxu0 0.0
    %3398 = vmatprep.subr.mxu0 0.0
    %3399 = vmatpush1.msra.mxu0 0.0
    %3400 = vmatprep.subr.mxu0 0.0
    %3401 = vmatpush1.msra.mxu0 0.0
    %3402 = vmatprep.subr.mxu0 0.0
    %3403 = vmatpush1.msra.mxu0 0.0
    %3404 = vmatprep.subr.mxu0 0.0
    %3405 = vmatpush1.msra.mxu0 0.0
    %3406 = vmatprep.subr.mxu0 0.0
    %3407 = vmatpush1.msra.mxu0 0.0
    %3408 = vmatprep.subr.mxu0 0.0
    %3409 = vmatpush1.msra.mxu0 0.0
    %3410 = vmatprep.subr.mxu0 0.0
    %3411 = vmatpush1.msra.mxu0 0.0
    %3412 = vmatprep.subr.mxu0 0.0
    %3413 = vmatpush1.msra.mxu0 0.0
    %3414 = vmatprep.subr.mxu0 0.0
    %3415 = vmatpush1.msra.mxu0 0.0
    %3416 = vmatprep.subr.mxu0 0.0
    %3417 = vmatpush1.msra.mxu0 0.0
    %3418 = vmatprep.subr.mxu0 0.0
    %3419 = vmatpush1.msra.mxu0 0.0
    %3420 = vmatprep.subr.mxu0 0.0
    %3421 = vmatpush1.msra.mxu0 0.0
    %3422 = vmatprep.subr.mxu0 0.0
    %3423 = vmatpush1.msra.mxu0 0.0
    %3424 = vmatprep.subr.mxu0 0.0
    %3425 = vmatpush1.msra.mxu0 0.0
    %3426 = vmatprep.subr.mxu0 0.0
    %3427 = vmatpush1.msra.mxu0 0.0
    %3428 = vmatprep.subr.mxu0 0.0
    %3429 = vmatpush1.msra.mxu0 0.0
    %3430 = vmatprep.subr.mxu0 0.0
    %3431 = vmatpush1.msra.mxu0 0.0
    %3432 = vmatprep.subr.mxu0 0.0
    %3433 = vmatpush1.msra.mxu0 0.0
    %3434 = vmatprep.subr.mxu0 0.0
    %3435 = vmatpush1.msra.mxu0 0.0
    %3436 = vmatprep.subr.mxu0 0.0
    %3437 = vmatpush1.msra.mxu0 0.0
    %3438 = vmatprep.subr.mxu0 0.0
    %3439 = vmatpush1.msra.mxu0 0.0
    %3440 = vmatprep.subr.mxu0 0.0
    %3441 = vmatpush1.msra.mxu0 0.0
    %3442 = vmatprep.subr.mxu0 0.0
    %3443 = vmatpush1.msra.mxu0 0.0
    %3444 = vmatprep.subr.mxu0 0.0
    %3445 = vmatpush1.msra.mxu0 0.0
    %3446 = vmatprep.subr.mxu0 0.0
    %3447 = vmatpush1.msra.mxu0 0.0
    %3448 = vmatprep.subr.mxu0 0.0
    %3449 = vmatpush1.msra.mxu0 0.0
    %3450 = vmatprep.subr.mxu0 0.0
    %3451 = vmatpush1.msra.mxu0 0.0
    %3452 = vmatprep.mubr.f32.mxu0 0.0
    %3453 = vmatmul.mubr.f32.gmra.mrb[0].mxu0 %v3386
    %v3454 = vpop.f32.mrb[0].mxu0
    %v3455 = vadd.f32 %v3383, %v3454
    %v3456 = vpop.f32.mrb[0].mxu0
    %3457 = vdwg.mxu0
    %3458 = vst [vmem:[#allocation2] sm:$0x3] %v3455
    // Predicated region
    $region58: #{_run_kernel.1} parent=1 // pred_check
      _
    $region59: #{_run_kernel.1} parent=1 // pred_check_branch
      %3460 = sbr.rel (0) target = $region61
    $region60: #{_run_kernel.1} parent=1 // pred_region
      %s3462 = ssub.s32 32, 32
      %3463 = vsyncadd [#allocation3], %s3462
      %s3465 = sshll.u32 [#allocation2], 4
      %s3466 = int_to_ptr.vmem [resolvable:$true] %s3465
      %3468 = dma.vmem_to_hbm [thread:$0]  %s3466, 32, %s14, [#allocation3]
    $region61: #{_run_kernel.1} parent=1 // pred_fallthru
      _
    // Predicated region
    $region62: #{_run_kernel.1} parent=1 // pred_check
      _
    $region63: #{_run_kernel.1} parent=1 // pred_check_branch
      %3470 = sbr.rel (0) target = $region65
    $region64: #{_run_kernel.1} parent=1 // pred_region
      %3471 = dma.done [#allocation3], 32
    $region65: #{_run_kernel.1} parent=1 // pred_fallthru
      _
    %3472 = vsyncpa [#allocation3], 1

</llo_original>
